<compile_context>
chip_gen: v7x
topology: tpu7x:2x2x1
jax: 0.10.0
libtpu: 0.0.40
codegen_flags: <defaults>
</compile_context>

<pallas_src>
import functools

import numpy as np
import jax
import jax.numpy as jnp
from jax import lax
from jax.experimental import pallas as pl
from jax.experimental.pallas import tpu as pltpu

C1, C2 = 16, 32          # hidden channels of the torch module
FCW = 128                # fc1 output width
FC_IN = 480              # hard-coded nn.Linear(480, 128) input size
XBLK = 128               # lane block holding one conv1 height-tap window of x (W <= 128)
PBLK = 256               # lane block holding one pooled row (W/2*C1, W/4*C2 <= 256)


# ----------------------------- fused Pallas kernel ----------------------------- #

def _cnn_kernel(xcat_ref, convw_ref, fcw_ref, bias_ref, out_ref,
                stp_ref, st2_ref, xc_ref, *, N, H, nc_pad):
    """Rows of every activation are h-major: row = h * N + sample.  Lanes of each conv
    output are (dw, w_half, channel) so the 2x2 pool's column max is max of the two
    256-lane halves and its row max is a max against an N-row-shifted reload."""
    H4 = H // 4
    HN = H * N
    KB1 = 5 * XBLK           # conv1 K (5 height taps x 128 lanes)
    KB2 = 5 * PBLK           # conv2 K (5 height taps x 256 lanes)
    CW = 2 * PBLK            # conv output width (two pooling half-blocks)

    def mm(a, b):
        # bf16 MXU inputs, f32 accumulation (explicit, deterministic).
        return jnp.dot(a.astype(jnp.bfloat16), b.astype(jnp.bfloat16),
                       preferred_element_type=jnp.float32)

    # Zero the staging scratch once: its pad rows implement the convs' "same" zero padding
    # and the pools' (unused) bottom rows.
    stp_ref[...] = jnp.zeros(stp_ref.shape, dtype=stp_ref.dtype)
    st2_ref[...] = jnp.zeros(st2_ref.shape, dtype=st2_ref.dtype)

    # ---- conv1 + bias + ReLU: all 5 height taps folded into one K=640 matmul ---------------
    a1 = mm(xcat_ref[...], convw_ref[0:KB1, :])
    a1 = jnp.maximum(a1 + bias_ref[0:1, 0:CW], 0.0)                    # (HN, 512) f32

    # ---- maxpool1: row pair-max via an N-shifted reload, column pair-max via lane halves ---
    stp_ref[0:HN, :] = a1
    rmax = jnp.maximum(a1, stp_ref[N:N + HN, :])
    p1 = jnp.maximum(rmax[:, 0:PBLK], rmax[:, PBLK:CW])                # (HN, 256) f32
    # (valid at even-h rows; odd-h rows are finite don't-cares that are never consumed)

    # ---- conv2 + bias + ReLU: stage p1 with 4N zero pad rows, fold 5 taps into K=1280 ------
    st2_ref[4 * N:4 * N + HN, :] = p1
    for kh in range(5):
        xc_ref[0:HN, kh * PBLK:(kh + 1) * PBLK] = st2_ref[2 * kh * N:2 * kh * N + HN, :]
    a2 = mm(xc_ref[0:HN, 0:KB2], convw_ref[KB1:KB1 + KB2, :])
    a2 = jnp.maximum(a2 + bias_ref[1:2, 0:CW], 0.0)                    # (HN, 512) f32

    # ---- maxpool2 ---------------------------------------------------------------------------
    stp_ref[0:HN, :] = a2
    rmax2 = jnp.maximum(a2, stp_ref[2 * N:2 * N + HN, :])
    p2 = jnp.maximum(rmax2[:, 0:PBLK], rmax2[:, PBLK:CW])              # (HN, 256) f32
    # (valid at rows with h % 4 == 0)

    # ---- fc1 + ReLU: torch (C,H,W) flatten = H4 contiguous row-slabs laid side by side -----
    stp_ref[0:HN, 0:PBLK] = p2
    for h4 in range(H4):
        xc_ref[0:N, h4 * PBLK:(h4 + 1) * PBLK] = stp_ref[4 * h4 * N:4 * h4 * N + N, 0:PBLK]
    h1 = mm(xc_ref[0:N, 0:H4 * PBLK], fcw_ref[0:H4 * PBLK, 0:FCW])
    h1 = jnp.maximum(h1 + bias_ref[2:3, 0:FCW], 0.0)                   # (N, 128) f32

    # ---- fc2 (output lane-padded to nc_pad; sliced to num_classes in the wrapper) ----------
    out = mm(h1, fcw_ref[H4 * PBLK:H4 * PBLK + FCW, 0:nc_pad]) + bias_ref[3:4, 0:nc_pad]
    out_ref[...] = out.astype(out_ref.dtype)


# --------------------------- host-side weight preparation --------------------------- #

def _prepare_packed_weights(params, H, W, nc):
    """Pack the torch weights (once, host-side) into 3 slabs the kernel consumes:
       convw (bf16): stacked conv1/conv2 tap slabs with the pool column-selection folded in,
       fcw   (bf16): fc1 (torch C,H,W flatten order) and fc2 (pre-transposed, lane-padded),
       bias  (f32) : one lane-layout-matched bias row per stage."""
    H4, W2, W4 = H // 4, W // 2, W // 4
    w1 = np.asarray(params["w1"], np.float32)       # (16, 1, 5, 5)
    b1 = np.asarray(params["b1"], np.float32)
    w2 = np.asarray(params["w2"], np.float32)       # (32, 16, 5, 5)
    b2 = np.asarray(params["b2"], np.float32)
    wf1 = np.asarray(params["w_fc1"], np.float32)   # (128, 480)
    bf1 = np.asarray(params["b_fc1"], np.float32)
    wf2 = np.asarray(params["w_fc2"], np.float32)   # (nc, 128)
    bf2 = np.asarray(params["b_fc2"], np.float32)

    CW = 2 * PBLK

    # conv1: row = (kh, source width u); col = (dw, w//2, c_out).
    s1 = np.zeros((5 * XBLK, CW), np.float32)
    for kh in range(5):
        for w in range(W):
            whalf, dw = divmod(w, 2)
            col = dw * PBLK + whalf * C1
            for kw in range(5):
                u = w + kw - 2
                if 0 <= u < W:
                    s1[kh * XBLK + u, col:col + C1] = w1[:, 0, kh, kw]

    # conv2: row = (kh, u*C1 + c_in); col = (dw, w//2, c_out).
    s2 = np.zeros((5 * PBLK, CW), np.float32)
    for kh in range(5):
        for w in range(W2):
            whalf, dw = divmod(w, 2)
            col = dw * PBLK + whalf * C2
            for kw in range(5):
                u = w + kw - 2
                if 0 <= u < W2:
                    for ci in range(C1):
                        s2[kh * PBLK + u * C1 + ci, col:col + C2] = w2[:, ci, kh, kw]
    convw = np.concatenate([s1, s2], axis=0)         # (1920, 512)

    # fc weights: fc1 rows = (h4, w4*C2 + c) matching torch's (C,H,W) flatten; fc2 appended.
    nc_pad = max(128, -(-nc // 128) * 128)
    fcw = np.zeros((H4 * PBLK + FCW, nc_pad), np.float32)
    for h4 in range(H4):
        for w4 in range(W4):
            for cc in range(C2):
                fcw[h4 * PBLK + w4 * C2 + cc, 0:FCW] = wf1[:, cc * (H4 * W4) + h4 * W4 + w4]
    fcw[H4 * PBLK:H4 * PBLK + FCW, 0:nc] = wf2.T

    # biases (kept f32; one row per stage, lane layout matching that stage's output).
    bias = np.zeros((4, max(CW, nc_pad)), np.float32)
    for whalf in range(W2):
        for dw in range(2):
            bias[0, dw * PBLK + whalf * C1: dw * PBLK + whalf * C1 + C1] = b1
    for whalf in range(W4):
        for dw in range(2):
            bias[1, dw * PBLK + whalf * C2: dw * PBLK + whalf * C2 + C2] = b2
    bias[2, 0:FCW] = bf1
    bias[3, 0:nc] = bf2

    return (jnp.asarray(convw, jnp.bfloat16),
            jnp.asarray(fcw, jnp.bfloat16),
            jnp.asarray(bias, jnp.float32))


# ---------------------------------- forward ---------------------------------- #

def build_cnn_forward(params, num_rows, num_cols, num_classes):
    """Returns a jitted forward(x) matching CNN.forward: x (N,1,H,W) -> (N, num_classes)."""
    H, W, nc = int(num_rows), int(num_cols), int(num_classes)
    assert H % 4 == 0 and W % 4 == 0, "two 2x2 pools need H, W divisible by 4"
    assert C2 * (H // 4) * (W // 4) == FC_IN, "shapes must match the hard-coded Linear(480,128)"
    assert W <= XBLK and (W // 2) * C1 <= PBLK and (W // 4) * C2 <= PBLK
    H4 = H // 4
    convw, fcw, biasw = _prepare_packed_weights(params, H, W, nc)
    nc_pad = fcw.shape[1]
    xc_lanes = max(5 * PBLK, H4 * PBLK)

    @jax.jit
    def forward(x):
        n, c, hh, ww = x.shape
        assert (c, hh, ww) == (1, H, W), "input dims must match the dims used at build time"
        HN = H * n
        # Wrapper-side layout plumbing only (tiny arrays):
        #   h-major rows (row = h*n + sample), 2n zero pad rows top/bottom ("same" padding),
        #   lane pad to 128, and the five conv1 height-tap windows laid side by side (the
        #   K-folded conv1 LHS).
        x2d = jnp.transpose(x[:, 0, :, :], (1, 0, 2)).reshape(HN, W).astype(jnp.float32)
        xpad = jnp.pad(x2d, ((2 * n, 2 * n), (0, XBLK - W)))
        xcat = jnp.concatenate([xpad[kh * n:kh * n + HN, :] for kh in range(5)], axis=1)

        kern = functools.partial(_cnn_kernel, N=n, H=H, nc_pad=nc_pad)
        vmem = pl.BlockSpec(memory_space=pltpu.MemorySpace.VMEM)
        out = pl.pallas_call(
            kern,
            out_shape=jax.ShapeDtypeStruct((n, nc_pad), jnp.float32),
            in_specs=[vmem] * 4,
            out_specs=vmem,
            scratch_shapes=[
                pltpu.VMEM((HN + 2 * n, 2 * PBLK), jnp.float32),   # pool row-shift staging
                pltpu.VMEM((HN + 8 * n, PBLK), jnp.float32),       # conv2 row-shift staging
                pltpu.VMEM((HN, xc_lanes), jnp.float32),           # K-folded matmul LHS staging
            ],
        )(xcat, convw, fcw, biasw)
        return out[:, :nc]

    return forward


# ------------------------------ reference & params ------------------------------ #

def cnn_reference(x, params):
    """Pure-XLA reference of the torch forward (correctness self-check)."""
    hp = lax.Precision.HIGHEST
    y = lax.conv_general_dilated(x, params["w1"], (1, 1), "SAME",
                                 dimension_numbers=("NCHW", "OIHW", "NCHW"), precision=hp)
    y = jnp.maximum(y + params["b1"][None, :, None, None], 0.0)
    y = lax.reduce_window(y, -jnp.inf, lax.max, (1, 1, 2, 2), (1, 1, 2, 2), "VALID")
    y = lax.conv_general_dilated(y, params["w2"], (1, 1), "SAME",
                                 dimension_numbers=("NCHW", "OIHW", "NCHW"), precision=hp)
    y = jnp.maximum(y + params["b2"][None, :, None, None], 0.0)
    y = lax.reduce_window(y, -jnp.inf, lax.max, (1, 1, 2, 2), (1, 1, 2, 2), "VALID")
    y = y.reshape(y.shape[0], -1)                                    # (N, 480), (C,H,W) order
    y = jnp.maximum(jnp.dot(y, params["w_fc1"].T, precision=hp) + params["b_fc1"], 0.0)
    return jnp.dot(y, params["w_fc2"].T, precision=hp) + params["b_fc2"]


def init_params(key, num_classes):
    ks = jax.random.split(key, 8)

    def unif(k, shape, fan_in):
        bound = 1.0 / jnp.sqrt(float(fan_in))
        return jax.random.uniform(k, shape, jnp.float32, -bound, bound)

    return {
        "w1": unif(ks[0], (16, 1, 5, 5), 1 * 5 * 5),
        "b1": unif(ks[1], (16,), 1 * 5 * 5),
        "w2": unif(ks[2], (32, 16, 5, 5), 16 * 5 * 5),
        "b2": unif(ks[3], (32,), 16 * 5 * 5),
        "w_fc1": unif(ks[4], (128, 480), 480),
        "b_fc1": unif(ks[5], (128,), 480),
        "w_fc2": unif(ks[6], (num_classes, 128), 128),
        "b_fc2": unif(ks[7], (num_classes,), 128),
    }


if __name__ == "__main__":
    # Shapes consistent with the hard-coded fc1 = Linear(480, 128):
    # rows=12, cols=20 -> after two 2x2 pools: 32 * 3 * 5 = 480.
    num_classes, num_rows, num_cols, batch = 10, 12, 20, 2

    key = jax.random.PRNGKey(0)
    k_x, k_p = jax.random.split(key)
    x = jax.random.normal(k_x, (batch, 1, num_rows, num_cols), jnp.float32)
    params = init_params(k_p, num_classes)

    forward = build_cnn_forward(params, num_rows, num_cols, num_classes)  # packs weights once

    out = jax.block_until_ready(forward(x))
    assert out.shape == (batch, num_classes), out.shape

    ref = jax.block_until_ready(cnn_reference(x, params))
    max_err = float(jnp.max(jnp.abs(out - ref)))
    if not bool(jnp.allclose(out, ref, rtol=2e-2, atol=2e-2)):   # bf16 matmul inputs
        raise AssertionError(f"kernel mismatch vs reference, max abs err = {max_err}")
    print("KERNEL_OK")
</pallas_src>

<mosaic_0001>
module attributes {stable_mosaic.version = 11 : i64} {
  func.func @_cnn_kernel(%arg0: memref<24x640xf32, #tpu.memory_space<vmem>>, %arg1: memref<1920x512xbf16, #tpu.memory_space<vmem>>, %arg2: memref<896x128xbf16, #tpu.memory_space<vmem>>, %arg3: memref<4x512xf32, #tpu.memory_space<vmem>>, %arg4: memref<2x128xf32, #tpu.memory_space<vmem>>, %arg5: memref<28x512xf32, #tpu.memory_space<vmem>>, %arg6: memref<40x256xf32, #tpu.memory_space<vmem>>, %arg7: memref<24x1280xf32, #tpu.memory_space<vmem>>) attributes {dimension_semantics = [], scalar_prefetch = 0 : i64, scratch_operands = 3 : i64, tpu.core_type = #tpu.core_type<tc>} {
    %cst = arith.constant 0.000000e+00 : f32
    %0 = vector.broadcast %cst : f32 to vector<28x512xf32>
    %c0 = arith.constant 0 : index
    %c0_0 = arith.constant 0 : index
    %1 = vector.load %arg5[%c0, %c0_0] : memref<28x512xf32, #tpu.memory_space<vmem>>, vector<28x512xf32>
    tpu.vector_store %arg5[%c0, %c0_0], %0 {strides = array<i32>} : memref<28x512xf32, #tpu.memory_space<vmem>>, vector<28x512xf32>,
    %cst_1 = arith.constant 0.000000e+00 : f32
    %2 = vector.broadcast %cst_1 : f32 to vector<40x256xf32>
    %c0_2 = arith.constant 0 : index
    %c0_3 = arith.constant 0 : index
    %3 = vector.load %arg6[%c0_2, %c0_3] : memref<40x256xf32, #tpu.memory_space<vmem>>, vector<40x256xf32>
    tpu.vector_store %arg6[%c0_2, %c0_3], %2 {strides = array<i32>} : memref<40x256xf32, #tpu.memory_space<vmem>>, vector<40x256xf32>,
    %c0_4 = arith.constant 0 : index
    %c0_5 = arith.constant 0 : index
    %4 = vector.load %arg0[%c0_4, %c0_5] : memref<24x640xf32, #tpu.memory_space<vmem>>, vector<24x640xf32>
    %c0_6 = arith.constant 0 : index
    %c0_7 = arith.constant 0 : index
    %5 = vector.load %arg1[%c0_6, %c0_7] : memref<1920x512xbf16, #tpu.memory_space<vmem>>, vector<640x512xbf16>
    %6 = arith.truncf %4 : vector<24x640xf32> to vector<24x640xbf16>
    %cst_8 = arith.constant dense<0.000000e+00> : vector<24x512xf32>
    %7 = tpu.matmul %6, %5, %cst_8 {dimension_numbers = #tpu.dot_dimension_numbers<[1], [0], [0], [1], [0, 0, 1, 1], [], []>} : vector<24x640xbf16>, vector<640x512xbf16>, vector<24x512xf32> -> vector<24x512xf32>
    %c0_9 = arith.constant 0 : index
    %c0_10 = arith.constant 0 : index
    %8 = vector.load %arg3[%c0_9, %c0_10] : memref<4x512xf32, #tpu.memory_space<vmem>>, vector<1x512xf32>
    %9 = vector.broadcast %8 : vector<1x512xf32> to vector<24x512xf32>
    %10 = arith.addf %7, %9 : vector<24x512xf32>
    %cst_11 = arith.constant 0.000000e+00 : f32
    %11 = vector.broadcast %cst_11 : f32 to vector<24x512xf32>
    %12 = arith.maximumf %10, %11 : vector<24x512xf32>
    %c0_12 = arith.constant 0 : index
    %c0_13 = arith.constant 0 : index
    %13 = vector.load %arg5[%c0_12, %c0_13] : memref<28x512xf32, #tpu.memory_space<vmem>>, vector<24x512xf32>
    tpu.vector_store %arg5[%c0_12, %c0_13], %12 {strides = array<i32>} : memref<28x512xf32, #tpu.memory_space<vmem>>, vector<24x512xf32>,
    %c2 = arith.constant 2 : index
    %c0_14 = arith.constant 0 : index
    %14 = vector.load %arg5[%c2, %c0_14] : memref<28x512xf32, #tpu.memory_space<vmem>>, vector<24x512xf32>
    %15 = arith.maximumf %12, %14 : vector<24x512xf32>
    %16 = vector.extract_strided_slice %15 {offsets = [0, 0], sizes = [24, 256], strides = [1, 1]} : vector<24x512xf32> to vector<24x256xf32>
    %17 = vector.extract_strided_slice %15 {offsets = [0, 256], sizes = [24, 256], strides = [1, 1]} : vector<24x512xf32> to vector<24x256xf32>
    %18 = arith.maximumf %16, %17 : vector<24x256xf32>
    %c8 = arith.constant 8 : index
    %c0_15 = arith.constant 0 : index
    %19 = vector.load %arg6[%c8, %c0_15] : memref<40x256xf32, #tpu.memory_space<vmem>>, vector<24x256xf32>
    tpu.vector_store %arg6[%c8, %c0_15], %18 {strides = array<i32>} : memref<40x256xf32, #tpu.memory_space<vmem>>, vector<24x256xf32>,
    %c0_16 = arith.constant 0 : index
    %c0_17 = arith.constant 0 : index
    %20 = vector.load %arg6[%c0_16, %c0_17] : memref<40x256xf32, #tpu.memory_space<vmem>>, vector<24x256xf32>
    %c0_18 = arith.constant 0 : index
    %c0_19 = arith.constant 0 : index
    %21 = vector.load %arg7[%c0_18, %c0_19] : memref<24x1280xf32, #tpu.memory_space<vmem>>, vector<24x256xf32>
    tpu.vector_store %arg7[%c0_18, %c0_19], %20 {strides = array<i32>} : memref<24x1280xf32, #tpu.memory_space<vmem>>, vector<24x256xf32>,
    %c4 = arith.constant 4 : index
    %c0_20 = arith.constant 0 : index
    %22 = vector.load %arg6[%c4, %c0_20] : memref<40x256xf32, #tpu.memory_space<vmem>>, vector<24x256xf32>
    %c0_21 = arith.constant 0 : index
    %c256 = arith.constant 256 : index
    %23 = vector.load %arg7[%c0_21, %c256] : memref<24x1280xf32, #tpu.memory_space<vmem>>, vector<24x256xf32>
    tpu.vector_store %arg7[%c0_21, %c256], %22 {strides = array<i32>} : memref<24x1280xf32, #tpu.memory_space<vmem>>, vector<24x256xf32>,
    %c8_22 = arith.constant 8 : index
    %c0_23 = arith.constant 0 : index
    %24 = vector.load %arg6[%c8_22, %c0_23] : memref<40x256xf32, #tpu.memory_space<vmem>>, vector<24x256xf32>
    %c0_24 = arith.constant 0 : index
    %c512 = arith.constant 512 : index
    %25 = vector.load %arg7[%c0_24, %c512] : memref<24x1280xf32, #tpu.memory_space<vmem>>, vector<24x256xf32>
    tpu.vector_store %arg7[%c0_24, %c512], %24 {strides = array<i32>} : memref<24x1280xf32, #tpu.memory_space<vmem>>, vector<24x256xf32>,
    %c12 = arith.constant 12 : index
    %c0_25 = arith.constant 0 : index
    %26 = vector.load %arg6[%c12, %c0_25] : memref<40x256xf32, #tpu.memory_space<vmem>>, vector<24x256xf32>
    %c0_26 = arith.constant 0 : index
    %c768 = arith.constant 768 : index
    %27 = vector.load %arg7[%c0_26, %c768] : memref<24x1280xf32, #tpu.memory_space<vmem>>, vector<24x256xf32>
    tpu.vector_store %arg7[%c0_26, %c768], %26 {strides = array<i32>} : memref<24x1280xf32, #tpu.memory_space<vmem>>, vector<24x256xf32>,
    %c16 = arith.constant 16 : index
    %c0_27 = arith.constant 0 : index
    %28 = vector.load %arg6[%c16, %c0_27] : memref<40x256xf32, #tpu.memory_space<vmem>>, vector<24x256xf32>
    %c0_28 = arith.constant 0 : index
    %c1024 = arith.constant 1024 : index
    %29 = vector.load %arg7[%c0_28, %c1024] : memref<24x1280xf32, #tpu.memory_space<vmem>>, vector<24x256xf32>
    tpu.vector_store %arg7[%c0_28, %c1024], %28 {strides = array<i32>} : memref<24x1280xf32, #tpu.memory_space<vmem>>, vector<24x256xf32>,
    %c0_29 = arith.constant 0 : index
    %c0_30 = arith.constant 0 : index
    %30 = vector.load %arg7[%c0_29, %c0_30] : memref<24x1280xf32, #tpu.memory_space<vmem>>, vector<24x1280xf32>
    %c640 = arith.constant 640 : index
    %c0_31 = arith.constant 0 : index
    %31 = vector.load %arg1[%c640, %c0_31] : memref<1920x512xbf16, #tpu.memory_space<vmem>>, vector<1280x512xbf16>
    %32 = arith.truncf %30 : vector<24x1280xf32> to vector<24x1280xbf16>
    %cst_32 = arith.constant dense<0.000000e+00> : vector<24x512xf32>
    %33 = tpu.matmul %32, %31, %cst_32 {dimension_numbers = #tpu.dot_dimension_numbers<[1], [0], [0], [1], [0, 0, 1, 1], [], []>} : vector<24x1280xbf16>, vector<1280x512xbf16>, vector<24x512xf32> -> vector<24x512xf32>
    %c1 = arith.constant 1 : index
    %c0_33 = arith.constant 0 : index
    %34 = vector.load %arg3[%c1, %c0_33] : memref<4x512xf32, #tpu.memory_space<vmem>>, vector<1x512xf32>
    %35 = vector.broadcast %34 : vector<1x512xf32> to vector<24x512xf32>
    %36 = arith.addf %33, %35 : vector<24x512xf32>
    %cst_34 = arith.constant 0.000000e+00 : f32
    %37 = vector.broadcast %cst_34 : f32 to vector<24x512xf32>
    %38 = arith.maximumf %36, %37 : vector<24x512xf32>
    %c0_35 = arith.constant 0 : index
    %c0_36 = arith.constant 0 : index
    %39 = vector.load %arg5[%c0_35, %c0_36] : memref<28x512xf32, #tpu.memory_space<vmem>>, vector<24x512xf32>
    tpu.vector_store %arg5[%c0_35, %c0_36], %38 {strides = array<i32>} : memref<28x512xf32, #tpu.memory_space<vmem>>, vector<24x512xf32>,
    %c4_37 = arith.constant 4 : index
    %c0_38 = arith.constant 0 : index
    %40 = vector.load %arg5[%c4_37, %c0_38] : memref<28x512xf32, #tpu.memory_space<vmem>>, vector<24x512xf32>
    %41 = arith.maximumf %38, %40 : vector<24x512xf32>
    %42 = vector.extract_strided_slice %41 {offsets = [0, 0], sizes = [24, 256], strides = [1, 1]} : vector<24x512xf32> to vector<24x256xf32>
    %43 = vector.extract_strided_slice %41 {offsets = [0, 256], sizes = [24, 256], strides = [1, 1]} : vector<24x512xf32> to vector<24x256xf32>
    %44 = arith.maximumf %42, %43 : vector<24x256xf32>
    %c0_39 = arith.constant 0 : index
    %c0_40 = arith.constant 0 : index
    %45 = vector.load %arg5[%c0_39, %c0_40] : memref<28x512xf32, #tpu.memory_space<vmem>>, vector<24x256xf32>
    tpu.vector_store %arg5[%c0_39, %c0_40], %44 {strides = array<i32>} : memref<28x512xf32, #tpu.memory_space<vmem>>, vector<24x256xf32>,
    %c0_41 = arith.constant 0 : index
    %c0_42 = arith.constant 0 : index
    %46 = vector.load %arg5[%c0_41, %c0_42] : memref<28x512xf32, #tpu.memory_space<vmem>>, vector<2x256xf32>
    %c0_43 = arith.constant 0 : index
    %c0_44 = arith.constant 0 : index
    %47 = vector.load %arg7[%c0_43, %c0_44] : memref<24x1280xf32, #tpu.memory_space<vmem>>, vector<2x256xf32>
    tpu.vector_store %arg7[%c0_43, %c0_44], %46 {strides = array<i32>} : memref<24x1280xf32, #tpu.memory_space<vmem>>, vector<2x256xf32>,
    %c8_45 = arith.constant 8 : index
    %c0_46 = arith.constant 0 : index
    %48 = vector.load %arg5[%c8_45, %c0_46] : memref<28x512xf32, #tpu.memory_space<vmem>>, vector<2x256xf32>
    %c0_47 = arith.constant 0 : index
    %c256_48 = arith.constant 256 : index
    %49 = vector.load %arg7[%c0_47, %c256_48] : memref<24x1280xf32, #tpu.memory_space<vmem>>, vector<2x256xf32>
    tpu.vector_store %arg7[%c0_47, %c256_48], %48 {strides = array<i32>} : memref<24x1280xf32, #tpu.memory_space<vmem>>, vector<2x256xf32>,
    %c16_49 = arith.constant 16 : index
    %c0_50 = arith.constant 0 : index
    %50 = vector.load %arg5[%c16_49, %c0_50] : memref<28x512xf32, #tpu.memory_space<vmem>>, vector<2x256xf32>
    %c0_51 = arith.constant 0 : index
    %c512_52 = arith.constant 512 : index
    %51 = vector.load %arg7[%c0_51, %c512_52] : memref<24x1280xf32, #tpu.memory_space<vmem>>, vector<2x256xf32>
    tpu.vector_store %arg7[%c0_51, %c512_52], %50 {strides = array<i32>} : memref<24x1280xf32, #tpu.memory_space<vmem>>, vector<2x256xf32>,
    %c0_53 = arith.constant 0 : index
    %c0_54 = arith.constant 0 : index
    %52 = vector.load %arg7[%c0_53, %c0_54] : memref<24x1280xf32, #tpu.memory_space<vmem>>, vector<2x768xf32>
    %c0_55 = arith.constant 0 : index
    %c0_56 = arith.constant 0 : index
    %53 = vector.load %arg2[%c0_55, %c0_56] : memref<896x128xbf16, #tpu.memory_space<vmem>>, vector<768x128xbf16>
    %54 = arith.truncf %52 : vector<2x768xf32> to vector<2x768xbf16>
    %cst_57 = arith.constant dense<0.000000e+00> : vector<2x128xf32>
    %55 = tpu.matmul %54, %53, %cst_57 {dimension_numbers = #tpu.dot_dimension_numbers<[1], [0], [0], [1], [0, 0, 1, 1], [], []>} : vector<2x768xbf16>, vector<768x128xbf16>, vector<2x128xf32> -> vector<2x128xf32>
    %c2_58 = arith.constant 2 : index
    %c0_59 = arith.constant 0 : index
    %56 = vector.load %arg3[%c2_58, %c0_59] : memref<4x512xf32, #tpu.memory_space<vmem>>, vector<1x128xf32>
    %57 = vector.broadcast %56 : vector<1x128xf32> to vector<2x128xf32>
    %58 = arith.addf %55, %57 : vector<2x128xf32>
    %cst_60 = arith.constant 0.000000e+00 : f32
    %59 = vector.broadcast %cst_60 : f32 to vector<2x128xf32>
    %60 = arith.maximumf %58, %59 : vector<2x128xf32>
    %c768_61 = arith.constant 768 : index
    %c0_62 = arith.constant 0 : index
    %61 = vector.load %arg2[%c768_61, %c0_62] : memref<896x128xbf16, #tpu.memory_space<vmem>>, vector<128x128xbf16>
    %62 = arith.truncf %60 : vector<2x128xf32> to vector<2x128xbf16>
    %cst_63 = arith.constant dense<0.000000e+00> : vector<2x128xf32>
    %63 = tpu.matmul %62, %61, %cst_63 {dimension_numbers = #tpu.dot_dimension_numbers<[1], [0], [0], [1], [0, 0, 1, 1], [], []>} : vector<2x128xbf16>, vector<128x128xbf16>, vector<2x128xf32> -> vector<2x128xf32>
    %c3 = arith.constant 3 : index
    %c0_64 = arith.constant 0 : index
    %64 = vector.load %arg3[%c3, %c0_64] : memref<4x512xf32, #tpu.memory_space<vmem>>, vector<1x128xf32>
    %65 = vector.broadcast %64 : vector<1x128xf32> to vector<2x128xf32>
    %66 = arith.addf %63, %65 : vector<2x128xf32>
    %c0_65 = arith.constant 0 : index
    %c0_66 = arith.constant 0 : index
    %67 = vector.load %arg4[%c0_65, %c0_66] : memref<2x128xf32, #tpu.memory_space<vmem>>, vector<2x128xf32>
    tpu.vector_store %arg4[%c0_65, %c0_66], %66 {strides = array<i32>} : memref<2x128xf32, #tpu.memory_space<vmem>>, vector<2x128xf32>,
    return
  }
}

</mosaic_0001>

<llo_original>
// kernel: forward.1
$region0: #{forward.1}
  #allocation0 [shape = 'u32[]', space=smem, size = 0x4, offset = 0x4, fixed_abs, tag = 'smem constant byte address 0x4 - core index']
  #allocation1 [shape = 'u32[144,128]{1,0:T(1,128)}', space=vmem, size = 0x12000, scoped, tag = 'internal scratch']
  #allocation2 [shape = 'f32[28,512]{1,0:T(8,128)}', space=vmem, size = 0x10000, scoped, tag = 'scratch operand']
  #allocation3 [shape = 'f32[40,256]{1,0:T(8,128)}', space=vmem, size = 0xa000, scoped, tag = 'scratch operand']
  #allocation4 [shape = 'f32[24,1280]{1,0:T(8,128)}', space=vmem, size = 0x1e000, scoped, tag = 'scratch operand']
  %s0 = inlined_call_operand.vmem [shape: f32[24,640], index: 0, kind: input, shape index: {}]
  %s1 = inlined_call_operand.vmem [shape: bf16[1920,512], index: 1, kind: input, shape index: {}]
  %s2 = inlined_call_operand.vmem [shape: bf16[896,128], index: 2, kind: input, shape index: {}]
  %s3 = inlined_call_operand.vmem [shape: f32[4,512], index: 3, kind: input, shape index: {}]
  %s4 = inlined_call_operand.hbm [shape: f32[2,128], index: 4, kind: output, shape index: {}]
  %s5 = sld [smem:[#allocation0]]
  $region26: #{forward.1} parent=0
    _
  %s7 = ssub.s32 1, %s5
  %s8 = scalar_select 0, %s7, %s5
  $region1: #{forward.1} parent=0
    #allocation5 [shape = 'u8[1024]{0}', space=vmem, size = 0x400, scoped, tag = 'output window, operand 0, single buffered']
    #allocation6 [shape = 's32[1]{0}', space=sflag, size = 0x4, scoped, tag = 'scoped memory for forward.1']
    %9 = vsyncpa [#allocation6], 0
    // Predicated region
    $region2: #{forward.1} parent=1 // pred_check
      _
    $region3: #{forward.1} parent=1 // pred_check_branch
      %11 = sbr.rel (0) target = $region5
    $region4: #{forward.1} parent=1 // pred_region
      _
    $region5: #{forward.1} parent=1 // pred_fallthru
      _
    // Predicated region
    $region6: #{forward.1} parent=1 // pred_check
      _
    $region7: #{forward.1} parent=1 // pred_check_branch
      %13 = sbr.rel (0) target = $region9
    $region8: #{forward.1} parent=1 // pred_region
      _
    $region9: #{forward.1} parent=1 // pred_fallthru
      _
    // Predicated region
    $region10: #{forward.1} parent=1 // pred_check
      _
    $region11: #{forward.1} parent=1 // pred_check_branch
      %15 = sbr.rel (0) target = $region13
    $region12: #{forward.1} parent=1 // pred_region
      _
    $region13: #{forward.1} parent=1 // pred_fallthru
      _
    // Predicated region
    $region14: #{forward.1} parent=1 // pred_check
      _
    $region15: #{forward.1} parent=1 // pred_check_branch
      %17 = sbr.rel (0) target = $region17
    $region16: #{forward.1} parent=1 // pred_region
      _
    $region17: #{forward.1} parent=1 // pred_fallthru
      _
    %19 = vst [vmem:[#allocation2] sm:$0xff] 0.0
    %20 = vst [vmem:[#allocation2 + $0x8] sm:$0xff] 0.0
    %21 = vst [vmem:[#allocation2 + $0x10] sm:$0xff] 0.0
    %22 = vst [vmem:[#allocation2 + $0x18] sm:$0xff] 0.0
    %23 = vst [vmem:[#allocation2 + $0x20] sm:$0xff] 0.0
    %24 = vst [vmem:[#allocation2 + $0x28] sm:$0xff] 0.0
    %25 = vst [vmem:[#allocation2 + $0x30] sm:$0xff] 0.0
    %26 = vst [vmem:[#allocation2 + $0x38] sm:$0xff] 0.0
    %27 = vst [vmem:[#allocation2 + $0x40] sm:$0xff] 0.0
    %28 = vst [vmem:[#allocation2 + $0x48] sm:$0xff] 0.0
    %29 = vst [vmem:[#allocation2 + $0x50] sm:$0xff] 0.0
    %30 = vst [vmem:[#allocation2 + $0x58] sm:$0xff] 0.0
    %31 = vst [vmem:[#allocation2 + $0x60] sm:$0xf] 0.0
    %32 = vst [vmem:[#allocation2 + $0x68] sm:$0xf] 0.0
    %33 = vst [vmem:[#allocation2 + $0x70] sm:$0xf] 0.0
    %34 = vst [vmem:[#allocation2 + $0x78] sm:$0xf] 0.0
    %35 = vst [vmem:[#allocation3] sm:$0xff] 0.0
    %36 = vst [vmem:[#allocation3 + $0x8] sm:$0xff] 0.0
    %37 = vst [vmem:[#allocation3 + $0x10] sm:$0xff] 0.0
    %38 = vst [vmem:[#allocation3 + $0x18] sm:$0xff] 0.0
    %39 = vst [vmem:[#allocation3 + $0x20] sm:$0xff] 0.0
    %40 = vst [vmem:[#allocation3 + $0x28] sm:$0xff] 0.0
    %41 = vst [vmem:[#allocation3 + $0x30] sm:$0xff] 0.0
    %42 = vst [vmem:[#allocation3 + $0x38] sm:$0xff] 0.0
    %43 = vst [vmem:[#allocation3 + $0x40] sm:$0xff] 0.0
    %44 = vst [vmem:[#allocation3 + $0x48] sm:$0xff] 0.0
    %v45 = vld [vmem:[%s0] sm:$0xff]
    %v46 = vld [vmem:[%s0 + $0x8] sm:$0xff]
    %v47 = vld [vmem:[%s0 + $0x10] sm:$0xff]
    %v48 = vld [vmem:[%s0 + $0x18] sm:$0xff]
    %v49 = vld [vmem:[%s0 + $0x20] sm:$0xff]
    %v50 = vld [vmem:[%s0 + $0x28] sm:$0xff]
    %v51 = vld [vmem:[%s0 + $0x30] sm:$0xff]
    %v52 = vld [vmem:[%s0 + $0x38] sm:$0xff]
    %v53 = vld [vmem:[%s0 + $0x40] sm:$0xff]
    %v54 = vld [vmem:[%s0 + $0x48] sm:$0xff]
    %v55 = vld [vmem:[%s0 + $0x50] sm:$0xff]
    %v56 = vld [vmem:[%s0 + $0x58] sm:$0xff]
    %v57 = vld [vmem:[%s0 + $0x60] sm:$0xff]
    %v58 = vld [vmem:[%s0 + $0x68] sm:$0xff]
    %v59 = vld [vmem:[%s0 + $0x70] sm:$0xff]
    %v60 = vld [vmem:[%s1] sm:$0xff]
    %v61 = vld [vmem:[%s1 + $0x8] sm:$0xff]
    %v62 = vld [vmem:[%s1 + $0x10] sm:$0xff]
    %v63 = vld [vmem:[%s1 + $0x18] sm:$0xff]
    %v64 = vld [vmem:[%s1 + $0x20] sm:$0xff]
    %v65 = vld [vmem:[%s1 + $0x28] sm:$0xff]
    %v66 = vld [vmem:[%s1 + $0x30] sm:$0xff]
    %v67 = vld [vmem:[%s1 + $0x38] sm:$0xff]
    %v68 = vld [vmem:[%s1 + $0x40] sm:$0xff]
    %v69 = vld [vmem:[%s1 + $0x48] sm:$0xff]
    %v70 = vld [vmem:[%s1 + $0x50] sm:$0xff]
    %v71 = vld [vmem:[%s1 + $0x58] sm:$0xff]
    %v72 = vld [vmem:[%s1 + $0x60] sm:$0xff]
    %v73 = vld [vmem:[%s1 + $0x68] sm:$0xff]
    %v74 = vld [vmem:[%s1 + $0x70] sm:$0xff]
    %v75 = vld [vmem:[%s1 + $0x78] sm:$0xff]
    %v76 = vld [vmem:[%s1 + $0x80] sm:$0xff]
    %v77 = vld [vmem:[%s1 + $0x88] sm:$0xff]
    %v78 = vld [vmem:[%s1 + $0x90] sm:$0xff]
    %v79 = vld [vmem:[%s1 + $0x98] sm:$0xff]
    %v80 = vld [vmem:[%s1 + $0xa0] sm:$0xff]
    %v81 = vld [vmem:[%s1 + $0xa8] sm:$0xff]
    %v82 = vld [vmem:[%s1 + $0xb0] sm:$0xff]
    %v83 = vld [vmem:[%s1 + $0xb8] sm:$0xff]
    %v84 = vld [vmem:[%s1 + $0xc0] sm:$0xff]
    %v85 = vld [vmem:[%s1 + $0xc8] sm:$0xff]
    %v86 = vld [vmem:[%s1 + $0xd0] sm:$0xff]
    %v87 = vld [vmem:[%s1 + $0xd8] sm:$0xff]
    %v88 = vld [vmem:[%s1 + $0xe0] sm:$0xff]
    %v89 = vld [vmem:[%s1 + $0xe8] sm:$0xff]
    %v90 = vld [vmem:[%s1 + $0xf0] sm:$0xff]
    %v91 = vld [vmem:[%s1 + $0xf8] sm:$0xff]
    %v92 = vld [vmem:[%s1 + $0x100] sm:$0xff]
    %v93 = vld [vmem:[%s1 + $0x108] sm:$0xff]
    %v94 = vld [vmem:[%s1 + $0x110] sm:$0xff]
    %v95 = vld [vmem:[%s1 + $0x118] sm:$0xff]
    %v96 = vld [vmem:[%s1 + $0x120] sm:$0xff]
    %v97 = vld [vmem:[%s1 + $0x128] sm:$0xff]
    %v98 = vld [vmem:[%s1 + $0x130] sm:$0xff]
    %v99 = vld [vmem:[%s1 + $0x138] sm:$0xff]
    %v100 = vld [vmem:[%s1 + $0x140] sm:$0xff]
    %v101 = vld [vmem:[%s1 + $0x148] sm:$0xff]
    %v102 = vld [vmem:[%s1 + $0x150] sm:$0xff]
    %v103 = vld [vmem:[%s1 + $0x158] sm:$0xff]
    %v104 = vld [vmem:[%s1 + $0x160] sm:$0xff]
    %v105 = vld [vmem:[%s1 + $0x168] sm:$0xff]
    %v106 = vld [vmem:[%s1 + $0x170] sm:$0xff]
    %v107 = vld [vmem:[%s1 + $0x178] sm:$0xff]
    %v108 = vld [vmem:[%s1 + $0x180] sm:$0xff]
    %v109 = vld [vmem:[%s1 + $0x188] sm:$0xff]
    %v110 = vld [vmem:[%s1 + $0x190] sm:$0xff]
    %v111 = vld [vmem:[%s1 + $0x198] sm:$0xff]
    %v112 = vld [vmem:[%s1 + $0x1a0] sm:$0xff]
    %v113 = vld [vmem:[%s1 + $0x1a8] sm:$0xff]
    %v114 = vld [vmem:[%s1 + $0x1b0] sm:$0xff]
    %v115 = vld [vmem:[%s1 + $0x1b8] sm:$0xff]
    %v116 = vld [vmem:[%s1 + $0x1c0] sm:$0xff]
    %v117 = vld [vmem:[%s1 + $0x1c8] sm:$0xff]
    %v118 = vld [vmem:[%s1 + $0x1d0] sm:$0xff]
    %v119 = vld [vmem:[%s1 + $0x1d8] sm:$0xff]
    %v120 = vld [vmem:[%s1 + $0x1e0] sm:$0xff]
    %v121 = vld [vmem:[%s1 + $0x1e8] sm:$0xff]
    %v122 = vld [vmem:[%s1 + $0x1f0] sm:$0xff]
    %v123 = vld [vmem:[%s1 + $0x1f8] sm:$0xff]
    %v124 = vld [vmem:[%s1 + $0x200] sm:$0xff]
    %v125 = vld [vmem:[%s1 + $0x208] sm:$0xff]
    %v126 = vld [vmem:[%s1 + $0x210] sm:$0xff]
    %v127 = vld [vmem:[%s1 + $0x218] sm:$0xff]
    %v128 = vld [vmem:[%s1 + $0x220] sm:$0xff]
    %v129 = vld [vmem:[%s1 + $0x228] sm:$0xff]
    %v130 = vld [vmem:[%s1 + $0x230] sm:$0xff]
    %v131 = vld [vmem:[%s1 + $0x238] sm:$0xff]
    %v132 = vld [vmem:[%s1 + $0x240] sm:$0xff]
    %v133 = vld [vmem:[%s1 + $0x248] sm:$0xff]
    %v134 = vld [vmem:[%s1 + $0x250] sm:$0xff]
    %v135 = vld [vmem:[%s1 + $0x258] sm:$0xff]
    %v136 = vld [vmem:[%s1 + $0x260] sm:$0xff]
    %v137 = vld [vmem:[%s1 + $0x268] sm:$0xff]
    %v138 = vld [vmem:[%s1 + $0x270] sm:$0xff]
    %v139 = vld [vmem:[%s1 + $0x278] sm:$0xff]
    %v140 = vld [vmem:[%s1 + $0x280] sm:$0xff]
    %v141 = vld [vmem:[%s1 + $0x288] sm:$0xff]
    %v142 = vld [vmem:[%s1 + $0x290] sm:$0xff]
    %v143 = vld [vmem:[%s1 + $0x298] sm:$0xff]
    %v144 = vld [vmem:[%s1 + $0x2a0] sm:$0xff]
    %v145 = vld [vmem:[%s1 + $0x2a8] sm:$0xff]
    %v146 = vld [vmem:[%s1 + $0x2b0] sm:$0xff]
    %v147 = vld [vmem:[%s1 + $0x2b8] sm:$0xff]
    %v148 = vld [vmem:[%s1 + $0x2c0] sm:$0xff]
    %v149 = vld [vmem:[%s1 + $0x2c8] sm:$0xff]
    %v150 = vld [vmem:[%s1 + $0x2d0] sm:$0xff]
    %v151 = vld [vmem:[%s1 + $0x2d8] sm:$0xff]
    %v152 = vld [vmem:[%s1 + $0x2e0] sm:$0xff]
    %v153 = vld [vmem:[%s1 + $0x2e8] sm:$0xff]
    %v154 = vld [vmem:[%s1 + $0x2f0] sm:$0xff]
    %v155 = vld [vmem:[%s1 + $0x2f8] sm:$0xff]
    %v156 = vld [vmem:[%s1 + $0x300] sm:$0xff]
    %v157 = vld [vmem:[%s1 + $0x308] sm:$0xff]
    %v158 = vld [vmem:[%s1 + $0x310] sm:$0xff]
    %v159 = vld [vmem:[%s1 + $0x318] sm:$0xff]
    %v160 = vld [vmem:[%s1 + $0x320] sm:$0xff]
    %v161 = vld [vmem:[%s1 + $0x328] sm:$0xff]
    %v162 = vld [vmem:[%s1 + $0x330] sm:$0xff]
    %v163 = vld [vmem:[%s1 + $0x338] sm:$0xff]
    %v164 = vld [vmem:[%s1 + $0x340] sm:$0xff]
    %v165 = vld [vmem:[%s1 + $0x348] sm:$0xff]
    %v166 = vld [vmem:[%s1 + $0x350] sm:$0xff]
    %v167 = vld [vmem:[%s1 + $0x358] sm:$0xff]
    %v168 = vld [vmem:[%s1 + $0x360] sm:$0xff]
    %v169 = vld [vmem:[%s1 + $0x368] sm:$0xff]
    %v170 = vld [vmem:[%s1 + $0x370] sm:$0xff]
    %v171 = vld [vmem:[%s1 + $0x378] sm:$0xff]
    %v172 = vld [vmem:[%s1 + $0x380] sm:$0xff]
    %v173 = vld [vmem:[%s1 + $0x388] sm:$0xff]
    %v174 = vld [vmem:[%s1 + $0x390] sm:$0xff]
    %v175 = vld [vmem:[%s1 + $0x398] sm:$0xff]
    %v176 = vld [vmem:[%s1 + $0x3a0] sm:$0xff]
    %v177 = vld [vmem:[%s1 + $0x3a8] sm:$0xff]
    %v178 = vld [vmem:[%s1 + $0x3b0] sm:$0xff]
    %v179 = vld [vmem:[%s1 + $0x3b8] sm:$0xff]
    %v180 = vld [vmem:[%s1 + $0x3c0] sm:$0xff]
    %v181 = vld [vmem:[%s1 + $0x3c8] sm:$0xff]
    %v182 = vld [vmem:[%s1 + $0x3d0] sm:$0xff]
    %v183 = vld [vmem:[%s1 + $0x3d8] sm:$0xff]
    %v184 = vld [vmem:[%s1 + $0x3e0] sm:$0xff]
    %v185 = vld [vmem:[%s1 + $0x3e8] sm:$0xff]
    %v186 = vld [vmem:[%s1 + $0x3f0] sm:$0xff]
    %v187 = vld [vmem:[%s1 + $0x3f8] sm:$0xff]
    %v188 = vld [vmem:[%s1 + $0x400] sm:$0xff]
    %v189 = vld [vmem:[%s1 + $0x408] sm:$0xff]
    %v190 = vld [vmem:[%s1 + $0x410] sm:$0xff]
    %v191 = vld [vmem:[%s1 + $0x418] sm:$0xff]
    %v192 = vld [vmem:[%s1 + $0x420] sm:$0xff]
    %v193 = vld [vmem:[%s1 + $0x428] sm:$0xff]
    %v194 = vld [vmem:[%s1 + $0x430] sm:$0xff]
    %v195 = vld [vmem:[%s1 + $0x438] sm:$0xff]
    %v196 = vld [vmem:[%s1 + $0x440] sm:$0xff]
    %v197 = vld [vmem:[%s1 + $0x448] sm:$0xff]
    %v198 = vld [vmem:[%s1 + $0x450] sm:$0xff]
    %v199 = vld [vmem:[%s1 + $0x458] sm:$0xff]
    %v200 = vld [vmem:[%s1 + $0x460] sm:$0xff]
    %v201 = vld [vmem:[%s1 + $0x468] sm:$0xff]
    %v202 = vld [vmem:[%s1 + $0x470] sm:$0xff]
    %v203 = vld [vmem:[%s1 + $0x478] sm:$0xff]
    %v204 = vld [vmem:[%s1 + $0x480] sm:$0xff]
    %v205 = vld [vmem:[%s1 + $0x488] sm:$0xff]
    %v206 = vld [vmem:[%s1 + $0x490] sm:$0xff]
    %v207 = vld [vmem:[%s1 + $0x498] sm:$0xff]
    %v208 = vld [vmem:[%s1 + $0x4a0] sm:$0xff]
    %v209 = vld [vmem:[%s1 + $0x4a8] sm:$0xff]
    %v210 = vld [vmem:[%s1 + $0x4b0] sm:$0xff]
    %v211 = vld [vmem:[%s1 + $0x4b8] sm:$0xff]
    %v212 = vld [vmem:[%s1 + $0x4c0] sm:$0xff]
    %v213 = vld [vmem:[%s1 + $0x4c8] sm:$0xff]
    %v214 = vld [vmem:[%s1 + $0x4d0] sm:$0xff]
    %v215 = vld [vmem:[%s1 + $0x4d8] sm:$0xff]
    %v216 = vld [vmem:[%s1 + $0x4e0] sm:$0xff]
    %v217 = vld [vmem:[%s1 + $0x4e8] sm:$0xff]
    %v218 = vld [vmem:[%s1 + $0x4f0] sm:$0xff]
    %v219 = vld [vmem:[%s1 + $0x4f8] sm:$0xff]
    %v220 = vpack.c.bf16 %v50, %v45
    %v221 = vpack.c.bf16 %v51, %v46
    %v222 = vpack.c.bf16 %v52, %v47
    %v223 = vpack.c.bf16 %v53, %v48
    %v224 = vpack.c.bf16 %v54, %v49
    %v225 = vpack.c.bf16 %v55, %v55
    %v226 = vpack.c.bf16 %v56, %v56
    %v227 = vpack.c.bf16 %v57, %v57
    %v228 = vpack.c.bf16 %v58, %v58
    %v229 = vpack.c.bf16 %v59, %v59
    %v230 = vld [vmem:[%s3] ss:$4 sm:$0xf]
    %v232 = vlaneseq
    %v233 = vshrl.u32 %v232, 7
    %v234 = vsub.s32 0, %v233
    %v235 = vrot.slane %v230, %v234
    %v236 = vlaneseq
    %v237 = vshrl.u32 %v236, 7
    %v238 = vsub.s32 1, %v237
    %v239 = vrot.slane %v230, %v238
    %v240 = vlaneseq
    %v241 = vshrl.u32 %v240, 7
    %v242 = vsub.s32 2, %v241
    %v243 = vrot.slane %v230, %v242
    %v244 = vlaneseq
    %v245 = vshrl.u32 %v244, 7
    %v246 = vsub.s32 3, %v245
    %v247 = vrot.slane %v230, %v246
    %v412 = vunpack.c.l.b16 %v60
    %v413 = vunpack.c.h.b16 %v60
    %v414 = vunpack.c.l.b16 %v61
    %v415 = vunpack.c.h.b16 %v61
    %v416 = vunpack.c.l.b16 %v62
    %v417 = vunpack.c.h.b16 %v62
    %v418 = vunpack.c.l.b16 %v63
    %v419 = vunpack.c.h.b16 %v63
    %v420 = vunpack.c.l.b16 %v64
    %v421 = vunpack.c.h.b16 %v64
    %v422 = vunpack.c.l.b16 %v65
    %v423 = vunpack.c.h.b16 %v65
    %v424 = vunpack.c.l.b16 %v66
    %v425 = vunpack.c.h.b16 %v66
    %v426 = vunpack.c.l.b16 %v67
    %v427 = vunpack.c.h.b16 %v67
    %v428 = vunpack.c.l.b16 %v68
    %v429 = vunpack.c.h.b16 %v68
    %v430 = vunpack.c.l.b16 %v69
    %v431 = vunpack.c.h.b16 %v69
    %v432 = vunpack.c.l.b16 %v70
    %v433 = vunpack.c.h.b16 %v70
    %v434 = vunpack.c.l.b16 %v71
    %v435 = vunpack.c.h.b16 %v71
    %v436 = vunpack.c.l.b16 %v72
    %v437 = vunpack.c.h.b16 %v72
    %v438 = vunpack.c.l.b16 %v73
    %v439 = vunpack.c.h.b16 %v73
    %v440 = vunpack.c.l.b16 %v74
    %v441 = vunpack.c.h.b16 %v74
    %v442 = vunpack.c.l.b16 %v75
    %v443 = vunpack.c.h.b16 %v75
    %v444 = vunpack.c.l.b16 %v76
    %v445 = vunpack.c.h.b16 %v76
    %v446 = vunpack.c.l.b16 %v77
    %v447 = vunpack.c.h.b16 %v77
    %v448 = vunpack.c.l.b16 %v78
    %v449 = vunpack.c.h.b16 %v78
    %v450 = vunpack.c.l.b16 %v79
    %v451 = vunpack.c.h.b16 %v79
    %v452 = vunpack.c.l.b16 %v80
    %v453 = vunpack.c.h.b16 %v80
    %v454 = vunpack.c.l.b16 %v81
    %v455 = vunpack.c.h.b16 %v81
    %v456 = vunpack.c.l.b16 %v82
    %v457 = vunpack.c.h.b16 %v82
    %v458 = vunpack.c.l.b16 %v83
    %v459 = vunpack.c.h.b16 %v83
    %v460 = vunpack.c.l.b16 %v84
    %v461 = vunpack.c.h.b16 %v84
    %v462 = vunpack.c.l.b16 %v85
    %v463 = vunpack.c.h.b16 %v85
    %v464 = vunpack.c.l.b16 %v86
    %v465 = vunpack.c.h.b16 %v86
    %v466 = vunpack.c.l.b16 %v87
    %v467 = vunpack.c.h.b16 %v87
    %v468 = vunpack.c.l.b16 %v88
    %v469 = vunpack.c.h.b16 %v88
    %v470 = vunpack.c.l.b16 %v89
    %v471 = vunpack.c.h.b16 %v89
    %v472 = vunpack.c.l.b16 %v90
    %v473 = vunpack.c.h.b16 %v90
    %v474 = vunpack.c.l.b16 %v91
    %v475 = vunpack.c.h.b16 %v91
    %v476 = vunpack.c.l.b16 %v92
    %v477 = vunpack.c.h.b16 %v92
    %v478 = vunpack.c.l.b16 %v93
    %v479 = vunpack.c.h.b16 %v93
    %v480 = vunpack.c.l.b16 %v94
    %v481 = vunpack.c.h.b16 %v94
    %v482 = vunpack.c.l.b16 %v95
    %v483 = vunpack.c.h.b16 %v95
    %v484 = vunpack.c.l.b16 %v96
    %v485 = vunpack.c.h.b16 %v96
    %v486 = vunpack.c.l.b16 %v97
    %v487 = vunpack.c.h.b16 %v97
    %v488 = vunpack.c.l.b16 %v98
    %v489 = vunpack.c.h.b16 %v98
    %v490 = vunpack.c.l.b16 %v99
    %v491 = vunpack.c.h.b16 %v99
    %v492 = vunpack.c.l.b16 %v100
    %v493 = vunpack.c.h.b16 %v100
    %v494 = vunpack.c.l.b16 %v101
    %v495 = vunpack.c.h.b16 %v101
    %v496 = vunpack.c.l.b16 %v102
    %v497 = vunpack.c.h.b16 %v102
    %v498 = vunpack.c.l.b16 %v103
    %v499 = vunpack.c.h.b16 %v103
    %v500 = vunpack.c.l.b16 %v104
    %v501 = vunpack.c.h.b16 %v104
    %v502 = vunpack.c.l.b16 %v105
    %v503 = vunpack.c.h.b16 %v105
    %v504 = vunpack.c.l.b16 %v106
    %v505 = vunpack.c.h.b16 %v106
    %v506 = vunpack.c.l.b16 %v107
    %v507 = vunpack.c.h.b16 %v107
    %v508 = vunpack.c.l.b16 %v108
    %v509 = vunpack.c.h.b16 %v108
    %v510 = vunpack.c.l.b16 %v109
    %v511 = vunpack.c.h.b16 %v109
    %v512 = vunpack.c.l.b16 %v110
    %v513 = vunpack.c.h.b16 %v110
    %v514 = vunpack.c.l.b16 %v111
    %v515 = vunpack.c.h.b16 %v111
    %v516 = vunpack.c.l.b16 %v112
    %v517 = vunpack.c.h.b16 %v112
    %v518 = vunpack.c.l.b16 %v113
    %v519 = vunpack.c.h.b16 %v113
    %v520 = vunpack.c.l.b16 %v114
    %v521 = vunpack.c.h.b16 %v114
    %v522 = vunpack.c.l.b16 %v115
    %v523 = vunpack.c.h.b16 %v115
    %v524 = vunpack.c.l.b16 %v116
    %v525 = vunpack.c.h.b16 %v116
    %v526 = vunpack.c.l.b16 %v117
    %v527 = vunpack.c.h.b16 %v117
    %v528 = vunpack.c.l.b16 %v118
    %v529 = vunpack.c.h.b16 %v118
    %v530 = vunpack.c.l.b16 %v119
    %v531 = vunpack.c.h.b16 %v119
    %v532 = vunpack.c.l.b16 %v120
    %v533 = vunpack.c.h.b16 %v120
    %v534 = vunpack.c.l.b16 %v121
    %v535 = vunpack.c.h.b16 %v121
    %v536 = vunpack.c.l.b16 %v122
    %v537 = vunpack.c.h.b16 %v122
    %v538 = vunpack.c.l.b16 %v123
    %v539 = vunpack.c.h.b16 %v123
    %v540 = vunpack.c.l.b16 %v124
    %v541 = vunpack.c.h.b16 %v124
    %v542 = vunpack.c.l.b16 %v125
    %v543 = vunpack.c.h.b16 %v125
    %v544 = vunpack.c.l.b16 %v126
    %v545 = vunpack.c.h.b16 %v126
    %v546 = vunpack.c.l.b16 %v127
    %v547 = vunpack.c.h.b16 %v127
    %v548 = vunpack.c.l.b16 %v128
    %v549 = vunpack.c.h.b16 %v128
    %v550 = vunpack.c.l.b16 %v129
    %v551 = vunpack.c.h.b16 %v129
    %v552 = vunpack.c.l.b16 %v130
    %v553 = vunpack.c.h.b16 %v130
    %v554 = vunpack.c.l.b16 %v131
    %v555 = vunpack.c.h.b16 %v131
    %v556 = vunpack.c.l.b16 %v132
    %v557 = vunpack.c.h.b16 %v132
    %v558 = vunpack.c.l.b16 %v133
    %v559 = vunpack.c.h.b16 %v133
    %v560 = vunpack.c.l.b16 %v134
    %v561 = vunpack.c.h.b16 %v134
    %v562 = vunpack.c.l.b16 %v135
    %v563 = vunpack.c.h.b16 %v135
    %v564 = vunpack.c.l.b16 %v136
    %v565 = vunpack.c.h.b16 %v136
    %v566 = vunpack.c.l.b16 %v137
    %v567 = vunpack.c.h.b16 %v137
    %v568 = vunpack.c.l.b16 %v138
    %v569 = vunpack.c.h.b16 %v138
    %v570 = vunpack.c.l.b16 %v139
    %v571 = vunpack.c.h.b16 %v139
    %v572 = vunpack.c.l.b16 %v140
    %v573 = vunpack.c.h.b16 %v140
    %v574 = vunpack.c.l.b16 %v141
    %v575 = vunpack.c.h.b16 %v141
    %v576 = vunpack.c.l.b16 %v142
    %v577 = vunpack.c.h.b16 %v142
    %v578 = vunpack.c.l.b16 %v143
    %v579 = vunpack.c.h.b16 %v143
    %v580 = vunpack.c.l.b16 %v144
    %v581 = vunpack.c.h.b16 %v144
    %v582 = vunpack.c.l.b16 %v145
    %v583 = vunpack.c.h.b16 %v145
    %v584 = vunpack.c.l.b16 %v146
    %v585 = vunpack.c.h.b16 %v146
    %v586 = vunpack.c.l.b16 %v147
    %v587 = vunpack.c.h.b16 %v147
    %v588 = vunpack.c.l.b16 %v148
    %v589 = vunpack.c.h.b16 %v148
    %v590 = vunpack.c.l.b16 %v149
    %v591 = vunpack.c.h.b16 %v149
    %v592 = vunpack.c.l.b16 %v150
    %v593 = vunpack.c.h.b16 %v150
    %v594 = vunpack.c.l.b16 %v151
    %v595 = vunpack.c.h.b16 %v151
    %v596 = vunpack.c.l.b16 %v152
    %v597 = vunpack.c.h.b16 %v152
    %v598 = vunpack.c.l.b16 %v153
    %v599 = vunpack.c.h.b16 %v153
    %v600 = vunpack.c.l.b16 %v154
    %v601 = vunpack.c.h.b16 %v154
    %v602 = vunpack.c.l.b16 %v155
    %v603 = vunpack.c.h.b16 %v155
    %v604 = vunpack.c.l.b16 %v156
    %v605 = vunpack.c.h.b16 %v156
    %v606 = vunpack.c.l.b16 %v157
    %v607 = vunpack.c.h.b16 %v157
    %v608 = vunpack.c.l.b16 %v158
    %v609 = vunpack.c.h.b16 %v158
    %v610 = vunpack.c.l.b16 %v159
    %v611 = vunpack.c.h.b16 %v159
    %v612 = vunpack.c.l.b16 %v160
    %v613 = vunpack.c.h.b16 %v160
    %v614 = vunpack.c.l.b16 %v161
    %v615 = vunpack.c.h.b16 %v161
    %v616 = vunpack.c.l.b16 %v162
    %v617 = vunpack.c.h.b16 %v162
    %v618 = vunpack.c.l.b16 %v163
    %v619 = vunpack.c.h.b16 %v163
    %v620 = vunpack.c.l.b16 %v164
    %v621 = vunpack.c.h.b16 %v164
    %v622 = vunpack.c.l.b16 %v165
    %v623 = vunpack.c.h.b16 %v165
    %v624 = vunpack.c.l.b16 %v166
    %v625 = vunpack.c.h.b16 %v166
    %v626 = vunpack.c.l.b16 %v167
    %v627 = vunpack.c.h.b16 %v167
    %v628 = vunpack.c.l.b16 %v168
    %v629 = vunpack.c.h.b16 %v168
    %v630 = vunpack.c.l.b16 %v169
    %v631 = vunpack.c.h.b16 %v169
    %v632 = vunpack.c.l.b16 %v170
    %v633 = vunpack.c.h.b16 %v170
    %v634 = vunpack.c.l.b16 %v171
    %v635 = vunpack.c.h.b16 %v171
    %v636 = vunpack.c.l.b16 %v172
    %v637 = vunpack.c.h.b16 %v172
    %v638 = vunpack.c.l.b16 %v173
    %v639 = vunpack.c.h.b16 %v173
    %v640 = vunpack.c.l.b16 %v174
    %v641 = vunpack.c.h.b16 %v174
    %v642 = vunpack.c.l.b16 %v175
    %v643 = vunpack.c.h.b16 %v175
    %v644 = vunpack.c.l.b16 %v176
    %v645 = vunpack.c.h.b16 %v176
    %v646 = vunpack.c.l.b16 %v177
    %v647 = vunpack.c.h.b16 %v177
    %v648 = vunpack.c.l.b16 %v178
    %v649 = vunpack.c.h.b16 %v178
    %v650 = vunpack.c.l.b16 %v179
    %v651 = vunpack.c.h.b16 %v179
    %v652 = vunpack.c.l.b16 %v180
    %v653 = vunpack.c.h.b16 %v180
    %v654 = vunpack.c.l.b16 %v181
    %v655 = vunpack.c.h.b16 %v181
    %v656 = vunpack.c.l.b16 %v182
    %v657 = vunpack.c.h.b16 %v182
    %v658 = vunpack.c.l.b16 %v183
    %v659 = vunpack.c.h.b16 %v183
    %v660 = vunpack.c.l.b16 %v184
    %v661 = vunpack.c.h.b16 %v184
    %v662 = vunpack.c.l.b16 %v185
    %v663 = vunpack.c.h.b16 %v185
    %v664 = vunpack.c.l.b16 %v186
    %v665 = vunpack.c.h.b16 %v186
    %v666 = vunpack.c.l.b16 %v187
    %v667 = vunpack.c.h.b16 %v187
    %v668 = vunpack.c.l.b16 %v188
    %v669 = vunpack.c.h.b16 %v188
    %v670 = vunpack.c.l.b16 %v189
    %v671 = vunpack.c.h.b16 %v189
    %v672 = vunpack.c.l.b16 %v190
    %v673 = vunpack.c.h.b16 %v190
    %v674 = vunpack.c.l.b16 %v191
    %v675 = vunpack.c.h.b16 %v191
    %v676 = vunpack.c.l.b16 %v192
    %v677 = vunpack.c.h.b16 %v192
    %v678 = vunpack.c.l.b16 %v193
    %v679 = vunpack.c.h.b16 %v193
    %v680 = vunpack.c.l.b16 %v194
    %v681 = vunpack.c.h.b16 %v194
    %v682 = vunpack.c.l.b16 %v195
    %v683 = vunpack.c.h.b16 %v195
    %v684 = vunpack.c.l.b16 %v196
    %v685 = vunpack.c.h.b16 %v196
    %v686 = vunpack.c.l.b16 %v197
    %v687 = vunpack.c.h.b16 %v197
    %v688 = vunpack.c.l.b16 %v198
    %v689 = vunpack.c.h.b16 %v198
    %v690 = vunpack.c.l.b16 %v199
    %v691 = vunpack.c.h.b16 %v199
    %v692 = vunpack.c.l.b16 %v200
    %v693 = vunpack.c.h.b16 %v200
    %v694 = vunpack.c.l.b16 %v201
    %v695 = vunpack.c.h.b16 %v201
    %v696 = vunpack.c.l.b16 %v202
    %v697 = vunpack.c.h.b16 %v202
    %v698 = vunpack.c.l.b16 %v203
    %v699 = vunpack.c.h.b16 %v203
    %v700 = vunpack.c.l.b16 %v204
    %v701 = vunpack.c.h.b16 %v204
    %v702 = vunpack.c.l.b16 %v205
    %v703 = vunpack.c.h.b16 %v205
    %v704 = vunpack.c.l.b16 %v206
    %v705 = vunpack.c.h.b16 %v206
    %v706 = vunpack.c.l.b16 %v207
    %v707 = vunpack.c.h.b16 %v207
    %v708 = vunpack.c.l.b16 %v208
    %v709 = vunpack.c.h.b16 %v208
    %v710 = vunpack.c.l.b16 %v209
    %v711 = vunpack.c.h.b16 %v209
    %v712 = vunpack.c.l.b16 %v210
    %v713 = vunpack.c.h.b16 %v210
    %v714 = vunpack.c.l.b16 %v211
    %v715 = vunpack.c.h.b16 %v211
    %v716 = vunpack.c.l.b16 %v212
    %v717 = vunpack.c.h.b16 %v212
    %v718 = vunpack.c.l.b16 %v213
    %v719 = vunpack.c.h.b16 %v213
    %v720 = vunpack.c.l.b16 %v214
    %v721 = vunpack.c.h.b16 %v214
    %v722 = vunpack.c.l.b16 %v215
    %v723 = vunpack.c.h.b16 %v215
    %v724 = vunpack.c.l.b16 %v216
    %v725 = vunpack.c.h.b16 %v216
    %v726 = vunpack.c.l.b16 %v217
    %v727 = vunpack.c.h.b16 %v217
    %v728 = vunpack.c.l.b16 %v218
    %v729 = vunpack.c.h.b16 %v218
    %v730 = vunpack.c.l.b16 %v219
    %v731 = vunpack.c.h.b16 %v219
    %v732 = vpack.c.b16 %v416, %v412
    %v733 = vpack.c.b16 %v417, %v413
    %v734 = vpack.c.b16 %v418, %v414
    %v735 = vpack.c.b16 %v419, %v415
    %v736 = vpack.c.b16 %v424, %v420
    %v737 = vpack.c.b16 %v425, %v421
    %v738 = vpack.c.b16 %v426, %v422
    %v739 = vpack.c.b16 %v427, %v423
    %v740 = vpack.c.b16 %v432, %v428
    %v741 = vpack.c.b16 %v433, %v429
    %v742 = vpack.c.b16 %v434, %v430
    %v743 = vpack.c.b16 %v435, %v431
    %v744 = vpack.c.b16 %v440, %v436
    %v745 = vpack.c.b16 %v441, %v437
    %v746 = vpack.c.b16 %v442, %v438
    %v747 = vpack.c.b16 %v443, %v439
    %v748 = vpack.c.b16 %v448, %v444
    %v749 = vpack.c.b16 %v449, %v445
    %v750 = vpack.c.b16 %v450, %v446
    %v751 = vpack.c.b16 %v451, %v447
    %v752 = vpack.c.b16 %v456, %v452
    %v753 = vpack.c.b16 %v457, %v453
    %v754 = vpack.c.b16 %v458, %v454
    %v755 = vpack.c.b16 %v459, %v455
    %v756 = vpack.c.b16 %v464, %v460
    %v757 = vpack.c.b16 %v465, %v461
    %v758 = vpack.c.b16 %v466, %v462
    %v759 = vpack.c.b16 %v467, %v463
    %v760 = vpack.c.b16 %v472, %v468
    %v761 = vpack.c.b16 %v473, %v469
    %v762 = vpack.c.b16 %v474, %v470
    %v763 = vpack.c.b16 %v475, %v471
    %v764 = vpack.c.b16 %v480, %v476
    %v765 = vpack.c.b16 %v481, %v477
    %v766 = vpack.c.b16 %v482, %v478
    %v767 = vpack.c.b16 %v483, %v479
    %v768 = vpack.c.b16 %v488, %v484
    %v769 = vpack.c.b16 %v489, %v485
    %v770 = vpack.c.b16 %v490, %v486
    %v771 = vpack.c.b16 %v491, %v487
    %v772 = vpack.c.b16 %v496, %v492
    %v773 = vpack.c.b16 %v497, %v493
    %v774 = vpack.c.b16 %v498, %v494
    %v775 = vpack.c.b16 %v499, %v495
    %v776 = vpack.c.b16 %v504, %v500
    %v777 = vpack.c.b16 %v505, %v501
    %v778 = vpack.c.b16 %v506, %v502
    %v779 = vpack.c.b16 %v507, %v503
    %v780 = vpack.c.b16 %v512, %v508
    %v781 = vpack.c.b16 %v513, %v509
    %v782 = vpack.c.b16 %v514, %v510
    %v783 = vpack.c.b16 %v515, %v511
    %v784 = vpack.c.b16 %v520, %v516
    %v785 = vpack.c.b16 %v521, %v517
    %v786 = vpack.c.b16 %v522, %v518
    %v787 = vpack.c.b16 %v523, %v519
    %v788 = vpack.c.b16 %v528, %v524
    %v789 = vpack.c.b16 %v529, %v525
    %v790 = vpack.c.b16 %v530, %v526
    %v791 = vpack.c.b16 %v531, %v527
    %v792 = vpack.c.b16 %v536, %v532
    %v793 = vpack.c.b16 %v537, %v533
    %v794 = vpack.c.b16 %v538, %v534
    %v795 = vpack.c.b16 %v539, %v535
    %v796 = vpack.c.b16 %v544, %v540
    %v797 = vpack.c.b16 %v545, %v541
    %v798 = vpack.c.b16 %v546, %v542
    %v799 = vpack.c.b16 %v547, %v543
    %v800 = vpack.c.b16 %v552, %v548
    %v801 = vpack.c.b16 %v553, %v549
    %v802 = vpack.c.b16 %v554, %v550
    %v803 = vpack.c.b16 %v555, %v551
    %v804 = vpack.c.b16 %v560, %v556
    %v805 = vpack.c.b16 %v561, %v557
    %v806 = vpack.c.b16 %v562, %v558
    %v807 = vpack.c.b16 %v563, %v559
    %v808 = vpack.c.b16 %v568, %v564
    %v809 = vpack.c.b16 %v569, %v565
    %v810 = vpack.c.b16 %v570, %v566
    %v811 = vpack.c.b16 %v571, %v567
    %v812 = vpack.c.b16 %v576, %v572
    %v813 = vpack.c.b16 %v577, %v573
    %v814 = vpack.c.b16 %v578, %v574
    %v815 = vpack.c.b16 %v579, %v575
    %v816 = vpack.c.b16 %v584, %v580
    %v817 = vpack.c.b16 %v585, %v581
    %v818 = vpack.c.b16 %v586, %v582
    %v819 = vpack.c.b16 %v587, %v583
    %v820 = vpack.c.b16 %v592, %v588
    %v821 = vpack.c.b16 %v593, %v589
    %v822 = vpack.c.b16 %v594, %v590
    %v823 = vpack.c.b16 %v595, %v591
    %v824 = vpack.c.b16 %v600, %v596
    %v825 = vpack.c.b16 %v601, %v597
    %v826 = vpack.c.b16 %v602, %v598
    %v827 = vpack.c.b16 %v603, %v599
    %v828 = vpack.c.b16 %v608, %v604
    %v829 = vpack.c.b16 %v609, %v605
    %v830 = vpack.c.b16 %v610, %v606
    %v831 = vpack.c.b16 %v611, %v607
    %v832 = vpack.c.b16 %v616, %v612
    %v833 = vpack.c.b16 %v617, %v613
    %v834 = vpack.c.b16 %v618, %v614
    %v835 = vpack.c.b16 %v619, %v615
    %v836 = vpack.c.b16 %v624, %v620
    %v837 = vpack.c.b16 %v625, %v621
    %v838 = vpack.c.b16 %v626, %v622
    %v839 = vpack.c.b16 %v627, %v623
    %v840 = vpack.c.b16 %v632, %v628
    %v841 = vpack.c.b16 %v633, %v629
    %v842 = vpack.c.b16 %v634, %v630
    %v843 = vpack.c.b16 %v635, %v631
    %v844 = vpack.c.b16 %v640, %v636
    %v845 = vpack.c.b16 %v641, %v637
    %v846 = vpack.c.b16 %v642, %v638
    %v847 = vpack.c.b16 %v643, %v639
    %v848 = vpack.c.b16 %v648, %v644
    %v849 = vpack.c.b16 %v649, %v645
    %v850 = vpack.c.b16 %v650, %v646
    %v851 = vpack.c.b16 %v651, %v647
    %v852 = vpack.c.b16 %v656, %v652
    %v853 = vpack.c.b16 %v657, %v653
    %v854 = vpack.c.b16 %v658, %v654
    %v855 = vpack.c.b16 %v659, %v655
    %v856 = vpack.c.b16 %v664, %v660
    %v857 = vpack.c.b16 %v665, %v661
    %v858 = vpack.c.b16 %v666, %v662
    %v859 = vpack.c.b16 %v667, %v663
    %v860 = vpack.c.b16 %v672, %v668
    %v861 = vpack.c.b16 %v673, %v669
    %v862 = vpack.c.b16 %v674, %v670
    %v863 = vpack.c.b16 %v675, %v671
    %v864 = vpack.c.b16 %v680, %v676
    %v865 = vpack.c.b16 %v681, %v677
    %v866 = vpack.c.b16 %v682, %v678
    %v867 = vpack.c.b16 %v683, %v679
    %v868 = vpack.c.b16 %v688, %v684
    %v869 = vpack.c.b16 %v689, %v685
    %v870 = vpack.c.b16 %v690, %v686
    %v871 = vpack.c.b16 %v691, %v687
    %v872 = vpack.c.b16 %v696, %v692
    %v873 = vpack.c.b16 %v697, %v693
    %v874 = vpack.c.b16 %v698, %v694
    %v875 = vpack.c.b16 %v699, %v695
    %v876 = vpack.c.b16 %v704, %v700
    %v877 = vpack.c.b16 %v705, %v701
    %v878 = vpack.c.b16 %v706, %v702
    %v879 = vpack.c.b16 %v707, %v703
    %v880 = vpack.c.b16 %v712, %v708
    %v881 = vpack.c.b16 %v713, %v709
    %v882 = vpack.c.b16 %v714, %v710
    %v883 = vpack.c.b16 %v715, %v711
    %v884 = vpack.c.b16 %v720, %v716
    %v885 = vpack.c.b16 %v721, %v717
    %v886 = vpack.c.b16 %v722, %v718
    %v887 = vpack.c.b16 %v723, %v719
    %v888 = vpack.c.b16 %v728, %v724
    %v889 = vpack.c.b16 %v729, %v725
    %v890 = vpack.c.b16 %v730, %v726
    %v891 = vpack.c.b16 %v731, %v727
    %1052 = vmatprep.subr.bf16.mxu0 %v733
    %1053 = vmatpush1.bf16.msra.mxu0 %v732
    %1054 = vmatprep.subr.bf16.mxu0 %v737
    %1055 = vmatpush1.bf16.msra.mxu0 %v736
    %1056 = vmatprep.subr.bf16.mxu0 %v741
    %1057 = vmatpush1.bf16.msra.mxu0 %v740
    %1058 = vmatprep.subr.bf16.mxu0 %v745
    %1059 = vmatpush1.bf16.msra.mxu0 %v744
    %1060 = vmatprep.subr.bf16.mxu0 %v749
    %1061 = vmatpush1.bf16.msra.mxu0 %v748
    %1062 = vmatprep.subr.bf16.mxu0 %v753
    %1063 = vmatpush1.bf16.msra.mxu0 %v752
    %1064 = vmatprep.subr.bf16.mxu0 %v757
    %1065 = vmatpush1.bf16.msra.mxu0 %v756
    %1066 = vmatprep.subr.bf16.mxu0 %v761
    %1067 = vmatpush1.bf16.msra.mxu0 %v760
    %1068 = vmatprep.subr.bf16.mxu0 %v765
    %1069 = vmatpush1.bf16.msra.mxu0 %v764
    %1070 = vmatprep.subr.bf16.mxu0 %v769
    %1071 = vmatpush1.bf16.msra.mxu0 %v768
    %1072 = vmatprep.subr.bf16.mxu0 %v773
    %1073 = vmatpush1.bf16.msra.mxu0 %v772
    %1074 = vmatprep.subr.bf16.mxu0 %v777
    %1075 = vmatpush1.bf16.msra.mxu0 %v776
    %1076 = vmatprep.subr.bf16.mxu0 %v781
    %1077 = vmatpush1.bf16.msra.mxu0 %v780
    %1078 = vmatprep.subr.bf16.mxu0 %v785
    %1079 = vmatpush1.bf16.msra.mxu0 %v784
    %1080 = vmatprep.subr.bf16.mxu0 %v789
    %1081 = vmatpush1.bf16.msra.mxu0 %v788
    %1082 = vmatprep.subr.bf16.mxu0 %v793
    %1083 = vmatpush1.bf16.msra.mxu0 %v792
    %1084 = vmatprep.mubr.bf16.mxu0 %v221
    %1085 = vmatmul.mubr.bf16.gmra.mrb[0].mxu0 %v220
    %v1086 = vpop.f32.mrb[0].mxu0
    %v1087 = vadd.f32 %v235, %v1086
    %v1088 = vpop.f32.mrb[0].mxu0
    %v1089 = vadd.f32 %v239, %v1088
    %v1090 = vpop.f32.mrb[0].mxu0
    %v1091 = vadd.f32 %v235, %v1090
    %v1092 = vpop.f32.mrb[0].mxu0
    %v1093 = vadd.f32 %v239, %v1092
    %1094 = vmatprep.mubr.bf16.mxu0 %v226
    %1095 = vmatmul.mubr.bf16.gmra.mrb[0].mxu0 %v225
    %v1096 = vpop.f32.mrb[0].mxu0
    %v1097 = vadd.f32 %v235, %v1096
    %v1098 = vpop.f32.mrb[0].mxu0
    %v1099 = vadd.f32 %v239, %v1098
    %v1100 = vpop.f32.mrb[0].mxu0
    %v1101 = vpop.f32.mrb[0].mxu0
    %1102 = vdwg.mxu0
    %1103 = vmatprep.subr.bf16.mxu0 %v797
    %1104 = vmatpush1.bf16.msra.mxu0 %v796
    %1105 = vmatprep.subr.bf16.mxu0 %v801
    %1106 = vmatpush1.bf16.msra.mxu0 %v800
    %1107 = vmatprep.subr.bf16.mxu0 %v805
    %1108 = vmatpush1.bf16.msra.mxu0 %v804
    %1109 = vmatprep.subr.bf16.mxu0 %v809
    %1110 = vmatpush1.bf16.msra.mxu0 %v808
    %1111 = vmatprep.subr.bf16.mxu0 %v813
    %1112 = vmatpush1.bf16.msra.mxu0 %v812
    %1113 = vmatprep.subr.bf16.mxu0 %v817
    %1114 = vmatpush1.bf16.msra.mxu0 %v816
    %1115 = vmatprep.subr.bf16.mxu0 %v821
    %1116 = vmatpush1.bf16.msra.mxu0 %v820
    %1117 = vmatprep.subr.bf16.mxu0 %v825
    %1118 = vmatpush1.bf16.msra.mxu0 %v824
    %1119 = vmatprep.subr.bf16.mxu0 %v829
    %1120 = vmatpush1.bf16.msra.mxu0 %v828
    %1121 = vmatprep.subr.bf16.mxu0 %v833
    %1122 = vmatpush1.bf16.msra.mxu0 %v832
    %1123 = vmatprep.subr.bf16.mxu0 %v837
    %1124 = vmatpush1.bf16.msra.mxu0 %v836
    %1125 = vmatprep.subr.bf16.mxu0 %v841
    %1126 = vmatpush1.bf16.msra.mxu0 %v840
    %1127 = vmatprep.subr.bf16.mxu0 %v845
    %1128 = vmatpush1.bf16.msra.mxu0 %v844
    %1129 = vmatprep.subr.bf16.mxu0 %v849
    %1130 = vmatpush1.bf16.msra.mxu0 %v848
    %1131 = vmatprep.subr.bf16.mxu0 %v853
    %1132 = vmatpush1.bf16.msra.mxu0 %v852
    %1133 = vmatprep.subr.bf16.mxu0 %v857
    %1134 = vmatpush1.bf16.msra.mxu0 %v856
    %1135 = vmatprep.mubr.bf16.mxu0 %v223
    %1136 = vmatmul.mubr.bf16.gmra.mrb[0].mxu0 %v222
    %v1137 = vpop.f32.mrb[0].mxu0
    %v1138 = vadd.f32 %v1087, %v1137
    %v1139 = vpop.f32.mrb[0].mxu0
    %v1140 = vadd.f32 %v1089, %v1139
    %v1141 = vpop.f32.mrb[0].mxu0
    %v1142 = vadd.f32 %v1091, %v1141
    %v1143 = vpop.f32.mrb[0].mxu0
    %v1144 = vadd.f32 %v1093, %v1143
    %1145 = vmatprep.mubr.bf16.mxu0 %v228
    %1146 = vmatmul.mubr.bf16.gmra.mrb[0].mxu0 %v227
    %v1147 = vpop.f32.mrb[0].mxu0
    %v1148 = vadd.f32 %v1097, %v1147
    %v1149 = vpop.f32.mrb[0].mxu0
    %v1150 = vadd.f32 %v1099, %v1149
    %v1151 = vpop.f32.mrb[0].mxu0
    %v1152 = vpop.f32.mrb[0].mxu0
    %1153 = vdwg.mxu0
    %1154 = vmatprep.subr.bf16.mxu0 %v861
    %1155 = vmatpush1.bf16.msra.mxu0 %v860
    %1156 = vmatprep.subr.bf16.mxu0 %v865
    %1157 = vmatpush1.bf16.msra.mxu0 %v864
    %1158 = vmatprep.subr.bf16.mxu0 %v869
    %1159 = vmatpush1.bf16.msra.mxu0 %v868
    %1160 = vmatprep.subr.bf16.mxu0 %v873
    %1161 = vmatpush1.bf16.msra.mxu0 %v872
    %1162 = vmatprep.subr.bf16.mxu0 %v877
    %1163 = vmatpush1.bf16.msra.mxu0 %v876
    %1164 = vmatprep.subr.bf16.mxu0 %v881
    %1165 = vmatpush1.bf16.msra.mxu0 %v880
    %1166 = vmatprep.subr.bf16.mxu0 %v885
    %1167 = vmatpush1.bf16.msra.mxu0 %v884
    %1168 = vmatprep.subr.bf16.mxu0 %v889
    %1169 = vmatpush1.bf16.msra.mxu0 %v888
    %1170 = vmatprep.subr.bf16.mxu0 0
    %1171 = vmatpush1.bf16.msra.mxu0 0
    %1172 = vmatprep.subr.bf16.mxu0 0
    %1173 = vmatpush1.bf16.msra.mxu0 0
    %1174 = vmatprep.subr.bf16.mxu0 0
    %1175 = vmatpush1.bf16.msra.mxu0 0
    %1176 = vmatprep.subr.bf16.mxu0 0
    %1177 = vmatpush1.bf16.msra.mxu0 0
    %1178 = vmatprep.subr.bf16.mxu0 0
    %1179 = vmatpush1.bf16.msra.mxu0 0
    %1180 = vmatprep.subr.bf16.mxu0 0
    %1181 = vmatpush1.bf16.msra.mxu0 0
    %1182 = vmatprep.subr.bf16.mxu0 0
    %1183 = vmatpush1.bf16.msra.mxu0 0
    %1184 = vmatprep.subr.bf16.mxu0 0
    %1185 = vmatpush1.bf16.msra.mxu0 0
    %1186 = vmatprep.mubr.bf16.mxu0 0
    %1187 = vmatmul.mubr.bf16.gmra.mrb[0].mxu0 %v224
    %v1188 = vpop.f32.mrb[0].mxu0
    %v1189 = vadd.f32 %v1138, %v1188
    %v1190 = vpop.f32.mrb[0].mxu0
    %v1191 = vadd.f32 %v1140, %v1190
    %v1192 = vpop.f32.mrb[0].mxu0
    %v1193 = vadd.f32 %v1142, %v1192
    %v1194 = vpop.f32.mrb[0].mxu0
    %v1195 = vadd.f32 %v1144, %v1194
    %1196 = vmatprep.mubr.bf16.mxu0 0
    %1197 = vmatmul.mubr.bf16.gmra.mrb[0].mxu0 %v229
    %v1198 = vpop.f32.mrb[0].mxu0
    %v1199 = vadd.f32 %v1148, %v1198
    %v1200 = vpop.f32.mrb[0].mxu0
    %v1201 = vadd.f32 %v1150, %v1200
    %v1202 = vpop.f32.mrb[0].mxu0
    %v1203 = vpop.f32.mrb[0].mxu0
    %1204 = vdwg.mxu0
    %1205 = vmatprep.subr.bf16.mxu0 %v735
    %1206 = vmatpush1.bf16.msra.mxu0 %v734
    %1207 = vmatprep.subr.bf16.mxu0 %v739
    %1208 = vmatpush1.bf16.msra.mxu0 %v738
    %1209 = vmatprep.subr.bf16.mxu0 %v743
    %1210 = vmatpush1.bf16.msra.mxu0 %v742
    %1211 = vmatprep.subr.bf16.mxu0 %v747
    %1212 = vmatpush1.bf16.msra.mxu0 %v746
    %1213 = vmatprep.subr.bf16.mxu0 %v751
    %1214 = vmatpush1.bf16.msra.mxu0 %v750
    %1215 = vmatprep.subr.bf16.mxu0 %v755
    %1216 = vmatpush1.bf16.msra.mxu0 %v754
    %1217 = vmatprep.subr.bf16.mxu0 %v759
    %1218 = vmatpush1.bf16.msra.mxu0 %v758
    %1219 = vmatprep.subr.bf16.mxu0 %v763
    %1220 = vmatpush1.bf16.msra.mxu0 %v762
    %1221 = vmatprep.subr.bf16.mxu0 %v767
    %1222 = vmatpush1.bf16.msra.mxu0 %v766
    %1223 = vmatprep.subr.bf16.mxu0 %v771
    %1224 = vmatpush1.bf16.msra.mxu0 %v770
    %1225 = vmatprep.subr.bf16.mxu0 %v775
    %1226 = vmatpush1.bf16.msra.mxu0 %v774
    %1227 = vmatprep.subr.bf16.mxu0 %v779
    %1228 = vmatpush1.bf16.msra.mxu0 %v778
    %1229 = vmatprep.subr.bf16.mxu0 %v783
    %1230 = vmatpush1.bf16.msra.mxu0 %v782
    %1231 = vmatprep.subr.bf16.mxu0 %v787
    %1232 = vmatpush1.bf16.msra.mxu0 %v786
    %1233 = vmatprep.subr.bf16.mxu0 %v791
    %1234 = vmatpush1.bf16.msra.mxu0 %v790
    %1235 = vmatprep.subr.bf16.mxu0 %v795
    %1236 = vmatpush1.bf16.msra.mxu0 %v794
    %1237 = vmatprep.mubr.bf16.mxu0 %v221
    %1238 = vmatmul.mubr.bf16.gmra.mrb[0].mxu0 %v220
    %v1239 = vpop.f32.mrb[0].mxu0
    %v1240 = vadd.f32 %v243, %v1239
    %v1241 = vpop.f32.mrb[0].mxu0
    %v1242 = vadd.f32 %v247, %v1241
    %v1243 = vpop.f32.mrb[0].mxu0
    %v1244 = vadd.f32 %v243, %v1243
    %v1245 = vpop.f32.mrb[0].mxu0
    %v1246 = vadd.f32 %v247, %v1245
    %1247 = vmatprep.mubr.bf16.mxu0 %v226
    %1248 = vmatmul.mubr.bf16.gmra.mrb[0].mxu0 %v225
    %v1249 = vpop.f32.mrb[0].mxu0
    %v1250 = vadd.f32 %v243, %v1249
    %v1251 = vpop.f32.mrb[0].mxu0
    %v1252 = vadd.f32 %v247, %v1251
    %v1253 = vpop.f32.mrb[0].mxu0
    %v1254 = vpop.f32.mrb[0].mxu0
    %1255 = vdwg.mxu0
    %1256 = vmatprep.subr.bf16.mxu0 %v799
    %1257 = vmatpush1.bf16.msra.mxu0 %v798
    %1258 = vmatprep.subr.bf16.mxu0 %v803
    %1259 = vmatpush1.bf16.msra.mxu0 %v802
    %1260 = vmatprep.subr.bf16.mxu0 %v807
    %1261 = vmatpush1.bf16.msra.mxu0 %v806
    %1262 = vmatprep.subr.bf16.mxu0 %v811
    %1263 = vmatpush1.bf16.msra.mxu0 %v810
    %1264 = vmatprep.subr.bf16.mxu0 %v815
    %1265 = vmatpush1.bf16.msra.mxu0 %v814
    %1266 = vmatprep.subr.bf16.mxu0 %v819
    %1267 = vmatpush1.bf16.msra.mxu0 %v818
    %1268 = vmatprep.subr.bf16.mxu0 %v823
    %1269 = vmatpush1.bf16.msra.mxu0 %v822
    %1270 = vmatprep.subr.bf16.mxu0 %v827
    %1271 = vmatpush1.bf16.msra.mxu0 %v826
    %1272 = vmatprep.subr.bf16.mxu0 %v831
    %1273 = vmatpush1.bf16.msra.mxu0 %v830
    %1274 = vmatprep.subr.bf16.mxu0 %v835
    %1275 = vmatpush1.bf16.msra.mxu0 %v834
    %1276 = vmatprep.subr.bf16.mxu0 %v839
    %1277 = vmatpush1.bf16.msra.mxu0 %v838
    %1278 = vmatprep.subr.bf16.mxu0 %v843
    %1279 = vmatpush1.bf16.msra.mxu0 %v842
    %1280 = vmatprep.subr.bf16.mxu0 %v847
    %1281 = vmatpush1.bf16.msra.mxu0 %v846
    %1282 = vmatprep.subr.bf16.mxu0 %v851
    %1283 = vmatpush1.bf16.msra.mxu0 %v850
    %1284 = vmatprep.subr.bf16.mxu0 %v855
    %1285 = vmatpush1.bf16.msra.mxu0 %v854
    %1286 = vmatprep.subr.bf16.mxu0 %v859
    %1287 = vmatpush1.bf16.msra.mxu0 %v858
    %1288 = vmatprep.mubr.bf16.mxu0 %v223
    %1289 = vmatmul.mubr.bf16.gmra.mrb[0].mxu0 %v222
    %v1290 = vpop.f32.mrb[0].mxu0
    %v1291 = vadd.f32 %v1240, %v1290
    %v1292 = vpop.f32.mrb[0].mxu0
    %v1293 = vadd.f32 %v1242, %v1292
    %v1294 = vpop.f32.mrb[0].mxu0
    %v1295 = vadd.f32 %v1244, %v1294
    %v1296 = vpop.f32.mrb[0].mxu0
    %v1297 = vadd.f32 %v1246, %v1296
    %1298 = vmatprep.mubr.bf16.mxu0 %v228
    %1299 = vmatmul.mubr.bf16.gmra.mrb[0].mxu0 %v227
    %v1300 = vpop.f32.mrb[0].mxu0
    %v1301 = vadd.f32 %v1250, %v1300
    %v1302 = vpop.f32.mrb[0].mxu0
    %v1303 = vadd.f32 %v1252, %v1302
    %v1304 = vpop.f32.mrb[0].mxu0
    %v1305 = vpop.f32.mrb[0].mxu0
    %1306 = vdwg.mxu0
    %1307 = vmatprep.subr.bf16.mxu0 %v863
    %1308 = vmatpush1.bf16.msra.mxu0 %v862
    %1309 = vmatprep.subr.bf16.mxu0 %v867
    %1310 = vmatpush1.bf16.msra.mxu0 %v866
    %1311 = vmatprep.subr.bf16.mxu0 %v871
    %1312 = vmatpush1.bf16.msra.mxu0 %v870
    %1313 = vmatprep.subr.bf16.mxu0 %v875
    %1314 = vmatpush1.bf16.msra.mxu0 %v874
    %1315 = vmatprep.subr.bf16.mxu0 %v879
    %1316 = vmatpush1.bf16.msra.mxu0 %v878
    %1317 = vmatprep.subr.bf16.mxu0 %v883
    %1318 = vmatpush1.bf16.msra.mxu0 %v882
    %1319 = vmatprep.subr.bf16.mxu0 %v887
    %1320 = vmatpush1.bf16.msra.mxu0 %v886
    %1321 = vmatprep.subr.bf16.mxu0 %v891
    %1322 = vmatpush1.bf16.msra.mxu0 %v890
    %1323 = vmatprep.subr.bf16.mxu0 0
    %1324 = vmatpush1.bf16.msra.mxu0 0
    %1325 = vmatprep.subr.bf16.mxu0 0
    %1326 = vmatpush1.bf16.msra.mxu0 0
    %1327 = vmatprep.subr.bf16.mxu0 0
    %1328 = vmatpush1.bf16.msra.mxu0 0
    %1329 = vmatprep.subr.bf16.mxu0 0
    %1330 = vmatpush1.bf16.msra.mxu0 0
    %1331 = vmatprep.subr.bf16.mxu0 0
    %1332 = vmatpush1.bf16.msra.mxu0 0
    %1333 = vmatprep.subr.bf16.mxu0 0
    %1334 = vmatpush1.bf16.msra.mxu0 0
    %1335 = vmatprep.subr.bf16.mxu0 0
    %1336 = vmatpush1.bf16.msra.mxu0 0
    %1337 = vmatprep.subr.bf16.mxu0 0
    %1338 = vmatpush1.bf16.msra.mxu0 0
    %1339 = vmatprep.mubr.bf16.mxu0 0
    %1340 = vmatmul.mubr.bf16.gmra.mrb[0].mxu0 %v224
    %v1341 = vpop.f32.mrb[0].mxu0
    %v1342 = vadd.f32 %v1291, %v1341
    %v1343 = vpop.f32.mrb[0].mxu0
    %v1344 = vadd.f32 %v1293, %v1343
    %v1345 = vpop.f32.mrb[0].mxu0
    %v1346 = vadd.f32 %v1295, %v1345
    %v1347 = vpop.f32.mrb[0].mxu0
    %v1348 = vadd.f32 %v1297, %v1347
    %1349 = vmatprep.mubr.bf16.mxu0 0
    %1350 = vmatmul.mubr.bf16.gmra.mrb[0].mxu0 %v229
    %v1351 = vpop.f32.mrb[0].mxu0
    %v1352 = vadd.f32 %v1301, %v1351
    %v1353 = vpop.f32.mrb[0].mxu0
    %v1354 = vadd.f32 %v1303, %v1353
    %v1355 = vpop.f32.mrb[0].mxu0
    %v1356 = vpop.f32.mrb[0].mxu0
    %1357 = vdwg.mxu0
    %v1358 = vmax.f32 %v1189, 0.0
    %v1359 = vmax.f32 %v1191, 0.0
    %v1360 = vmax.f32 %v1342, 0.0
    %v1361 = vmax.f32 %v1344, 0.0
    %v1362 = vmax.f32 %v1193, 0.0
    %v1363 = vmax.f32 %v1195, 0.0
    %v1364 = vmax.f32 %v1346, 0.0
    %v1365 = vmax.f32 %v1348, 0.0
    %v1366 = vmax.f32 %v1199, 0.0
    %v1367 = vmax.f32 %v1201, 0.0
    %v1368 = vmax.f32 %v1352, 0.0
    %v1369 = vmax.f32 %v1354, 0.0
    %1370 = vst [vmem:[#allocation2] sm:$0xff] %v1358
    %1371 = vst [vmem:[#allocation2 + $0x8] sm:$0xff] %v1359
    %1372 = vst [vmem:[#allocation2 + $0x10] sm:$0xff] %v1360
    %1373 = vst [vmem:[#allocation2 + $0x18] sm:$0xff] %v1361
    %1374 = vst [vmem:[#allocation2 + $0x20] sm:$0xff] %v1362
    %1375 = vst [vmem:[#allocation2 + $0x28] sm:$0xff] %v1363
    %1376 = vst [vmem:[#allocation2 + $0x30] sm:$0xff] %v1364
    %1377 = vst [vmem:[#allocation2 + $0x38] sm:$0xff] %v1365
    %1378 = vst [vmem:[#allocation2 + $0x40] sm:$0xff] %v1366
    %1379 = vst [vmem:[#allocation2 + $0x48] sm:$0xff] %v1367
    %1380 = vst [vmem:[#allocation2 + $0x50] sm:$0xff] %v1368
    %1381 = vst [vmem:[#allocation2 + $0x58] sm:$0xff] %v1369
    %v1382 = vld [vmem:[#allocation2] sm:$0xfc]
    %v1383 = vld [vmem:[#allocation2 + $0x8] sm:$0xfc]
    %v1384 = vld [vmem:[#allocation2 + $0x10] sm:$0xfc]
    %v1385 = vld [vmem:[#allocation2 + $0x18] sm:$0xfc]
    %v1386 = vld [vmem:[#allocation2 + $0x20] sm:$0xff]
    %v1387 = vld [vmem:[#allocation2 + $0x28] sm:$0xff]
    %v1388 = vld [vmem:[#allocation2 + $0x30] sm:$0xff]
    %v1389 = vld [vmem:[#allocation2 + $0x38] sm:$0xff]
    %v1390 = vld [vmem:[#allocation2 + $0x40] sm:$0xff]
    %v1391 = vld [vmem:[#allocation2 + $0x48] sm:$0xff]
    %v1392 = vld [vmem:[#allocation2 + $0x50] sm:$0xff]
    %v1393 = vld [vmem:[#allocation2 + $0x58] sm:$0xff]
    %v1394 = vld [vmem:[#allocation2 + $0x60] sm:$0x3]
    %v1395 = vld [vmem:[#allocation2 + $0x68] sm:$0x3]
    %v1396 = vld [vmem:[#allocation2 + $0x70] sm:$0x3]
    %v1397 = vld [vmem:[#allocation2 + $0x78] sm:$0x3]
    %vm1414 = vcmask 1045504
    %v1415 = vrot.slane %v1382, 2
    %v1416 = vrot.slane %v1386, 2
    %v1417 = vsel %vm1414, %v1415, %v1416
    %v1418 = vrot.slane %v1383, 2
    %v1419 = vrot.slane %v1387, 2
    %v1420 = vsel %vm1414, %v1418, %v1419
    %v1421 = vrot.slane %v1384, 2
    %v1422 = vrot.slane %v1388, 2
    %v1423 = vsel %vm1414, %v1421, %v1422
    %v1424 = vrot.slane %v1385, 2
    %v1425 = vrot.slane %v1389, 2
    %v1426 = vsel %vm1414, %v1424, %v1425
    %v1427 = vrot.slane %v1390, 2
    %v1428 = vsel %vm1414, %v1416, %v1427
    %v1429 = vrot.slane %v1391, 2
    %v1430 = vsel %vm1414, %v1419, %v1429
    %v1431 = vrot.slane %v1392, 2
    %v1432 = vsel %vm1414, %v1422, %v1431
    %v1433 = vrot.slane %v1393, 2
    %v1434 = vsel %vm1414, %v1425, %v1433
    %v1435 = vrot.slane %v1394, 2
    %v1436 = vsel %vm1414, %v1427, %v1435
    %v1437 = vrot.slane %v1395, 2
    %v1438 = vsel %vm1414, %v1429, %v1437
    %v1439 = vrot.slane %v1396, 2
    %v1440 = vsel %vm1414, %v1431, %v1439
    %v1441 = vrot.slane %v1397, 2
    %v1442 = vsel %vm1414, %v1433, %v1441
    %v1455 = vmax.f32 %v1358, %v1417
    %v1456 = vmax.f32 %v1359, %v1420
    %v1457 = vmax.f32 %v1360, %v1423
    %v1458 = vmax.f32 %v1361, %v1426
    %v1459 = vmax.f32 %v1362, %v1428
    %v1460 = vmax.f32 %v1363, %v1430
    %v1461 = vmax.f32 %v1364, %v1432
    %v1462 = vmax.f32 %v1365, %v1434
    %v1463 = vmax.f32 %v1366, %v1436
    %v1464 = vmax.f32 %v1367, %v1438
    %v1465 = vmax.f32 %v1368, %v1440
    %v1466 = vmax.f32 %v1369, %v1442
    %v1467 = vmax.f32 %v1455, %v1457
    %v1468 = vmax.f32 %v1456, %v1458
    %v1469 = vmax.f32 %v1459, %v1461
    %v1470 = vmax.f32 %v1460, %v1462
    %v1471 = vmax.f32 %v1463, %v1465
    %v1472 = vmax.f32 %v1464, %v1466
    %1473 = vst [vmem:[#allocation3 + $0x10] sm:$0xff] %v1467
    %1474 = vst [vmem:[#allocation3 + $0x18] sm:$0xff] %v1468
    %1475 = vst [vmem:[#allocation3 + $0x20] sm:$0xff] %v1469
    %1476 = vst [vmem:[#allocation3 + $0x28] sm:$0xff] %v1470
    %1477 = vst [vmem:[#allocation3 + $0x30] sm:$0xff] %v1471
    %1478 = vst [vmem:[#allocation3 + $0x38] sm:$0xff] %v1472
    %v1479 = vld [vmem:[#allocation3] sm:$0xff]
    %v1480 = vld [vmem:[#allocation3 + $0x8] sm:$0xff]
    %v1481 = vld [vmem:[#allocation3 + $0x10] sm:$0xff]
    %v1482 = vld [vmem:[#allocation3 + $0x18] sm:$0xff]
    %v1483 = vld [vmem:[#allocation3 + $0x20] sm:$0xff]
    %v1484 = vld [vmem:[#allocation3 + $0x28] sm:$0xff]
    %1485 = vst [vmem:[#allocation4] sm:$0xff] %v1479
    %1486 = vst [vmem:[#allocation4 + $0x8] sm:$0xff] %v1480
    %1487 = vst [vmem:[#allocation4 + $0x50] sm:$0xff] %v1481
    %1488 = vst [vmem:[#allocation4 + $0x58] sm:$0xff] %v1482
    %1489 = vst [vmem:[#allocation4 + $0xa0] sm:$0xff] %v1483
    %1490 = vst [vmem:[#allocation4 + $0xa8] sm:$0xff] %v1484
    %v1491 = vld [vmem:[#allocation3] sm:$0xf0]
    %v1492 = vld [vmem:[#allocation3 + $0x8] sm:$0xf0]
    %v1493 = vld [vmem:[#allocation3 + $0x10] sm:$0xff]
    %v1494 = vld [vmem:[#allocation3 + $0x18] sm:$0xff]
    %v1495 = vld [vmem:[#allocation3 + $0x20] sm:$0xff]
    %v1496 = vld [vmem:[#allocation3 + $0x28] sm:$0xff]
    %v1497 = vld [vmem:[#allocation3 + $0x30] sm:$0xf]
    %v1498 = vld [vmem:[#allocation3 + $0x38] sm:$0xf]
    %vm1507 = vcmask 1043456
    %v1508 = vrot.slane %v1491, 4
    %v1509 = vrot.slane %v1493, 4
    %v1510 = vsel %vm1507, %v1508, %v1509
    %v1511 = vrot.slane %v1492, 4
    %v1512 = vrot.slane %v1494, 4
    %v1513 = vsel %vm1507, %v1511, %v1512
    %v1514 = vrot.slane %v1495, 4
    %v1515 = vsel %vm1507, %v1509, %v1514
    %v1516 = vrot.slane %v1496, 4
    %v1517 = vsel %vm1507, %v1512, %v1516
    %v1518 = vrot.slane %v1497, 4
    %v1519 = vsel %vm1507, %v1514, %v1518
    %v1520 = vrot.slane %v1498, 4
    %v1521 = vsel %vm1507, %v1516, %v1520
    %1528 = vst [vmem:[#allocation4 + $0x10] sm:$0xff] %v1510
    %1529 = vst [vmem:[#allocation4 + $0x18] sm:$0xff] %v1513
    %1530 = vst [vmem:[#allocation4 + $0x60] sm:$0xff] %v1515
    %1531 = vst [vmem:[#allocation4 + $0x68] sm:$0xff] %v1517
    %1532 = vst [vmem:[#allocation4 + $0xb0] sm:$0xff] %v1519
    %1533 = vst [vmem:[#allocation4 + $0xb8] sm:$0xff] %v1521
    %v1534 = vld [vmem:[#allocation3 + $0x10] sm:$0xff]
    %v1535 = vld [vmem:[#allocation3 + $0x18] sm:$0xff]
    %v1536 = vld [vmem:[#allocation3 + $0x20] sm:$0xff]
    %v1537 = vld [vmem:[#allocation3 + $0x28] sm:$0xff]
    %v1538 = vld [vmem:[#allocation3 + $0x30] sm:$0xff]
    %v1539 = vld [vmem:[#allocation3 + $0x38] sm:$0xff]
    %1540 = vst [vmem:[#allocation4 + $0x20] sm:$0xff] %v1534
    %1541 = vst [vmem:[#allocation4 + $0x28] sm:$0xff] %v1535
    %1542 = vst [vmem:[#allocation4 + $0x70] sm:$0xff] %v1536
    %1543 = vst [vmem:[#allocation4 + $0x78] sm:$0xff] %v1537
    %1544 = vst [vmem:[#allocation4 + $0xc0] sm:$0xff] %v1538
    %1545 = vst [vmem:[#allocation4 + $0xc8] sm:$0xff] %v1539
    %v1546 = vld [vmem:[#allocation3 + $0x10] sm:$0xf0]
    %v1547 = vld [vmem:[#allocation3 + $0x18] sm:$0xf0]
    %v1548 = vld [vmem:[#allocation3 + $0x20] sm:$0xff]
    %v1549 = vld [vmem:[#allocation3 + $0x28] sm:$0xff]
    %v1550 = vld [vmem:[#allocation3 + $0x30] sm:$0xff]
    %v1551 = vld [vmem:[#allocation3 + $0x38] sm:$0xff]
    %v1552 = vld [vmem:[#allocation3 + $0x40] sm:$0xf]
    %v1553 = vld [vmem:[#allocation3 + $0x48] sm:$0xf]
    %v1562 = vrot.slane %v1546, 4
    %v1563 = vrot.slane %v1548, 4
    %v1564 = vsel %vm1507, %v1562, %v1563
    %v1565 = vrot.slane %v1547, 4
    %v1566 = vrot.slane %v1549, 4
    %v1567 = vsel %vm1507, %v1565, %v1566
    %v1568 = vrot.slane %v1550, 4
    %v1569 = vsel %vm1507, %v1563, %v1568
    %v1570 = vrot.slane %v1551, 4
    %v1571 = vsel %vm1507, %v1566, %v1570
    %v1572 = vrot.slane %v1552, 4
    %v1573 = vsel %vm1507, %v1568, %v1572
    %v1574 = vrot.slane %v1553, 4
    %v1575 = vsel %vm1507, %v1570, %v1574
    %1582 = vst [vmem:[#allocation4 + $0x30] sm:$0xff] %v1564
    %1583 = vst [vmem:[#allocation4 + $0x38] sm:$0xff] %v1567
    %1584 = vst [vmem:[#allocation4 + $0x80] sm:$0xff] %v1569
    %1585 = vst [vmem:[#allocation4 + $0x88] sm:$0xff] %v1571
    %1586 = vst [vmem:[#allocation4 + $0xd0] sm:$0xff] %v1573
    %1587 = vst [vmem:[#allocation4 + $0xd8] sm:$0xff] %v1575
    %v1588 = vld [vmem:[#allocation3 + $0x20] sm:$0xff]
    %v1589 = vld [vmem:[#allocation3 + $0x28] sm:$0xff]
    %v1590 = vld [vmem:[#allocation3 + $0x30] sm:$0xff]
    %v1591 = vld [vmem:[#allocation3 + $0x38] sm:$0xff]
    %v1592 = vld [vmem:[#allocation3 + $0x40] sm:$0xff]
    %v1593 = vld [vmem:[#allocation3 + $0x48] sm:$0xff]
    %1594 = vst [vmem:[#allocation4 + $0x40] sm:$0xff] %v1588
    %1595 = vst [vmem:[#allocation4 + $0x48] sm:$0xff] %v1589
    %1596 = vst [vmem:[#allocation4 + $0x90] sm:$0xff] %v1590
    %1597 = vst [vmem:[#allocation4 + $0x98] sm:$0xff] %v1591
    %1598 = vst [vmem:[#allocation4 + $0xe0] sm:$0xff] %v1592
    %1599 = vst [vmem:[#allocation4 + $0xe8] sm:$0xff] %v1593
    %v1600 = vld [vmem:[#allocation4] sm:$0xff]
    %v1601 = vld [vmem:[#allocation4 + $0x8] sm:$0xff]
    %v1602 = vld [vmem:[#allocation4 + $0x10] sm:$0xff]
    %v1603 = vld [vmem:[#allocation4 + $0x18] sm:$0xff]
    %v1604 = vld [vmem:[#allocation4 + $0x20] sm:$0xff]
    %v1605 = vld [vmem:[#allocation4 + $0x28] sm:$0xff]
    %v1606 = vld [vmem:[#allocation4 + $0x30] sm:$0xff]
    %v1607 = vld [vmem:[#allocation4 + $0x38] sm:$0xff]
    %v1608 = vld [vmem:[#allocation4 + $0x40] sm:$0xff]
    %v1609 = vld [vmem:[#allocation4 + $0x48] sm:$0xff]
    %v1610 = vld [vmem:[#allocation4 + $0x50] sm:$0xff]
    %v1611 = vld [vmem:[#allocation4 + $0x58] sm:$0xff]
    %v1612 = vld [vmem:[#allocation4 + $0x60] sm:$0xff]
    %v1613 = vld [vmem:[#allocation4 + $0x68] sm:$0xff]
    %v1614 = vld [vmem:[#allocation4 + $0x70] sm:$0xff]
    %v1615 = vld [vmem:[#allocation4 + $0x78] sm:$0xff]
    %v1616 = vld [vmem:[#allocation4 + $0x80] sm:$0xff]
    %v1617 = vld [vmem:[#allocation4 + $0x88] sm:$0xff]
    %v1618 = vld [vmem:[#allocation4 + $0x90] sm:$0xff]
    %v1619 = vld [vmem:[#allocation4 + $0x98] sm:$0xff]
    %v1620 = vld [vmem:[#allocation4 + $0xa0] sm:$0xff]
    %v1621 = vld [vmem:[#allocation4 + $0xa8] sm:$0xff]
    %v1622 = vld [vmem:[#allocation4 + $0xb0] sm:$0xff]
    %v1623 = vld [vmem:[#allocation4 + $0xb8] sm:$0xff]
    %v1624 = vld [vmem:[#allocation4 + $0xc0] sm:$0xff]
    %v1625 = vld [vmem:[#allocation4 + $0xc8] sm:$0xff]
    %v1626 = vld [vmem:[#allocation4 + $0xd0] sm:$0xff]
    %v1627 = vld [vmem:[#allocation4 + $0xd8] sm:$0xff]
    %v1628 = vld [vmem:[#allocation4 + $0xe0] sm:$0xff]
    %v1629 = vld [vmem:[#allocation4 + $0xe8] sm:$0xff]
    %v1630 = vld [vmem:[%s1 + $0x500] sm:$0xff]
    %v1631 = vld [vmem:[%s1 + $0x508] sm:$0xff]
    %v1632 = vld [vmem:[%s1 + $0x510] sm:$0xff]
    %v1633 = vld [vmem:[%s1 + $0x518] sm:$0xff]
    %v1634 = vld [vmem:[%s1 + $0x520] sm:$0xff]
    %v1635 = vld [vmem:[%s1 + $0x528] sm:$0xff]
    %v1636 = vld [vmem:[%s1 + $0x530] sm:$0xff]
    %v1637 = vld [vmem:[%s1 + $0x538] sm:$0xff]
    %v1638 = vld [vmem:[%s1 + $0x540] sm:$0xff]
    %v1639 = vld [vmem:[%s1 + $0x548] sm:$0xff]
    %v1640 = vld [vmem:[%s1 + $0x550] sm:$0xff]
    %v1641 = vld [vmem:[%s1 + $0x558] sm:$0xff]
    %v1642 = vld [vmem:[%s1 + $0x560] sm:$0xff]
    %v1643 = vld [vmem:[%s1 + $0x568] sm:$0xff]
    %v1644 = vld [vmem:[%s1 + $0x570] sm:$0xff]
    %v1645 = vld [vmem:[%s1 + $0x578] sm:$0xff]
    %v1646 = vld [vmem:[%s1 + $0x580] sm:$0xff]
    %v1647 = vld [vmem:[%s1 + $0x588] sm:$0xff]
    %v1648 = vld [vmem:[%s1 + $0x590] sm:$0xff]
    %v1649 = vld [vmem:[%s1 + $0x598] sm:$0xff]
    %v1650 = vld [vmem:[%s1 + $0x5a0] sm:$0xff]
    %v1651 = vld [vmem:[%s1 + $0x5a8] sm:$0xff]
    %v1652 = vld [vmem:[%s1 + $0x5b0] sm:$0xff]
    %v1653 = vld [vmem:[%s1 + $0x5b8] sm:$0xff]
    %v1654 = vld [vmem:[%s1 + $0x5c0] sm:$0xff]
    %v1655 = vld [vmem:[%s1 + $0x5c8] sm:$0xff]
    %v1656 = vld [vmem:[%s1 + $0x5d0] sm:$0xff]
    %v1657 = vld [vmem:[%s1 + $0x5d8] sm:$0xff]
    %v1658 = vld [vmem:[%s1 + $0x5e0] sm:$0xff]
    %v1659 = vld [vmem:[%s1 + $0x5e8] sm:$0xff]
    %v1660 = vld [vmem:[%s1 + $0x5f0] sm:$0xff]
    %v1661 = vld [vmem:[%s1 + $0x5f8] sm:$0xff]
    %v1662 = vld [vmem:[%s1 + $0x600] sm:$0xff]
    %v1663 = vld [vmem:[%s1 + $0x608] sm:$0xff]
    %v1664 = vld [vmem:[%s1 + $0x610] sm:$0xff]
    %v1665 = vld [vmem:[%s1 + $0x618] sm:$0xff]
    %v1666 = vld [vmem:[%s1 + $0x620] sm:$0xff]
    %v1667 = vld [vmem:[%s1 + $0x628] sm:$0xff]
    %v1668 = vld [vmem:[%s1 + $0x630] sm:$0xff]
    %v1669 = vld [vmem:[%s1 + $0x638] sm:$0xff]
    %v1670 = vld [vmem:[%s1 + $0x640] sm:$0xff]
    %v1671 = vld [vmem:[%s1 + $0x648] sm:$0xff]
    %v1672 = vld [vmem:[%s1 + $0x650] sm:$0xff]
    %v1673 = vld [vmem:[%s1 + $0x658] sm:$0xff]
    %v1674 = vld [vmem:[%s1 + $0x660] sm:$0xff]
    %v1675 = vld [vmem:[%s1 + $0x668] sm:$0xff]
    %v1676 = vld [vmem:[%s1 + $0x670] sm:$0xff]
    %v1677 = vld [vmem:[%s1 + $0x678] sm:$0xff]
    %v1678 = vld [vmem:[%s1 + $0x680] sm:$0xff]
    %v1679 = vld [vmem:[%s1 + $0x688] sm:$0xff]
    %v1680 = vld [vmem:[%s1 + $0x690] sm:$0xff]
    %v1681 = vld [vmem:[%s1 + $0x698] sm:$0xff]
    %v1682 = vld [vmem:[%s1 + $0x6a0] sm:$0xff]
    %v1683 = vld [vmem:[%s1 + $0x6a8] sm:$0xff]
    %v1684 = vld [vmem:[%s1 + $0x6b0] sm:$0xff]
    %v1685 = vld [vmem:[%s1 + $0x6b8] sm:$0xff]
    %v1686 = vld [vmem:[%s1 + $0x6c0] sm:$0xff]
    %v1687 = vld [vmem:[%s1 + $0x6c8] sm:$0xff]
    %v1688 = vld [vmem:[%s1 + $0x6d0] sm:$0xff]
    %v1689 = vld [vmem:[%s1 + $0x6d8] sm:$0xff]
    %v1690 = vld [vmem:[%s1 + $0x6e0] sm:$0xff]
    %v1691 = vld [vmem:[%s1 + $0x6e8] sm:$0xff]
    %v1692 = vld [vmem:[%s1 + $0x6f0] sm:$0xff]
    %v1693 = vld [vmem:[%s1 + $0x6f8] sm:$0xff]
    %v1694 = vld [vmem:[%s1 + $0x700] sm:$0xff]
    %v1695 = vld [vmem:[%s1 + $0x708] sm:$0xff]
    %v1696 = vld [vmem:[%s1 + $0x710] sm:$0xff]
    %v1697 = vld [vmem:[%s1 + $0x718] sm:$0xff]
    %v1698 = vld [vmem:[%s1 + $0x720] sm:$0xff]
    %v1699 = vld [vmem:[%s1 + $0x728] sm:$0xff]
    %v1700 = vld [vmem:[%s1 + $0x730] sm:$0xff]
    %v1701 = vld [vmem:[%s1 + $0x738] sm:$0xff]
    %v1702 = vld [vmem:[%s1 + $0x740] sm:$0xff]
    %v1703 = vld [vmem:[%s1 + $0x748] sm:$0xff]
    %v1704 = vld [vmem:[%s1 + $0x750] sm:$0xff]
    %v1705 = vld [vmem:[%s1 + $0x758] sm:$0xff]
    %v1706 = vld [vmem:[%s1 + $0x760] sm:$0xff]
    %v1707 = vld [vmem:[%s1 + $0x768] sm:$0xff]
    %v1708 = vld [vmem:[%s1 + $0x770] sm:$0xff]
    %v1709 = vld [vmem:[%s1 + $0x778] sm:$0xff]
    %v1710 = vld [vmem:[%s1 + $0x780] sm:$0xff]
    %v1711 = vld [vmem:[%s1 + $0x788] sm:$0xff]
    %v1712 = vld [vmem:[%s1 + $0x790] sm:$0xff]
    %v1713 = vld [vmem:[%s1 + $0x798] sm:$0xff]
    %v1714 = vld [vmem:[%s1 + $0x7a0] sm:$0xff]
    %v1715 = vld [vmem:[%s1 + $0x7a8] sm:$0xff]
    %v1716 = vld [vmem:[%s1 + $0x7b0] sm:$0xff]
    %v1717 = vld [vmem:[%s1 + $0x7b8] sm:$0xff]
    %v1718 = vld [vmem:[%s1 + $0x7c0] sm:$0xff]
    %v1719 = vld [vmem:[%s1 + $0x7c8] sm:$0xff]
    %v1720 = vld [vmem:[%s1 + $0x7d0] sm:$0xff]
    %v1721 = vld [vmem:[%s1 + $0x7d8] sm:$0xff]
    %v1722 = vld [vmem:[%s1 + $0x7e0] sm:$0xff]
    %v1723 = vld [vmem:[%s1 + $0x7e8] sm:$0xff]
    %v1724 = vld [vmem:[%s1 + $0x7f0] sm:$0xff]
    %v1725 = vld [vmem:[%s1 + $0x7f8] sm:$0xff]
    %v1726 = vld [vmem:[%s1 + $0x800] sm:$0xff]
    %v1727 = vld [vmem:[%s1 + $0x808] sm:$0xff]
    %v1728 = vld [vmem:[%s1 + $0x810] sm:$0xff]
    %v1729 = vld [vmem:[%s1 + $0x818] sm:$0xff]
    %v1730 = vld [vmem:[%s1 + $0x820] sm:$0xff]
    %v1731 = vld [vmem:[%s1 + $0x828] sm:$0xff]
    %v1732 = vld [vmem:[%s1 + $0x830] sm:$0xff]
    %v1733 = vld [vmem:[%s1 + $0x838] sm:$0xff]
    %v1734 = vld [vmem:[%s1 + $0x840] sm:$0xff]
    %v1735 = vld [vmem:[%s1 + $0x848] sm:$0xff]
    %v1736 = vld [vmem:[%s1 + $0x850] sm:$0xff]
    %v1737 = vld [vmem:[%s1 + $0x858] sm:$0xff]
    %v1738 = vld [vmem:[%s1 + $0x860] sm:$0xff]
    %v1739 = vld [vmem:[%s1 + $0x868] sm:$0xff]
    %v1740 = vld [vmem:[%s1 + $0x870] sm:$0xff]
    %v1741 = vld [vmem:[%s1 + $0x878] sm:$0xff]
    %v1742 = vld [vmem:[%s1 + $0x880] sm:$0xff]
    %v1743 = vld [vmem:[%s1 + $0x888] sm:$0xff]
    %v1744 = vld [vmem:[%s1 + $0x890] sm:$0xff]
    %v1745 = vld [vmem:[%s1 + $0x898] sm:$0xff]
    %v1746 = vld [vmem:[%s1 + $0x8a0] sm:$0xff]
    %v1747 = vld [vmem:[%s1 + $0x8a8] sm:$0xff]
    %v1748 = vld [vmem:[%s1 + $0x8b0] sm:$0xff]
    %v1749 = vld [vmem:[%s1 + $0x8b8] sm:$0xff]
    %v1750 = vld [vmem:[%s1 + $0x8c0] sm:$0xff]
    %v1751 = vld [vmem:[%s1 + $0x8c8] sm:$0xff]
    %v1752 = vld [vmem:[%s1 + $0x8d0] sm:$0xff]
    %v1753 = vld [vmem:[%s1 + $0x8d8] sm:$0xff]
    %v1754 = vld [vmem:[%s1 + $0x8e0] sm:$0xff]
    %v1755 = vld [vmem:[%s1 + $0x8e8] sm:$0xff]
    %v1756 = vld [vmem:[%s1 + $0x8f0] sm:$0xff]
    %v1757 = vld [vmem:[%s1 + $0x8f8] sm:$0xff]
    %v1758 = vld [vmem:[%s1 + $0x900] sm:$0xff]
    %v1759 = vld [vmem:[%s1 + $0x908] sm:$0xff]
    %v1760 = vld [vmem:[%s1 + $0x910] sm:$0xff]
    %v1761 = vld [vmem:[%s1 + $0x918] sm:$0xff]
    %v1762 = vld [vmem:[%s1 + $0x920] sm:$0xff]
    %v1763 = vld [vmem:[%s1 + $0x928] sm:$0xff]
    %v1764 = vld [vmem:[%s1 + $0x930] sm:$0xff]
    %v1765 = vld [vmem:[%s1 + $0x938] sm:$0xff]
    %v1766 = vld [vmem:[%s1 + $0x940] sm:$0xff]
    %v1767 = vld [vmem:[%s1 + $0x948] sm:$0xff]
    %v1768 = vld [vmem:[%s1 + $0x950] sm:$0xff]
    %v1769 = vld [vmem:[%s1 + $0x958] sm:$0xff]
    %v1770 = vld [vmem:[%s1 + $0x960] sm:$0xff]
    %v1771 = vld [vmem:[%s1 + $0x968] sm:$0xff]
    %v1772 = vld [vmem:[%s1 + $0x970] sm:$0xff]
    %v1773 = vld [vmem:[%s1 + $0x978] sm:$0xff]
    %v1774 = vld [vmem:[%s1 + $0x980] sm:$0xff]
    %v1775 = vld [vmem:[%s1 + $0x988] sm:$0xff]
    %v1776 = vld [vmem:[%s1 + $0x990] sm:$0xff]
    %v1777 = vld [vmem:[%s1 + $0x998] sm:$0xff]
    %v1778 = vld [vmem:[%s1 + $0x9a0] sm:$0xff]
    %v1779 = vld [vmem:[%s1 + $0x9a8] sm:$0xff]
    %v1780 = vld [vmem:[%s1 + $0x9b0] sm:$0xff]
    %v1781 = vld [vmem:[%s1 + $0x9b8] sm:$0xff]
    %v1782 = vld [vmem:[%s1 + $0x9c0] sm:$0xff]
    %v1783 = vld [vmem:[%s1 + $0x9c8] sm:$0xff]
    %v1784 = vld [vmem:[%s1 + $0x9d0] sm:$0xff]
    %v1785 = vld [vmem:[%s1 + $0x9d8] sm:$0xff]
    %v1786 = vld [vmem:[%s1 + $0x9e0] sm:$0xff]
    %v1787 = vld [vmem:[%s1 + $0x9e8] sm:$0xff]
    %v1788 = vld [vmem:[%s1 + $0x9f0] sm:$0xff]
    %v1789 = vld [vmem:[%s1 + $0x9f8] sm:$0xff]
    %v1790 = vld [vmem:[%s1 + $0xa00] sm:$0xff]
    %v1791 = vld [vmem:[%s1 + $0xa08] sm:$0xff]
    %v1792 = vld [vmem:[%s1 + $0xa10] sm:$0xff]
    %v1793 = vld [vmem:[%s1 + $0xa18] sm:$0xff]
    %v1794 = vld [vmem:[%s1 + $0xa20] sm:$0xff]
    %v1795 = vld [vmem:[%s1 + $0xa28] sm:$0xff]
    %v1796 = vld [vmem:[%s1 + $0xa30] sm:$0xff]
    %v1797 = vld [vmem:[%s1 + $0xa38] sm:$0xff]
    %v1798 = vld [vmem:[%s1 + $0xa40] sm:$0xff]
    %v1799 = vld [vmem:[%s1 + $0xa48] sm:$0xff]
    %v1800 = vld [vmem:[%s1 + $0xa50] sm:$0xff]
    %v1801 = vld [vmem:[%s1 + $0xa58] sm:$0xff]
    %v1802 = vld [vmem:[%s1 + $0xa60] sm:$0xff]
    %v1803 = vld [vmem:[%s1 + $0xa68] sm:$0xff]
    %v1804 = vld [vmem:[%s1 + $0xa70] sm:$0xff]
    %v1805 = vld [vmem:[%s1 + $0xa78] sm:$0xff]
    %v1806 = vld [vmem:[%s1 + $0xa80] sm:$0xff]
    %v1807 = vld [vmem:[%s1 + $0xa88] sm:$0xff]
    %v1808 = vld [vmem:[%s1 + $0xa90] sm:$0xff]
    %v1809 = vld [vmem:[%s1 + $0xa98] sm:$0xff]
    %v1810 = vld [vmem:[%s1 + $0xaa0] sm:$0xff]
    %v1811 = vld [vmem:[%s1 + $0xaa8] sm:$0xff]
    %v1812 = vld [vmem:[%s1 + $0xab0] sm:$0xff]
    %v1813 = vld [vmem:[%s1 + $0xab8] sm:$0xff]
    %v1814 = vld [vmem:[%s1 + $0xac0] sm:$0xff]
    %v1815 = vld [vmem:[%s1 + $0xac8] sm:$0xff]
    %v1816 = vld [vmem:[%s1 + $0xad0] sm:$0xff]
    %v1817 = vld [vmem:[%s1 + $0xad8] sm:$0xff]
    %v1818 = vld [vmem:[%s1 + $0xae0] sm:$0xff]
    %v1819 = vld [vmem:[%s1 + $0xae8] sm:$0xff]
    %v1820 = vld [vmem:[%s1 + $0xaf0] sm:$0xff]
    %v1821 = vld [vmem:[%s1 + $0xaf8] sm:$0xff]
    %v1822 = vld [vmem:[%s1 + $0xb00] sm:$0xff]
    %v1823 = vld [vmem:[%s1 + $0xb08] sm:$0xff]
    %v1824 = vld [vmem:[%s1 + $0xb10] sm:$0xff]
    %v1825 = vld [vmem:[%s1 + $0xb18] sm:$0xff]
    %v1826 = vld [vmem:[%s1 + $0xb20] sm:$0xff]
    %v1827 = vld [vmem:[%s1 + $0xb28] sm:$0xff]
    %v1828 = vld [vmem:[%s1 + $0xb30] sm:$0xff]
    %v1829 = vld [vmem:[%s1 + $0xb38] sm:$0xff]
    %v1830 = vld [vmem:[%s1 + $0xb40] sm:$0xff]
    %v1831 = vld [vmem:[%s1 + $0xb48] sm:$0xff]
    %v1832 = vld [vmem:[%s1 + $0xb50] sm:$0xff]
    %v1833 = vld [vmem:[%s1 + $0xb58] sm:$0xff]
    %v1834 = vld [vmem:[%s1 + $0xb60] sm:$0xff]
    %v1835 = vld [vmem:[%s1 + $0xb68] sm:$0xff]
    %v1836 = vld [vmem:[%s1 + $0xb70] sm:$0xff]
    %v1837 = vld [vmem:[%s1 + $0xb78] sm:$0xff]
    %v1838 = vld [vmem:[%s1 + $0xb80] sm:$0xff]
    %v1839 = vld [vmem:[%s1 + $0xb88] sm:$0xff]
    %v1840 = vld [vmem:[%s1 + $0xb90] sm:$0xff]
    %v1841 = vld [vmem:[%s1 + $0xb98] sm:$0xff]
    %v1842 = vld [vmem:[%s1 + $0xba0] sm:$0xff]
    %v1843 = vld [vmem:[%s1 + $0xba8] sm:$0xff]
    %v1844 = vld [vmem:[%s1 + $0xbb0] sm:$0xff]
    %v1845 = vld [vmem:[%s1 + $0xbb8] sm:$0xff]
    %v1846 = vld [vmem:[%s1 + $0xbc0] sm:$0xff]
    %v1847 = vld [vmem:[%s1 + $0xbc8] sm:$0xff]
    %v1848 = vld [vmem:[%s1 + $0xbd0] sm:$0xff]
    %v1849 = vld [vmem:[%s1 + $0xbd8] sm:$0xff]
    %v1850 = vld [vmem:[%s1 + $0xbe0] sm:$0xff]
    %v1851 = vld [vmem:[%s1 + $0xbe8] sm:$0xff]
    %v1852 = vld [vmem:[%s1 + $0xbf0] sm:$0xff]
    %v1853 = vld [vmem:[%s1 + $0xbf8] sm:$0xff]
    %v1854 = vld [vmem:[%s1 + $0xc00] sm:$0xff]
    %v1855 = vld [vmem:[%s1 + $0xc08] sm:$0xff]
    %v1856 = vld [vmem:[%s1 + $0xc10] sm:$0xff]
    %v1857 = vld [vmem:[%s1 + $0xc18] sm:$0xff]
    %v1858 = vld [vmem:[%s1 + $0xc20] sm:$0xff]
    %v1859 = vld [vmem:[%s1 + $0xc28] sm:$0xff]
    %v1860 = vld [vmem:[%s1 + $0xc30] sm:$0xff]
    %v1861 = vld [vmem:[%s1 + $0xc38] sm:$0xff]
    %v1862 = vld [vmem:[%s1 + $0xc40] sm:$0xff]
    %v1863 = vld [vmem:[%s1 + $0xc48] sm:$0xff]
    %v1864 = vld [vmem:[%s1 + $0xc50] sm:$0xff]
    %v1865 = vld [vmem:[%s1 + $0xc58] sm:$0xff]
    %v1866 = vld [vmem:[%s1 + $0xc60] sm:$0xff]
    %v1867 = vld [vmem:[%s1 + $0xc68] sm:$0xff]
    %v1868 = vld [vmem:[%s1 + $0xc70] sm:$0xff]
    %v1869 = vld [vmem:[%s1 + $0xc78] sm:$0xff]
    %v1870 = vld [vmem:[%s1 + $0xc80] sm:$0xff]
    %v1871 = vld [vmem:[%s1 + $0xc88] sm:$0xff]
    %v1872 = vld [vmem:[%s1 + $0xc90] sm:$0xff]
    %v1873 = vld [vmem:[%s1 + $0xc98] sm:$0xff]
    %v1874 = vld [vmem:[%s1 + $0xca0] sm:$0xff]
    %v1875 = vld [vmem:[%s1 + $0xca8] sm:$0xff]
    %v1876 = vld [vmem:[%s1 + $0xcb0] sm:$0xff]
    %v1877 = vld [vmem:[%s1 + $0xcb8] sm:$0xff]
    %v1878 = vld [vmem:[%s1 + $0xcc0] sm:$0xff]
    %v1879 = vld [vmem:[%s1 + $0xcc8] sm:$0xff]
    %v1880 = vld [vmem:[%s1 + $0xcd0] sm:$0xff]
    %v1881 = vld [vmem:[%s1 + $0xcd8] sm:$0xff]
    %v1882 = vld [vmem:[%s1 + $0xce0] sm:$0xff]
    %v1883 = vld [vmem:[%s1 + $0xce8] sm:$0xff]
    %v1884 = vld [vmem:[%s1 + $0xcf0] sm:$0xff]
    %v1885 = vld [vmem:[%s1 + $0xcf8] sm:$0xff]
    %v1886 = vld [vmem:[%s1 + $0xd00] sm:$0xff]
    %v1887 = vld [vmem:[%s1 + $0xd08] sm:$0xff]
    %v1888 = vld [vmem:[%s1 + $0xd10] sm:$0xff]
    %v1889 = vld [vmem:[%s1 + $0xd18] sm:$0xff]
    %v1890 = vld [vmem:[%s1 + $0xd20] sm:$0xff]
    %v1891 = vld [vmem:[%s1 + $0xd28] sm:$0xff]
    %v1892 = vld [vmem:[%s1 + $0xd30] sm:$0xff]
    %v1893 = vld [vmem:[%s1 + $0xd38] sm:$0xff]
    %v1894 = vld [vmem:[%s1 + $0xd40] sm:$0xff]
    %v1895 = vld [vmem:[%s1 + $0xd48] sm:$0xff]
    %v1896 = vld [vmem:[%s1 + $0xd50] sm:$0xff]
    %v1897 = vld [vmem:[%s1 + $0xd58] sm:$0xff]
    %v1898 = vld [vmem:[%s1 + $0xd60] sm:$0xff]
    %v1899 = vld [vmem:[%s1 + $0xd68] sm:$0xff]
    %v1900 = vld [vmem:[%s1 + $0xd70] sm:$0xff]
    %v1901 = vld [vmem:[%s1 + $0xd78] sm:$0xff]
    %v1902 = vld [vmem:[%s1 + $0xd80] sm:$0xff]
    %v1903 = vld [vmem:[%s1 + $0xd88] sm:$0xff]
    %v1904 = vld [vmem:[%s1 + $0xd90] sm:$0xff]
    %v1905 = vld [vmem:[%s1 + $0xd98] sm:$0xff]
    %v1906 = vld [vmem:[%s1 + $0xda0] sm:$0xff]
    %v1907 = vld [vmem:[%s1 + $0xda8] sm:$0xff]
    %v1908 = vld [vmem:[%s1 + $0xdb0] sm:$0xff]
    %v1909 = vld [vmem:[%s1 + $0xdb8] sm:$0xff]
    %v1910 = vld [vmem:[%s1 + $0xdc0] sm:$0xff]
    %v1911 = vld [vmem:[%s1 + $0xdc8] sm:$0xff]
    %v1912 = vld [vmem:[%s1 + $0xdd0] sm:$0xff]
    %v1913 = vld [vmem:[%s1 + $0xdd8] sm:$0xff]
    %v1914 = vld [vmem:[%s1 + $0xde0] sm:$0xff]
    %v1915 = vld [vmem:[%s1 + $0xde8] sm:$0xff]
    %v1916 = vld [vmem:[%s1 + $0xdf0] sm:$0xff]
    %v1917 = vld [vmem:[%s1 + $0xdf8] sm:$0xff]
    %v1918 = vld [vmem:[%s1 + $0xe00] sm:$0xff]
    %v1919 = vld [vmem:[%s1 + $0xe08] sm:$0xff]
    %v1920 = vld [vmem:[%s1 + $0xe10] sm:$0xff]
    %v1921 = vld [vmem:[%s1 + $0xe18] sm:$0xff]
    %v1922 = vld [vmem:[%s1 + $0xe20] sm:$0xff]
    %v1923 = vld [vmem:[%s1 + $0xe28] sm:$0xff]
    %v1924 = vld [vmem:[%s1 + $0xe30] sm:$0xff]
    %v1925 = vld [vmem:[%s1 + $0xe38] sm:$0xff]
    %v1926 = vld [vmem:[%s1 + $0xe40] sm:$0xff]
    %v1927 = vld [vmem:[%s1 + $0xe48] sm:$0xff]
    %v1928 = vld [vmem:[%s1 + $0xe50] sm:$0xff]
    %v1929 = vld [vmem:[%s1 + $0xe58] sm:$0xff]
    %v1930 = vld [vmem:[%s1 + $0xe60] sm:$0xff]
    %v1931 = vld [vmem:[%s1 + $0xe68] sm:$0xff]
    %v1932 = vld [vmem:[%s1 + $0xe70] sm:$0xff]
    %v1933 = vld [vmem:[%s1 + $0xe78] sm:$0xff]
    %v1934 = vld [vmem:[%s1 + $0xe80] sm:$0xff]
    %v1935 = vld [vmem:[%s1 + $0xe88] sm:$0xff]
    %v1936 = vld [vmem:[%s1 + $0xe90] sm:$0xff]
    %v1937 = vld [vmem:[%s1 + $0xe98] sm:$0xff]
    %v1938 = vld [vmem:[%s1 + $0xea0] sm:$0xff]
    %v1939 = vld [vmem:[%s1 + $0xea8] sm:$0xff]
    %v1940 = vld [vmem:[%s1 + $0xeb0] sm:$0xff]
    %v1941 = vld [vmem:[%s1 + $0xeb8] sm:$0xff]
    %v1942 = vld [vmem:[%s1 + $0xec0] sm:$0xff]
    %v1943 = vld [vmem:[%s1 + $0xec8] sm:$0xff]
    %v1944 = vld [vmem:[%s1 + $0xed0] sm:$0xff]
    %v1945 = vld [vmem:[%s1 + $0xed8] sm:$0xff]
    %v1946 = vld [vmem:[%s1 + $0xee0] sm:$0xff]
    %v1947 = vld [vmem:[%s1 + $0xee8] sm:$0xff]
    %v1948 = vld [vmem:[%s1 + $0xef0] sm:$0xff]
    %v1949 = vld [vmem:[%s1 + $0xef8] sm:$0xff]
    %v1950 = vpack.c.bf16 %v1610, %v1600
    %v1951 = vpack.c.bf16 %v1611, %v1601
    %v1952 = vpack.c.bf16 %v1612, %v1602
    %v1953 = vpack.c.bf16 %v1613, %v1603
    %v1954 = vpack.c.bf16 %v1614, %v1604
    %v1955 = vpack.c.bf16 %v1615, %v1605
    %v1956 = vpack.c.bf16 %v1616, %v1606
    %v1957 = vpack.c.bf16 %v1617, %v1607
    %v1958 = vpack.c.bf16 %v1618, %v1608
    %v1959 = vpack.c.bf16 %v1619, %v1609
    %v1960 = vpack.c.bf16 %v1620, %v1620
    %v1961 = vpack.c.bf16 %v1621, %v1621
    %v1962 = vpack.c.bf16 %v1622, %v1622
    %v1963 = vpack.c.bf16 %v1623, %v1623
    %v1964 = vpack.c.bf16 %v1624, %v1624
    %v1965 = vpack.c.bf16 %v1625, %v1625
    %v1966 = vpack.c.bf16 %v1626, %v1626
    %v1967 = vpack.c.bf16 %v1627, %v1627
    %v1968 = vpack.c.bf16 %v1628, %v1628
    %v1969 = vpack.c.bf16 %v1629, %v1629
    %s1970 = scalar_lea.vmem %s3, 1
    %v1971 = vld [vmem:[%s1970] ss:$4 sm:$0xf]
    %v1973 = vlaneseq
    %v1974 = vshrl.u32 %v1973, 7
    %v1975 = vsub.s32 0, %v1974
    %v1976 = vrot.slane %v1971, %v1975
    %v1977 = vlaneseq
    %v1978 = vshrl.u32 %v1977, 7
    %v1979 = vsub.s32 1, %v1978
    %v1980 = vrot.slane %v1971, %v1979
    %v1981 = vlaneseq
    %v1982 = vshrl.u32 %v1981, 7
    %v1983 = vsub.s32 2, %v1982
    %v1984 = vrot.slane %v1971, %v1983
    %v1985 = vlaneseq
    %v1986 = vshrl.u32 %v1985, 7
    %v1987 = vsub.s32 3, %v1986
    %v1988 = vrot.slane %v1971, %v1987
    %v2313 = vunpack.c.l.b16 %v1630
    %v2314 = vunpack.c.h.b16 %v1630
    %v2315 = vunpack.c.l.b16 %v1631
    %v2316 = vunpack.c.h.b16 %v1631
    %v2317 = vunpack.c.l.b16 %v1632
    %v2318 = vunpack.c.h.b16 %v1632
    %v2319 = vunpack.c.l.b16 %v1633
    %v2320 = vunpack.c.h.b16 %v1633
    %v2321 = vunpack.c.l.b16 %v1634
    %v2322 = vunpack.c.h.b16 %v1634
    %v2323 = vunpack.c.l.b16 %v1635
    %v2324 = vunpack.c.h.b16 %v1635
    %v2325 = vunpack.c.l.b16 %v1636
    %v2326 = vunpack.c.h.b16 %v1636
    %v2327 = vunpack.c.l.b16 %v1637
    %v2328 = vunpack.c.h.b16 %v1637
    %v2329 = vunpack.c.l.b16 %v1638
    %v2330 = vunpack.c.h.b16 %v1638
    %v2331 = vunpack.c.l.b16 %v1639
    %v2332 = vunpack.c.h.b16 %v1639
    %v2333 = vunpack.c.l.b16 %v1640
    %v2334 = vunpack.c.h.b16 %v1640
    %v2335 = vunpack.c.l.b16 %v1641
    %v2336 = vunpack.c.h.b16 %v1641
    %v2337 = vunpack.c.l.b16 %v1642
    %v2338 = vunpack.c.h.b16 %v1642
    %v2339 = vunpack.c.l.b16 %v1643
    %v2340 = vunpack.c.h.b16 %v1643
    %v2341 = vunpack.c.l.b16 %v1644
    %v2342 = vunpack.c.h.b16 %v1644
    %v2343 = vunpack.c.l.b16 %v1645
    %v2344 = vunpack.c.h.b16 %v1645
    %v2345 = vunpack.c.l.b16 %v1646
    %v2346 = vunpack.c.h.b16 %v1646
    %v2347 = vunpack.c.l.b16 %v1647
    %v2348 = vunpack.c.h.b16 %v1647
    %v2349 = vunpack.c.l.b16 %v1648
    %v2350 = vunpack.c.h.b16 %v1648
    %v2351 = vunpack.c.l.b16 %v1649
    %v2352 = vunpack.c.h.b16 %v1649
    %v2353 = vunpack.c.l.b16 %v1650
    %v2354 = vunpack.c.h.b16 %v1650
    %v2355 = vunpack.c.l.b16 %v1651
    %v2356 = vunpack.c.h.b16 %v1651
    %v2357 = vunpack.c.l.b16 %v1652
    %v2358 = vunpack.c.h.b16 %v1652
    %v2359 = vunpack.c.l.b16 %v1653
    %v2360 = vunpack.c.h.b16 %v1653
    %v2361 = vunpack.c.l.b16 %v1654
    %v2362 = vunpack.c.h.b16 %v1654
    %v2363 = vunpack.c.l.b16 %v1655
    %v2364 = vunpack.c.h.b16 %v1655
    %v2365 = vunpack.c.l.b16 %v1656
    %v2366 = vunpack.c.h.b16 %v1656
    %v2367 = vunpack.c.l.b16 %v1657
    %v2368 = vunpack.c.h.b16 %v1657
    %v2369 = vunpack.c.l.b16 %v1658
    %v2370 = vunpack.c.h.b16 %v1658
    %v2371 = vunpack.c.l.b16 %v1659
    %v2372 = vunpack.c.h.b16 %v1659
    %v2373 = vunpack.c.l.b16 %v1660
    %v2374 = vunpack.c.h.b16 %v1660
    %v2375 = vunpack.c.l.b16 %v1661
    %v2376 = vunpack.c.h.b16 %v1661
    %v2377 = vunpack.c.l.b16 %v1662
    %v2378 = vunpack.c.h.b16 %v1662
    %v2379 = vunpack.c.l.b16 %v1663
    %v2380 = vunpack.c.h.b16 %v1663
    %v2381 = vunpack.c.l.b16 %v1664
    %v2382 = vunpack.c.h.b16 %v1664
    %v2383 = vunpack.c.l.b16 %v1665
    %v2384 = vunpack.c.h.b16 %v1665
    %v2385 = vunpack.c.l.b16 %v1666
    %v2386 = vunpack.c.h.b16 %v1666
    %v2387 = vunpack.c.l.b16 %v1667
    %v2388 = vunpack.c.h.b16 %v1667
    %v2389 = vunpack.c.l.b16 %v1668
    %v2390 = vunpack.c.h.b16 %v1668
    %v2391 = vunpack.c.l.b16 %v1669
    %v2392 = vunpack.c.h.b16 %v1669
    %v2393 = vunpack.c.l.b16 %v1670
    %v2394 = vunpack.c.h.b16 %v1670
    %v2395 = vunpack.c.l.b16 %v1671
    %v2396 = vunpack.c.h.b16 %v1671
    %v2397 = vunpack.c.l.b16 %v1672
    %v2398 = vunpack.c.h.b16 %v1672
    %v2399 = vunpack.c.l.b16 %v1673
    %v2400 = vunpack.c.h.b16 %v1673
    %v2401 = vunpack.c.l.b16 %v1674
    %v2402 = vunpack.c.h.b16 %v1674
    %v2403 = vunpack.c.l.b16 %v1675
    %v2404 = vunpack.c.h.b16 %v1675
    %v2405 = vunpack.c.l.b16 %v1676
    %v2406 = vunpack.c.h.b16 %v1676
    %v2407 = vunpack.c.l.b16 %v1677
    %v2408 = vunpack.c.h.b16 %v1677
    %v2409 = vunpack.c.l.b16 %v1678
    %v2410 = vunpack.c.h.b16 %v1678
    %v2411 = vunpack.c.l.b16 %v1679
    %v2412 = vunpack.c.h.b16 %v1679
    %v2413 = vunpack.c.l.b16 %v1680
    %v2414 = vunpack.c.h.b16 %v1680
    %v2415 = vunpack.c.l.b16 %v1681
    %v2416 = vunpack.c.h.b16 %v1681
    %v2417 = vunpack.c.l.b16 %v1682
    %v2418 = vunpack.c.h.b16 %v1682
    %v2419 = vunpack.c.l.b16 %v1683
    %v2420 = vunpack.c.h.b16 %v1683
    %v2421 = vunpack.c.l.b16 %v1684
    %v2422 = vunpack.c.h.b16 %v1684
    %v2423 = vunpack.c.l.b16 %v1685
    %v2424 = vunpack.c.h.b16 %v1685
    %v2425 = vunpack.c.l.b16 %v1686
    %v2426 = vunpack.c.h.b16 %v1686
    %v2427 = vunpack.c.l.b16 %v1687
    %v2428 = vunpack.c.h.b16 %v1687
    %v2429 = vunpack.c.l.b16 %v1688
    %v2430 = vunpack.c.h.b16 %v1688
    %v2431 = vunpack.c.l.b16 %v1689
    %v2432 = vunpack.c.h.b16 %v1689
    %v2433 = vunpack.c.l.b16 %v1690
    %v2434 = vunpack.c.h.b16 %v1690
    %v2435 = vunpack.c.l.b16 %v1691
    %v2436 = vunpack.c.h.b16 %v1691
    %v2437 = vunpack.c.l.b16 %v1692
    %v2438 = vunpack.c.h.b16 %v1692
    %v2439 = vunpack.c.l.b16 %v1693
    %v2440 = vunpack.c.h.b16 %v1693
    %v2441 = vunpack.c.l.b16 %v1694
    %v2442 = vunpack.c.h.b16 %v1694
    %v2443 = vunpack.c.l.b16 %v1695
    %v2444 = vunpack.c.h.b16 %v1695
    %v2445 = vunpack.c.l.b16 %v1696
    %v2446 = vunpack.c.h.b16 %v1696
    %v2447 = vunpack.c.l.b16 %v1697
    %v2448 = vunpack.c.h.b16 %v1697
    %v2449 = vunpack.c.l.b16 %v1698
    %v2450 = vunpack.c.h.b16 %v1698
    %v2451 = vunpack.c.l.b16 %v1699
    %v2452 = vunpack.c.h.b16 %v1699
    %v2453 = vunpack.c.l.b16 %v1700
    %v2454 = vunpack.c.h.b16 %v1700
    %v2455 = vunpack.c.l.b16 %v1701
    %v2456 = vunpack.c.h.b16 %v1701
    %v2457 = vunpack.c.l.b16 %v1702
    %v2458 = vunpack.c.h.b16 %v1702
    %v2459 = vunpack.c.l.b16 %v1703
    %v2460 = vunpack.c.h.b16 %v1703
    %v2461 = vunpack.c.l.b16 %v1704
    %v2462 = vunpack.c.h.b16 %v1704
    %v2463 = vunpack.c.l.b16 %v1705
    %v2464 = vunpack.c.h.b16 %v1705
    %v2465 = vunpack.c.l.b16 %v1706
    %v2466 = vunpack.c.h.b16 %v1706
    %v2467 = vunpack.c.l.b16 %v1707
    %v2468 = vunpack.c.h.b16 %v1707
    %v2469 = vunpack.c.l.b16 %v1708
    %v2470 = vunpack.c.h.b16 %v1708
    %v2471 = vunpack.c.l.b16 %v1709
    %v2472 = vunpack.c.h.b16 %v1709
    %v2473 = vunpack.c.l.b16 %v1710
    %v2474 = vunpack.c.h.b16 %v1710
    %v2475 = vunpack.c.l.b16 %v1711
    %v2476 = vunpack.c.h.b16 %v1711
    %v2477 = vunpack.c.l.b16 %v1712
    %v2478 = vunpack.c.h.b16 %v1712
    %v2479 = vunpack.c.l.b16 %v1713
    %v2480 = vunpack.c.h.b16 %v1713
    %v2481 = vunpack.c.l.b16 %v1714
    %v2482 = vunpack.c.h.b16 %v1714
    %v2483 = vunpack.c.l.b16 %v1715
    %v2484 = vunpack.c.h.b16 %v1715
    %v2485 = vunpack.c.l.b16 %v1716
    %v2486 = vunpack.c.h.b16 %v1716
    %v2487 = vunpack.c.l.b16 %v1717
    %v2488 = vunpack.c.h.b16 %v1717
    %v2489 = vunpack.c.l.b16 %v1718
    %v2490 = vunpack.c.h.b16 %v1718
    %v2491 = vunpack.c.l.b16 %v1719
    %v2492 = vunpack.c.h.b16 %v1719
    %v2493 = vunpack.c.l.b16 %v1720
    %v2494 = vunpack.c.h.b16 %v1720
    %v2495 = vunpack.c.l.b16 %v1721
    %v2496 = vunpack.c.h.b16 %v1721
    %v2497 = vunpack.c.l.b16 %v1722
    %v2498 = vunpack.c.h.b16 %v1722
    %v2499 = vunpack.c.l.b16 %v1723
    %v2500 = vunpack.c.h.b16 %v1723
    %v2501 = vunpack.c.l.b16 %v1724
    %v2502 = vunpack.c.h.b16 %v1724
    %v2503 = vunpack.c.l.b16 %v1725
    %v2504 = vunpack.c.h.b16 %v1725
    %v2505 = vunpack.c.l.b16 %v1726
    %v2506 = vunpack.c.h.b16 %v1726
    %v2507 = vunpack.c.l.b16 %v1727
    %v2508 = vunpack.c.h.b16 %v1727
    %v2509 = vunpack.c.l.b16 %v1728
    %v2510 = vunpack.c.h.b16 %v1728
    %v2511 = vunpack.c.l.b16 %v1729
    %v2512 = vunpack.c.h.b16 %v1729
    %v2513 = vunpack.c.l.b16 %v1730
    %v2514 = vunpack.c.h.b16 %v1730
    %v2515 = vunpack.c.l.b16 %v1731
    %v2516 = vunpack.c.h.b16 %v1731
    %v2517 = vunpack.c.l.b16 %v1732
    %v2518 = vunpack.c.h.b16 %v1732
    %v2519 = vunpack.c.l.b16 %v1733
    %v2520 = vunpack.c.h.b16 %v1733
    %v2521 = vunpack.c.l.b16 %v1734
    %v2522 = vunpack.c.h.b16 %v1734
    %v2523 = vunpack.c.l.b16 %v1735
    %v2524 = vunpack.c.h.b16 %v1735
    %v2525 = vunpack.c.l.b16 %v1736
    %v2526 = vunpack.c.h.b16 %v1736
    %v2527 = vunpack.c.l.b16 %v1737
    %v2528 = vunpack.c.h.b16 %v1737
    %v2529 = vunpack.c.l.b16 %v1738
    %v2530 = vunpack.c.h.b16 %v1738
    %v2531 = vunpack.c.l.b16 %v1739
    %v2532 = vunpack.c.h.b16 %v1739
    %v2533 = vunpack.c.l.b16 %v1740
    %v2534 = vunpack.c.h.b16 %v1740
    %v2535 = vunpack.c.l.b16 %v1741
    %v2536 = vunpack.c.h.b16 %v1741
    %v2537 = vunpack.c.l.b16 %v1742
    %v2538 = vunpack.c.h.b16 %v1742
    %v2539 = vunpack.c.l.b16 %v1743
    %v2540 = vunpack.c.h.b16 %v1743
    %v2541 = vunpack.c.l.b16 %v1744
    %v2542 = vunpack.c.h.b16 %v1744
    %v2543 = vunpack.c.l.b16 %v1745
    %v2544 = vunpack.c.h.b16 %v1745
    %v2545 = vunpack.c.l.b16 %v1746
    %v2546 = vunpack.c.h.b16 %v1746
    %v2547 = vunpack.c.l.b16 %v1747
    %v2548 = vunpack.c.h.b16 %v1747
    %v2549 = vunpack.c.l.b16 %v1748
    %v2550 = vunpack.c.h.b16 %v1748
    %v2551 = vunpack.c.l.b16 %v1749
    %v2552 = vunpack.c.h.b16 %v1749
    %v2553 = vunpack.c.l.b16 %v1750
    %v2554 = vunpack.c.h.b16 %v1750
    %v2555 = vunpack.c.l.b16 %v1751
    %v2556 = vunpack.c.h.b16 %v1751
    %v2557 = vunpack.c.l.b16 %v1752
    %v2558 = vunpack.c.h.b16 %v1752
    %v2559 = vunpack.c.l.b16 %v1753
    %v2560 = vunpack.c.h.b16 %v1753
    %v2561 = vunpack.c.l.b16 %v1754
    %v2562 = vunpack.c.h.b16 %v1754
    %v2563 = vunpack.c.l.b16 %v1755
    %v2564 = vunpack.c.h.b16 %v1755
    %v2565 = vunpack.c.l.b16 %v1756
    %v2566 = vunpack.c.h.b16 %v1756
    %v2567 = vunpack.c.l.b16 %v1757
    %v2568 = vunpack.c.h.b16 %v1757
    %v2569 = vunpack.c.l.b16 %v1758
    %v2570 = vunpack.c.h.b16 %v1758
    %v2571 = vunpack.c.l.b16 %v1759
    %v2572 = vunpack.c.h.b16 %v1759
    %v2573 = vunpack.c.l.b16 %v1760
    %v2574 = vunpack.c.h.b16 %v1760
    %v2575 = vunpack.c.l.b16 %v1761
    %v2576 = vunpack.c.h.b16 %v1761
    %v2577 = vunpack.c.l.b16 %v1762
    %v2578 = vunpack.c.h.b16 %v1762
    %v2579 = vunpack.c.l.b16 %v1763
    %v2580 = vunpack.c.h.b16 %v1763
    %v2581 = vunpack.c.l.b16 %v1764
    %v2582 = vunpack.c.h.b16 %v1764
    %v2583 = vunpack.c.l.b16 %v1765
    %v2584 = vunpack.c.h.b16 %v1765
    %v2585 = vunpack.c.l.b16 %v1766
    %v2586 = vunpack.c.h.b16 %v1766
    %v2587 = vunpack.c.l.b16 %v1767
    %v2588 = vunpack.c.h.b16 %v1767
    %v2589 = vunpack.c.l.b16 %v1768
    %v2590 = vunpack.c.h.b16 %v1768
    %v2591 = vunpack.c.l.b16 %v1769
    %v2592 = vunpack.c.h.b16 %v1769
    %v2593 = vunpack.c.l.b16 %v1770
    %v2594 = vunpack.c.h.b16 %v1770
    %v2595 = vunpack.c.l.b16 %v1771
    %v2596 = vunpack.c.h.b16 %v1771
    %v2597 = vunpack.c.l.b16 %v1772
    %v2598 = vunpack.c.h.b16 %v1772
    %v2599 = vunpack.c.l.b16 %v1773
    %v2600 = vunpack.c.h.b16 %v1773
    %v2601 = vunpack.c.l.b16 %v1774
    %v2602 = vunpack.c.h.b16 %v1774
    %v2603 = vunpack.c.l.b16 %v1775
    %v2604 = vunpack.c.h.b16 %v1775
    %v2605 = vunpack.c.l.b16 %v1776
    %v2606 = vunpack.c.h.b16 %v1776
    %v2607 = vunpack.c.l.b16 %v1777
    %v2608 = vunpack.c.h.b16 %v1777
    %v2609 = vunpack.c.l.b16 %v1778
    %v2610 = vunpack.c.h.b16 %v1778
    %v2611 = vunpack.c.l.b16 %v1779
    %v2612 = vunpack.c.h.b16 %v1779
    %v2613 = vunpack.c.l.b16 %v1780
    %v2614 = vunpack.c.h.b16 %v1780
    %v2615 = vunpack.c.l.b16 %v1781
    %v2616 = vunpack.c.h.b16 %v1781
    %v2617 = vunpack.c.l.b16 %v1782
    %v2618 = vunpack.c.h.b16 %v1782
    %v2619 = vunpack.c.l.b16 %v1783
    %v2620 = vunpack.c.h.b16 %v1783
    %v2621 = vunpack.c.l.b16 %v1784
    %v2622 = vunpack.c.h.b16 %v1784
    %v2623 = vunpack.c.l.b16 %v1785
    %v2624 = vunpack.c.h.b16 %v1785
    %v2625 = vunpack.c.l.b16 %v1786
    %v2626 = vunpack.c.h.b16 %v1786
    %v2627 = vunpack.c.l.b16 %v1787
    %v2628 = vunpack.c.h.b16 %v1787
    %v2629 = vunpack.c.l.b16 %v1788
    %v2630 = vunpack.c.h.b16 %v1788
    %v2631 = vunpack.c.l.b16 %v1789
    %v2632 = vunpack.c.h.b16 %v1789
    %v2633 = vunpack.c.l.b16 %v1790
    %v2634 = vunpack.c.h.b16 %v1790
    %v2635 = vunpack.c.l.b16 %v1791
    %v2636 = vunpack.c.h.b16 %v1791
    %v2637 = vunpack.c.l.b16 %v1792
    %v2638 = vunpack.c.h.b16 %v1792
    %v2639 = vunpack.c.l.b16 %v1793
    %v2640 = vunpack.c.h.b16 %v1793
    %v2641 = vunpack.c.l.b16 %v1794
    %v2642 = vunpack.c.h.b16 %v1794
    %v2643 = vunpack.c.l.b16 %v1795
    %v2644 = vunpack.c.h.b16 %v1795
    %v2645 = vunpack.c.l.b16 %v1796
    %v2646 = vunpack.c.h.b16 %v1796
    %v2647 = vunpack.c.l.b16 %v1797
    %v2648 = vunpack.c.h.b16 %v1797
    %v2649 = vunpack.c.l.b16 %v1798
    %v2650 = vunpack.c.h.b16 %v1798
    %v2651 = vunpack.c.l.b16 %v1799
    %v2652 = vunpack.c.h.b16 %v1799
    %v2653 = vunpack.c.l.b16 %v1800
    %v2654 = vunpack.c.h.b16 %v1800
    %v2655 = vunpack.c.l.b16 %v1801
    %v2656 = vunpack.c.h.b16 %v1801
    %v2657 = vunpack.c.l.b16 %v1802
    %v2658 = vunpack.c.h.b16 %v1802
    %v2659 = vunpack.c.l.b16 %v1803
    %v2660 = vunpack.c.h.b16 %v1803
    %v2661 = vunpack.c.l.b16 %v1804
    %v2662 = vunpack.c.h.b16 %v1804
    %v2663 = vunpack.c.l.b16 %v1805
    %v2664 = vunpack.c.h.b16 %v1805
    %v2665 = vunpack.c.l.b16 %v1806
    %v2666 = vunpack.c.h.b16 %v1806
    %v2667 = vunpack.c.l.b16 %v1807
    %v2668 = vunpack.c.h.b16 %v1807
    %v2669 = vunpack.c.l.b16 %v1808
    %v2670 = vunpack.c.h.b16 %v1808
    %v2671 = vunpack.c.l.b16 %v1809
    %v2672 = vunpack.c.h.b16 %v1809
    %v2673 = vunpack.c.l.b16 %v1810
    %v2674 = vunpack.c.h.b16 %v1810
    %v2675 = vunpack.c.l.b16 %v1811
    %v2676 = vunpack.c.h.b16 %v1811
    %v2677 = vunpack.c.l.b16 %v1812
    %v2678 = vunpack.c.h.b16 %v1812
    %v2679 = vunpack.c.l.b16 %v1813
    %v2680 = vunpack.c.h.b16 %v1813
    %v2681 = vunpack.c.l.b16 %v1814
    %v2682 = vunpack.c.h.b16 %v1814
    %v2683 = vunpack.c.l.b16 %v1815
    %v2684 = vunpack.c.h.b16 %v1815
    %v2685 = vunpack.c.l.b16 %v1816
    %v2686 = vunpack.c.h.b16 %v1816
    %v2687 = vunpack.c.l.b16 %v1817
    %v2688 = vunpack.c.h.b16 %v1817
    %v2689 = vunpack.c.l.b16 %v1818
    %v2690 = vunpack.c.h.b16 %v1818
    %v2691 = vunpack.c.l.b16 %v1819
    %v2692 = vunpack.c.h.b16 %v1819
    %v2693 = vunpack.c.l.b16 %v1820
    %v2694 = vunpack.c.h.b16 %v1820
    %v2695 = vunpack.c.l.b16 %v1821
    %v2696 = vunpack.c.h.b16 %v1821
    %v2697 = vunpack.c.l.b16 %v1822
    %v2698 = vunpack.c.h.b16 %v1822
    %v2699 = vunpack.c.l.b16 %v1823
    %v2700 = vunpack.c.h.b16 %v1823
    %v2701 = vunpack.c.l.b16 %v1824
    %v2702 = vunpack.c.h.b16 %v1824
    %v2703 = vunpack.c.l.b16 %v1825
    %v2704 = vunpack.c.h.b16 %v1825
    %v2705 = vunpack.c.l.b16 %v1826
    %v2706 = vunpack.c.h.b16 %v1826
    %v2707 = vunpack.c.l.b16 %v1827
    %v2708 = vunpack.c.h.b16 %v1827
    %v2709 = vunpack.c.l.b16 %v1828
    %v2710 = vunpack.c.h.b16 %v1828
    %v2711 = vunpack.c.l.b16 %v1829
    %v2712 = vunpack.c.h.b16 %v1829
    %v2713 = vunpack.c.l.b16 %v1830
    %v2714 = vunpack.c.h.b16 %v1830
    %v2715 = vunpack.c.l.b16 %v1831
    %v2716 = vunpack.c.h.b16 %v1831
    %v2717 = vunpack.c.l.b16 %v1832
    %v2718 = vunpack.c.h.b16 %v1832
    %v2719 = vunpack.c.l.b16 %v1833
    %v2720 = vunpack.c.h.b16 %v1833
    %v2721 = vunpack.c.l.b16 %v1834
    %v2722 = vunpack.c.h.b16 %v1834
    %v2723 = vunpack.c.l.b16 %v1835
    %v2724 = vunpack.c.h.b16 %v1835
    %v2725 = vunpack.c.l.b16 %v1836
    %v2726 = vunpack.c.h.b16 %v1836
    %v2727 = vunpack.c.l.b16 %v1837
    %v2728 = vunpack.c.h.b16 %v1837
    %v2729 = vunpack.c.l.b16 %v1838
    %v2730 = vunpack.c.h.b16 %v1838
    %v2731 = vunpack.c.l.b16 %v1839
    %v2732 = vunpack.c.h.b16 %v1839
    %v2733 = vunpack.c.l.b16 %v1840
    %v2734 = vunpack.c.h.b16 %v1840
    %v2735 = vunpack.c.l.b16 %v1841
    %v2736 = vunpack.c.h.b16 %v1841
    %v2737 = vunpack.c.l.b16 %v1842
    %v2738 = vunpack.c.h.b16 %v1842
    %v2739 = vunpack.c.l.b16 %v1843
    %v2740 = vunpack.c.h.b16 %v1843
    %v2741 = vunpack.c.l.b16 %v1844
    %v2742 = vunpack.c.h.b16 %v1844
    %v2743 = vunpack.c.l.b16 %v1845
    %v2744 = vunpack.c.h.b16 %v1845
    %v2745 = vunpack.c.l.b16 %v1846
    %v2746 = vunpack.c.h.b16 %v1846
    %v2747 = vunpack.c.l.b16 %v1847
    %v2748 = vunpack.c.h.b16 %v1847
    %v2749 = vunpack.c.l.b16 %v1848
    %v2750 = vunpack.c.h.b16 %v1848
    %v2751 = vunpack.c.l.b16 %v1849
    %v2752 = vunpack.c.h.b16 %v1849
    %v2753 = vunpack.c.l.b16 %v1850
    %v2754 = vunpack.c.h.b16 %v1850
    %v2755 = vunpack.c.l.b16 %v1851
    %v2756 = vunpack.c.h.b16 %v1851
    %v2757 = vunpack.c.l.b16 %v1852
    %v2758 = vunpack.c.h.b16 %v1852
    %v2759 = vunpack.c.l.b16 %v1853
    %v2760 = vunpack.c.h.b16 %v1853
    %v2761 = vunpack.c.l.b16 %v1854
    %v2762 = vunpack.c.h.b16 %v1854
    %v2763 = vunpack.c.l.b16 %v1855
    %v2764 = vunpack.c.h.b16 %v1855
    %v2765 = vunpack.c.l.b16 %v1856
    %v2766 = vunpack.c.h.b16 %v1856
    %v2767 = vunpack.c.l.b16 %v1857
    %v2768 = vunpack.c.h.b16 %v1857
    %v2769 = vunpack.c.l.b16 %v1858
    %v2770 = vunpack.c.h.b16 %v1858
    %v2771 = vunpack.c.l.b16 %v1859
    %v2772 = vunpack.c.h.b16 %v1859
    %v2773 = vunpack.c.l.b16 %v1860
    %v2774 = vunpack.c.h.b16 %v1860
    %v2775 = vunpack.c.l.b16 %v1861
    %v2776 = vunpack.c.h.b16 %v1861
    %v2777 = vunpack.c.l.b16 %v1862
    %v2778 = vunpack.c.h.b16 %v1862
    %v2779 = vunpack.c.l.b16 %v1863
    %v2780 = vunpack.c.h.b16 %v1863
    %v2781 = vunpack.c.l.b16 %v1864
    %v2782 = vunpack.c.h.b16 %v1864
    %v2783 = vunpack.c.l.b16 %v1865
    %v2784 = vunpack.c.h.b16 %v1865
    %v2785 = vunpack.c.l.b16 %v1866
    %v2786 = vunpack.c.h.b16 %v1866
    %v2787 = vunpack.c.l.b16 %v1867
    %v2788 = vunpack.c.h.b16 %v1867
    %v2789 = vunpack.c.l.b16 %v1868
    %v2790 = vunpack.c.h.b16 %v1868
    %v2791 = vunpack.c.l.b16 %v1869
    %v2792 = vunpack.c.h.b16 %v1869
    %v2793 = vunpack.c.l.b16 %v1870
    %v2794 = vunpack.c.h.b16 %v1870
    %v2795 = vunpack.c.l.b16 %v1871
    %v2796 = vunpack.c.h.b16 %v1871
    %v2797 = vunpack.c.l.b16 %v1872
    %v2798 = vunpack.c.h.b16 %v1872
    %v2799 = vunpack.c.l.b16 %v1873
    %v2800 = vunpack.c.h.b16 %v1873
    %v2801 = vunpack.c.l.b16 %v1874
    %v2802 = vunpack.c.h.b16 %v1874
    %v2803 = vunpack.c.l.b16 %v1875
    %v2804 = vunpack.c.h.b16 %v1875
    %v2805 = vunpack.c.l.b16 %v1876
    %v2806 = vunpack.c.h.b16 %v1876
    %v2807 = vunpack.c.l.b16 %v1877
    %v2808 = vunpack.c.h.b16 %v1877
    %v2809 = vunpack.c.l.b16 %v1878
    %v2810 = vunpack.c.h.b16 %v1878
    %v2811 = vunpack.c.l.b16 %v1879
    %v2812 = vunpack.c.h.b16 %v1879
    %v2813 = vunpack.c.l.b16 %v1880
    %v2814 = vunpack.c.h.b16 %v1880
    %v2815 = vunpack.c.l.b16 %v1881
    %v2816 = vunpack.c.h.b16 %v1881
    %v2817 = vunpack.c.l.b16 %v1882
    %v2818 = vunpack.c.h.b16 %v1882
    %v2819 = vunpack.c.l.b16 %v1883
    %v2820 = vunpack.c.h.b16 %v1883
    %v2821 = vunpack.c.l.b16 %v1884
    %v2822 = vunpack.c.h.b16 %v1884
    %v2823 = vunpack.c.l.b16 %v1885
    %v2824 = vunpack.c.h.b16 %v1885
    %v2825 = vunpack.c.l.b16 %v1886
    %v2826 = vunpack.c.h.b16 %v1886
    %v2827 = vunpack.c.l.b16 %v1887
    %v2828 = vunpack.c.h.b16 %v1887
    %v2829 = vunpack.c.l.b16 %v1888
    %v2830 = vunpack.c.h.b16 %v1888
    %v2831 = vunpack.c.l.b16 %v1889
    %v2832 = vunpack.c.h.b16 %v1889
    %v2833 = vunpack.c.l.b16 %v1890
    %v2834 = vunpack.c.h.b16 %v1890
    %v2835 = vunpack.c.l.b16 %v1891
    %v2836 = vunpack.c.h.b16 %v1891
    %v2837 = vunpack.c.l.b16 %v1892
    %v2838 = vunpack.c.h.b16 %v1892
    %v2839 = vunpack.c.l.b16 %v1893
    %v2840 = vunpack.c.h.b16 %v1893
    %v2841 = vunpack.c.l.b16 %v1894
    %v2842 = vunpack.c.h.b16 %v1894
    %v2843 = vunpack.c.l.b16 %v1895
    %v2844 = vunpack.c.h.b16 %v1895
    %v2845 = vunpack.c.l.b16 %v1896
    %v2846 = vunpack.c.h.b16 %v1896
    %v2847 = vunpack.c.l.b16 %v1897
    %v2848 = vunpack.c.h.b16 %v1897
    %v2849 = vunpack.c.l.b16 %v1898
    %v2850 = vunpack.c.h.b16 %v1898
    %v2851 = vunpack.c.l.b16 %v1899
    %v2852 = vunpack.c.h.b16 %v1899
    %v2853 = vunpack.c.l.b16 %v1900
    %v2854 = vunpack.c.h.b16 %v1900
    %v2855 = vunpack.c.l.b16 %v1901
    %v2856 = vunpack.c.h.b16 %v1901
    %v2857 = vunpack.c.l.b16 %v1902
    %v2858 = vunpack.c.h.b16 %v1902
    %v2859 = vunpack.c.l.b16 %v1903
    %v2860 = vunpack.c.h.b16 %v1903
    %v2861 = vunpack.c.l.b16 %v1904
    %v2862 = vunpack.c.h.b16 %v1904
    %v2863 = vunpack.c.l.b16 %v1905
    %v2864 = vunpack.c.h.b16 %v1905
    %v2865 = vunpack.c.l.b16 %v1906
    %v2866 = vunpack.c.h.b16 %v1906
    %v2867 = vunpack.c.l.b16 %v1907
    %v2868 = vunpack.c.h.b16 %v1907
    %v2869 = vunpack.c.l.b16 %v1908
    %v2870 = vunpack.c.h.b16 %v1908
    %v2871 = vunpack.c.l.b16 %v1909
    %v2872 = vunpack.c.h.b16 %v1909
    %v2873 = vunpack.c.l.b16 %v1910
    %v2874 = vunpack.c.h.b16 %v1910
    %v2875 = vunpack.c.l.b16 %v1911
    %v2876 = vunpack.c.h.b16 %v1911
    %v2877 = vunpack.c.l.b16 %v1912
    %v2878 = vunpack.c.h.b16 %v1912
    %v2879 = vunpack.c.l.b16 %v1913
    %v2880 = vunpack.c.h.b16 %v1913
    %v2881 = vunpack.c.l.b16 %v1914
    %v2882 = vunpack.c.h.b16 %v1914
    %v2883 = vunpack.c.l.b16 %v1915
    %v2884 = vunpack.c.h.b16 %v1915
    %v2885 = vunpack.c.l.b16 %v1916
    %v2886 = vunpack.c.h.b16 %v1916
    %v2887 = vunpack.c.l.b16 %v1917
    %v2888 = vunpack.c.h.b16 %v1917
    %v2889 = vunpack.c.l.b16 %v1918
    %v2890 = vunpack.c.h.b16 %v1918
    %v2891 = vunpack.c.l.b16 %v1919
    %v2892 = vunpack.c.h.b16 %v1919
    %v2893 = vunpack.c.l.b16 %v1920
    %v2894 = vunpack.c.h.b16 %v1920
    %v2895 = vunpack.c.l.b16 %v1921
    %v2896 = vunpack.c.h.b16 %v1921
    %v2897 = vunpack.c.l.b16 %v1922
    %v2898 = vunpack.c.h.b16 %v1922
    %v2899 = vunpack.c.l.b16 %v1923
    %v2900 = vunpack.c.h.b16 %v1923
    %v2901 = vunpack.c.l.b16 %v1924
    %v2902 = vunpack.c.h.b16 %v1924
    %v2903 = vunpack.c.l.b16 %v1925
    %v2904 = vunpack.c.h.b16 %v1925
    %v2905 = vunpack.c.l.b16 %v1926
    %v2906 = vunpack.c.h.b16 %v1926
    %v2907 = vunpack.c.l.b16 %v1927
    %v2908 = vunpack.c.h.b16 %v1927
    %v2909 = vunpack.c.l.b16 %v1928
    %v2910 = vunpack.c.h.b16 %v1928
    %v2911 = vunpack.c.l.b16 %v1929
    %v2912 = vunpack.c.h.b16 %v1929
    %v2913 = vunpack.c.l.b16 %v1930
    %v2914 = vunpack.c.h.b16 %v1930
    %v2915 = vunpack.c.l.b16 %v1931
    %v2916 = vunpack.c.h.b16 %v1931
    %v2917 = vunpack.c.l.b16 %v1932
    %v2918 = vunpack.c.h.b16 %v1932
    %v2919 = vunpack.c.l.b16 %v1933
    %v2920 = vunpack.c.h.b16 %v1933
    %v2921 = vunpack.c.l.b16 %v1934
    %v2922 = vunpack.c.h.b16 %v1934
    %v2923 = vunpack.c.l.b16 %v1935
    %v2924 = vunpack.c.h.b16 %v1935
    %v2925 = vunpack.c.l.b16 %v1936
    %v2926 = vunpack.c.h.b16 %v1936
    %v2927 = vunpack.c.l.b16 %v1937
    %v2928 = vunpack.c.h.b16 %v1937
    %v2929 = vunpack.c.l.b16 %v1938
    %v2930 = vunpack.c.h.b16 %v1938
    %v2931 = vunpack.c.l.b16 %v1939
    %v2932 = vunpack.c.h.b16 %v1939
    %v2933 = vunpack.c.l.b16 %v1940
    %v2934 = vunpack.c.h.b16 %v1940
    %v2935 = vunpack.c.l.b16 %v1941
    %v2936 = vunpack.c.h.b16 %v1941
    %v2937 = vunpack.c.l.b16 %v1942
    %v2938 = vunpack.c.h.b16 %v1942
    %v2939 = vunpack.c.l.b16 %v1943
    %v2940 = vunpack.c.h.b16 %v1943
    %v2941 = vunpack.c.l.b16 %v1944
    %v2942 = vunpack.c.h.b16 %v1944
    %v2943 = vunpack.c.l.b16 %v1945
    %v2944 = vunpack.c.h.b16 %v1945
    %v2945 = vunpack.c.l.b16 %v1946
    %v2946 = vunpack.c.h.b16 %v1946
    %v2947 = vunpack.c.l.b16 %v1947
    %v2948 = vunpack.c.h.b16 %v1947
    %v2949 = vunpack.c.l.b16 %v1948
    %v2950 = vunpack.c.h.b16 %v1948
    %v2951 = vunpack.c.l.b16 %v1949
    %v2952 = vunpack.c.h.b16 %v1949
    %v2953 = vpack.c.b16 %v2317, %v2313
    %v2954 = vpack.c.b16 %v2318, %v2314
    %v2955 = vpack.c.b16 %v2319, %v2315
    %v2956 = vpack.c.b16 %v2320, %v2316
    %v2957 = vpack.c.b16 %v2325, %v2321
    %v2958 = vpack.c.b16 %v2326, %v2322
    %v2959 = vpack.c.b16 %v2327, %v2323
    %v2960 = vpack.c.b16 %v2328, %v2324
    %v2961 = vpack.c.b16 %v2333, %v2329
    %v2962 = vpack.c.b16 %v2334, %v2330
    %v2963 = vpack.c.b16 %v2335, %v2331
    %v2964 = vpack.c.b16 %v2336, %v2332
    %v2965 = vpack.c.b16 %v2341, %v2337
    %v2966 = vpack.c.b16 %v2342, %v2338
    %v2967 = vpack.c.b16 %v2343, %v2339
    %v2968 = vpack.c.b16 %v2344, %v2340
    %v2969 = vpack.c.b16 %v2349, %v2345
    %v2970 = vpack.c.b16 %v2350, %v2346
    %v2971 = vpack.c.b16 %v2351, %v2347
    %v2972 = vpack.c.b16 %v2352, %v2348
    %v2973 = vpack.c.b16 %v2357, %v2353
    %v2974 = vpack.c.b16 %v2358, %v2354
    %v2975 = vpack.c.b16 %v2359, %v2355
    %v2976 = vpack.c.b16 %v2360, %v2356
    %v2977 = vpack.c.b16 %v2365, %v2361
    %v2978 = vpack.c.b16 %v2366, %v2362
    %v2979 = vpack.c.b16 %v2367, %v2363
    %v2980 = vpack.c.b16 %v2368, %v2364
    %v2981 = vpack.c.b16 %v2373, %v2369
    %v2982 = vpack.c.b16 %v2374, %v2370
    %v2983 = vpack.c.b16 %v2375, %v2371
    %v2984 = vpack.c.b16 %v2376, %v2372
    %v2985 = vpack.c.b16 %v2381, %v2377
    %v2986 = vpack.c.b16 %v2382, %v2378
    %v2987 = vpack.c.b16 %v2383, %v2379
    %v2988 = vpack.c.b16 %v2384, %v2380
    %v2989 = vpack.c.b16 %v2389, %v2385
    %v2990 = vpack.c.b16 %v2390, %v2386
    %v2991 = vpack.c.b16 %v2391, %v2387
    %v2992 = vpack.c.b16 %v2392, %v2388
    %v2993 = vpack.c.b16 %v2397, %v2393
    %v2994 = vpack.c.b16 %v2398, %v2394
    %v2995 = vpack.c.b16 %v2399, %v2395
    %v2996 = vpack.c.b16 %v2400, %v2396
    %v2997 = vpack.c.b16 %v2405, %v2401
    %v2998 = vpack.c.b16 %v2406, %v2402
    %v2999 = vpack.c.b16 %v2407, %v2403
    %v3000 = vpack.c.b16 %v2408, %v2404
    %v3001 = vpack.c.b16 %v2413, %v2409
    %v3002 = vpack.c.b16 %v2414, %v2410
    %v3003 = vpack.c.b16 %v2415, %v2411
    %v3004 = vpack.c.b16 %v2416, %v2412
    %v3005 = vpack.c.b16 %v2421, %v2417
    %v3006 = vpack.c.b16 %v2422, %v2418
    %v3007 = vpack.c.b16 %v2423, %v2419
    %v3008 = vpack.c.b16 %v2424, %v2420
    %v3009 = vpack.c.b16 %v2429, %v2425
    %v3010 = vpack.c.b16 %v2430, %v2426
    %v3011 = vpack.c.b16 %v2431, %v2427
    %v3012 = vpack.c.b16 %v2432, %v2428
    %v3013 = vpack.c.b16 %v2437, %v2433
    %v3014 = vpack.c.b16 %v2438, %v2434
    %v3015 = vpack.c.b16 %v2439, %v2435
    %v3016 = vpack.c.b16 %v2440, %v2436
    %v3017 = vpack.c.b16 %v2445, %v2441
    %v3018 = vpack.c.b16 %v2446, %v2442
    %v3019 = vpack.c.b16 %v2447, %v2443
    %v3020 = vpack.c.b16 %v2448, %v2444
    %v3021 = vpack.c.b16 %v2453, %v2449
    %v3022 = vpack.c.b16 %v2454, %v2450
    %v3023 = vpack.c.b16 %v2455, %v2451
    %v3024 = vpack.c.b16 %v2456, %v2452
    %v3025 = vpack.c.b16 %v2461, %v2457
    %v3026 = vpack.c.b16 %v2462, %v2458
    %v3027 = vpack.c.b16 %v2463, %v2459
    %v3028 = vpack.c.b16 %v2464, %v2460
    %v3029 = vpack.c.b16 %v2469, %v2465
    %v3030 = vpack.c.b16 %v2470, %v2466
    %v3031 = vpack.c.b16 %v2471, %v2467
    %v3032 = vpack.c.b16 %v2472, %v2468
    %v3033 = vpack.c.b16 %v2477, %v2473
    %v3034 = vpack.c.b16 %v2478, %v2474
    %v3035 = vpack.c.b16 %v2479, %v2475
    %v3036 = vpack.c.b16 %v2480, %v2476
    %v3037 = vpack.c.b16 %v2485, %v2481
    %v3038 = vpack.c.b16 %v2486, %v2482
    %v3039 = vpack.c.b16 %v2487, %v2483
    %v3040 = vpack.c.b16 %v2488, %v2484
    %v3041 = vpack.c.b16 %v2493, %v2489
    %v3042 = vpack.c.b16 %v2494, %v2490
    %v3043 = vpack.c.b16 %v2495, %v2491
    %v3044 = vpack.c.b16 %v2496, %v2492
    %v3045 = vpack.c.b16 %v2501, %v2497
    %v3046 = vpack.c.b16 %v2502, %v2498
    %v3047 = vpack.c.b16 %v2503, %v2499
    %v3048 = vpack.c.b16 %v2504, %v2500
    %v3049 = vpack.c.b16 %v2509, %v2505
    %v3050 = vpack.c.b16 %v2510, %v2506
    %v3051 = vpack.c.b16 %v2511, %v2507
    %v3052 = vpack.c.b16 %v2512, %v2508
    %v3053 = vpack.c.b16 %v2517, %v2513
    %v3054 = vpack.c.b16 %v2518, %v2514
    %v3055 = vpack.c.b16 %v2519, %v2515
    %v3056 = vpack.c.b16 %v2520, %v2516
    %v3057 = vpack.c.b16 %v2525, %v2521
    %v3058 = vpack.c.b16 %v2526, %v2522
    %v3059 = vpack.c.b16 %v2527, %v2523
    %v3060 = vpack.c.b16 %v2528, %v2524
    %v3061 = vpack.c.b16 %v2533, %v2529
    %v3062 = vpack.c.b16 %v2534, %v2530
    %v3063 = vpack.c.b16 %v2535, %v2531
    %v3064 = vpack.c.b16 %v2536, %v2532
    %v3065 = vpack.c.b16 %v2541, %v2537
    %v3066 = vpack.c.b16 %v2542, %v2538
    %v3067 = vpack.c.b16 %v2543, %v2539
    %v3068 = vpack.c.b16 %v2544, %v2540
    %v3069 = vpack.c.b16 %v2549, %v2545
    %v3070 = vpack.c.b16 %v2550, %v2546
    %v3071 = vpack.c.b16 %v2551, %v2547
    %v3072 = vpack.c.b16 %v2552, %v2548
    %v3073 = vpack.c.b16 %v2557, %v2553
    %v3074 = vpack.c.b16 %v2558, %v2554
    %v3075 = vpack.c.b16 %v2559, %v2555
    %v3076 = vpack.c.b16 %v2560, %v2556
    %v3077 = vpack.c.b16 %v2565, %v2561
    %v3078 = vpack.c.b16 %v2566, %v2562
    %v3079 = vpack.c.b16 %v2567, %v2563
    %v3080 = vpack.c.b16 %v2568, %v2564
    %v3081 = vpack.c.b16 %v2573, %v2569
    %v3082 = vpack.c.b16 %v2574, %v2570
    %v3083 = vpack.c.b16 %v2575, %v2571
    %v3084 = vpack.c.b16 %v2576, %v2572
    %v3085 = vpack.c.b16 %v2581, %v2577
    %v3086 = vpack.c.b16 %v2582, %v2578
    %v3087 = vpack.c.b16 %v2583, %v2579
    %v3088 = vpack.c.b16 %v2584, %v2580
    %v3089 = vpack.c.b16 %v2589, %v2585
    %v3090 = vpack.c.b16 %v2590, %v2586
    %v3091 = vpack.c.b16 %v2591, %v2587
    %v3092 = vpack.c.b16 %v2592, %v2588
    %v3093 = vpack.c.b16 %v2597, %v2593
    %v3094 = vpack.c.b16 %v2598, %v2594
    %v3095 = vpack.c.b16 %v2599, %v2595
    %v3096 = vpack.c.b16 %v2600, %v2596
    %v3097 = vpack.c.b16 %v2605, %v2601
    %v3098 = vpack.c.b16 %v2606, %v2602
    %v3099 = vpack.c.b16 %v2607, %v2603
    %v3100 = vpack.c.b16 %v2608, %v2604
    %v3101 = vpack.c.b16 %v2613, %v2609
    %v3102 = vpack.c.b16 %v2614, %v2610
    %v3103 = vpack.c.b16 %v2615, %v2611
    %v3104 = vpack.c.b16 %v2616, %v2612
    %v3105 = vpack.c.b16 %v2621, %v2617
    %v3106 = vpack.c.b16 %v2622, %v2618
    %v3107 = vpack.c.b16 %v2623, %v2619
    %v3108 = vpack.c.b16 %v2624, %v2620
    %v3109 = vpack.c.b16 %v2629, %v2625
    %v3110 = vpack.c.b16 %v2630, %v2626
    %v3111 = vpack.c.b16 %v2631, %v2627
    %v3112 = vpack.c.b16 %v2632, %v2628
    %v3113 = vpack.c.b16 %v2637, %v2633
    %v3114 = vpack.c.b16 %v2638, %v2634
    %v3115 = vpack.c.b16 %v2639, %v2635
    %v3116 = vpack.c.b16 %v2640, %v2636
    %v3117 = vpack.c.b16 %v2645, %v2641
    %v3118 = vpack.c.b16 %v2646, %v2642
    %v3119 = vpack.c.b16 %v2647, %v2643
    %v3120 = vpack.c.b16 %v2648, %v2644
    %v3121 = vpack.c.b16 %v2653, %v2649
    %v3122 = vpack.c.b16 %v2654, %v2650
    %v3123 = vpack.c.b16 %v2655, %v2651
    %v3124 = vpack.c.b16 %v2656, %v2652
    %v3125 = vpack.c.b16 %v2661, %v2657
    %v3126 = vpack.c.b16 %v2662, %v2658
    %v3127 = vpack.c.b16 %v2663, %v2659
    %v3128 = vpack.c.b16 %v2664, %v2660
    %v3129 = vpack.c.b16 %v2669, %v2665
    %v3130 = vpack.c.b16 %v2670, %v2666
    %v3131 = vpack.c.b16 %v2671, %v2667
    %v3132 = vpack.c.b16 %v2672, %v2668
    %v3133 = vpack.c.b16 %v2677, %v2673
    %v3134 = vpack.c.b16 %v2678, %v2674
    %v3135 = vpack.c.b16 %v2679, %v2675
    %v3136 = vpack.c.b16 %v2680, %v2676
    %v3137 = vpack.c.b16 %v2685, %v2681
    %v3138 = vpack.c.b16 %v2686, %v2682
    %v3139 = vpack.c.b16 %v2687, %v2683
    %v3140 = vpack.c.b16 %v2688, %v2684
    %v3141 = vpack.c.b16 %v2693, %v2689
    %v3142 = vpack.c.b16 %v2694, %v2690
    %v3143 = vpack.c.b16 %v2695, %v2691
    %v3144 = vpack.c.b16 %v2696, %v2692
    %v3145 = vpack.c.b16 %v2701, %v2697
    %v3146 = vpack.c.b16 %v2702, %v2698
    %v3147 = vpack.c.b16 %v2703, %v2699
    %v3148 = vpack.c.b16 %v2704, %v2700
    %v3149 = vpack.c.b16 %v2709, %v2705
    %v3150 = vpack.c.b16 %v2710, %v2706
    %v3151 = vpack.c.b16 %v2711, %v2707
    %v3152 = vpack.c.b16 %v2712, %v2708
    %v3153 = vpack.c.b16 %v2717, %v2713
    %v3154 = vpack.c.b16 %v2718, %v2714
    %v3155 = vpack.c.b16 %v2719, %v2715
    %v3156 = vpack.c.b16 %v2720, %v2716
    %v3157 = vpack.c.b16 %v2725, %v2721
    %v3158 = vpack.c.b16 %v2726, %v2722
    %v3159 = vpack.c.b16 %v2727, %v2723
    %v3160 = vpack.c.b16 %v2728, %v2724
    %v3161 = vpack.c.b16 %v2733, %v2729
    %v3162 = vpack.c.b16 %v2734, %v2730
    %v3163 = vpack.c.b16 %v2735, %v2731
    %v3164 = vpack.c.b16 %v2736, %v2732
    %v3165 = vpack.c.b16 %v2741, %v2737
    %v3166 = vpack.c.b16 %v2742, %v2738
    %v3167 = vpack.c.b16 %v2743, %v2739
    %v3168 = vpack.c.b16 %v2744, %v2740
    %v3169 = vpack.c.b16 %v2749, %v2745
    %v3170 = vpack.c.b16 %v2750, %v2746
    %v3171 = vpack.c.b16 %v2751, %v2747
    %v3172 = vpack.c.b16 %v2752, %v2748
    %v3173 = vpack.c.b16 %v2757, %v2753
    %v3174 = vpack.c.b16 %v2758, %v2754
    %v3175 = vpack.c.b16 %v2759, %v2755
    %v3176 = vpack.c.b16 %v2760, %v2756
    %v3177 = vpack.c.b16 %v2765, %v2761
    %v3178 = vpack.c.b16 %v2766, %v2762
    %v3179 = vpack.c.b16 %v2767, %v2763
    %v3180 = vpack.c.b16 %v2768, %v2764
    %v3181 = vpack.c.b16 %v2773, %v2769
    %v3182 = vpack.c.b16 %v2774, %v2770
    %v3183 = vpack.c.b16 %v2775, %v2771
    %v3184 = vpack.c.b16 %v2776, %v2772
    %v3185 = vpack.c.b16 %v2781, %v2777
    %v3186 = vpack.c.b16 %v2782, %v2778
    %v3187 = vpack.c.b16 %v2783, %v2779
    %v3188 = vpack.c.b16 %v2784, %v2780
    %v3189 = vpack.c.b16 %v2789, %v2785
    %v3190 = vpack.c.b16 %v2790, %v2786
    %v3191 = vpack.c.b16 %v2791, %v2787
    %v3192 = vpack.c.b16 %v2792, %v2788
    %v3193 = vpack.c.b16 %v2797, %v2793
    %v3194 = vpack.c.b16 %v2798, %v2794
    %v3195 = vpack.c.b16 %v2799, %v2795
    %v3196 = vpack.c.b16 %v2800, %v2796
    %v3197 = vpack.c.b16 %v2805, %v2801
    %v3198 = vpack.c.b16 %v2806, %v2802
    %v3199 = vpack.c.b16 %v2807, %v2803
    %v3200 = vpack.c.b16 %v2808, %v2804
    %v3201 = vpack.c.b16 %v2813, %v2809
    %v3202 = vpack.c.b16 %v2814, %v2810
    %v3203 = vpack.c.b16 %v2815, %v2811
    %v3204 = vpack.c.b16 %v2816, %v2812
    %v3205 = vpack.c.b16 %v2821, %v2817
    %v3206 = vpack.c.b16 %v2822, %v2818
    %v3207 = vpack.c.b16 %v2823, %v2819
    %v3208 = vpack.c.b16 %v2824, %v2820
    %v3209 = vpack.c.b16 %v2829, %v2825
    %v3210 = vpack.c.b16 %v2830, %v2826
    %v3211 = vpack.c.b16 %v2831, %v2827
    %v3212 = vpack.c.b16 %v2832, %v2828
    %v3213 = vpack.c.b16 %v2837, %v2833
    %v3214 = vpack.c.b16 %v2838, %v2834
    %v3215 = vpack.c.b16 %v2839, %v2835
    %v3216 = vpack.c.b16 %v2840, %v2836
    %v3217 = vpack.c.b16 %v2845, %v2841
    %v3218 = vpack.c.b16 %v2846, %v2842
    %v3219 = vpack.c.b16 %v2847, %v2843
    %v3220 = vpack.c.b16 %v2848, %v2844
    %v3221 = vpack.c.b16 %v2853, %v2849
    %v3222 = vpack.c.b16 %v2854, %v2850
    %v3223 = vpack.c.b16 %v2855, %v2851
    %v3224 = vpack.c.b16 %v2856, %v2852
    %v3225 = vpack.c.b16 %v2861, %v2857
    %v3226 = vpack.c.b16 %v2862, %v2858
    %v3227 = vpack.c.b16 %v2863, %v2859
    %v3228 = vpack.c.b16 %v2864, %v2860
    %v3229 = vpack.c.b16 %v2869, %v2865
    %v3230 = vpack.c.b16 %v2870, %v2866
    %v3231 = vpack.c.b16 %v2871, %v2867
    %v3232 = vpack.c.b16 %v2872, %v2868
    %v3233 = vpack.c.b16 %v2877, %v2873
    %v3234 = vpack.c.b16 %v2878, %v2874
    %v3235 = vpack.c.b16 %v2879, %v2875
    %v3236 = vpack.c.b16 %v2880, %v2876
    %v3237 = vpack.c.b16 %v2885, %v2881
    %v3238 = vpack.c.b16 %v2886, %v2882
    %v3239 = vpack.c.b16 %v2887, %v2883
    %v3240 = vpack.c.b16 %v2888, %v2884
    %v3241 = vpack.c.b16 %v2893, %v2889
    %v3242 = vpack.c.b16 %v2894, %v2890
    %v3243 = vpack.c.b16 %v2895, %v2891
    %v3244 = vpack.c.b16 %v2896, %v2892
    %v3245 = vpack.c.b16 %v2901, %v2897
    %v3246 = vpack.c.b16 %v2902, %v2898
    %v3247 = vpack.c.b16 %v2903, %v2899
    %v3248 = vpack.c.b16 %v2904, %v2900
    %v3249 = vpack.c.b16 %v2909, %v2905
    %v3250 = vpack.c.b16 %v2910, %v2906
    %v3251 = vpack.c.b16 %v2911, %v2907
    %v3252 = vpack.c.b16 %v2912, %v2908
    %v3253 = vpack.c.b16 %v2917, %v2913
    %v3254 = vpack.c.b16 %v2918, %v2914
    %v3255 = vpack.c.b16 %v2919, %v2915
    %v3256 = vpack.c.b16 %v2920, %v2916
    %v3257 = vpack.c.b16 %v2925, %v2921
    %v3258 = vpack.c.b16 %v2926, %v2922
    %v3259 = vpack.c.b16 %v2927, %v2923
    %v3260 = vpack.c.b16 %v2928, %v2924
    %v3261 = vpack.c.b16 %v2933, %v2929
    %v3262 = vpack.c.b16 %v2934, %v2930
    %v3263 = vpack.c.b16 %v2935, %v2931
    %v3264 = vpack.c.b16 %v2936, %v2932
    %v3265 = vpack.c.b16 %v2941, %v2937
    %v3266 = vpack.c.b16 %v2942, %v2938
    %v3267 = vpack.c.b16 %v2943, %v2939
    %v3268 = vpack.c.b16 %v2944, %v2940
    %v3269 = vpack.c.b16 %v2949, %v2945
    %v3270 = vpack.c.b16 %v2950, %v2946
    %v3271 = vpack.c.b16 %v2951, %v2947
    %v3272 = vpack.c.b16 %v2952, %v2948
    %3593 = vmatprep.subr.bf16.mxu0 %v2954
    %3594 = vmatpush1.bf16.msra.mxu0 %v2953
    %3595 = vmatprep.subr.bf16.mxu0 %v2958
    %3596 = vmatpush1.bf16.msra.mxu0 %v2957
    %3597 = vmatprep.subr.bf16.mxu0 %v2962
    %3598 = vmatpush1.bf16.msra.mxu0 %v2961
    %3599 = vmatprep.subr.bf16.mxu0 %v2966
    %3600 = vmatpush1.bf16.msra.mxu0 %v2965
    %3601 = vmatprep.subr.bf16.mxu0 %v2970
    %3602 = vmatpush1.bf16.msra.mxu0 %v2969
    %3603 = vmatprep.subr.bf16.mxu0 %v2974
    %3604 = vmatpush1.bf16.msra.mxu0 %v2973
    %3605 = vmatprep.subr.bf16.mxu0 %v2978
    %3606 = vmatpush1.bf16.msra.mxu0 %v2977
    %3607 = vmatprep.subr.bf16.mxu0 %v2982
    %3608 = vmatpush1.bf16.msra.mxu0 %v2981
    %3609 = vmatprep.subr.bf16.mxu0 %v2986
    %3610 = vmatpush1.bf16.msra.mxu0 %v2985
    %3611 = vmatprep.subr.bf16.mxu0 %v2990
    %3612 = vmatpush1.bf16.msra.mxu0 %v2989
    %3613 = vmatprep.subr.bf16.mxu0 %v2994
    %3614 = vmatpush1.bf16.msra.mxu0 %v2993
    %3615 = vmatprep.subr.bf16.mxu0 %v2998
    %3616 = vmatpush1.bf16.msra.mxu0 %v2997
    %3617 = vmatprep.subr.bf16.mxu0 %v3002
    %3618 = vmatpush1.bf16.msra.mxu0 %v3001
    %3619 = vmatprep.subr.bf16.mxu0 %v3006
    %3620 = vmatpush1.bf16.msra.mxu0 %v3005
    %3621 = vmatprep.subr.bf16.mxu0 %v3010
    %3622 = vmatpush1.bf16.msra.mxu0 %v3009
    %3623 = vmatprep.subr.bf16.mxu0 %v3014
    %3624 = vmatpush1.bf16.msra.mxu0 %v3013
    %3625 = vmatprep.mubr.bf16.mxu0 %v1951
    %3626 = vmatmul.mubr.bf16.gmra.mrb[0].mxu0 %v1950
    %v3627 = vpop.f32.mrb[0].mxu0
    %v3628 = vadd.f32 %v1976, %v3627
    %v3629 = vpop.f32.mrb[0].mxu0
    %v3630 = vadd.f32 %v1980, %v3629
    %v3631 = vpop.f32.mrb[0].mxu0
    %v3632 = vadd.f32 %v1976, %v3631
    %v3633 = vpop.f32.mrb[0].mxu0
    %v3634 = vadd.f32 %v1980, %v3633
    %3635 = vmatprep.mubr.bf16.mxu0 %v1961
    %3636 = vmatmul.mubr.bf16.gmra.mrb[0].mxu0 %v1960
    %v3637 = vpop.f32.mrb[0].mxu0
    %v3638 = vadd.f32 %v1976, %v3637
    %v3639 = vpop.f32.mrb[0].mxu0
    %v3640 = vadd.f32 %v1980, %v3639
    %v3641 = vpop.f32.mrb[0].mxu0
    %v3642 = vpop.f32.mrb[0].mxu0
    %3643 = vdwg.mxu0
    %3644 = vmatprep.subr.bf16.mxu0 %v3018
    %3645 = vmatpush1.bf16.msra.mxu0 %v3017
    %3646 = vmatprep.subr.bf16.mxu0 %v3022
    %3647 = vmatpush1.bf16.msra.mxu0 %v3021
    %3648 = vmatprep.subr.bf16.mxu0 %v3026
    %3649 = vmatpush1.bf16.msra.mxu0 %v3025
    %3650 = vmatprep.subr.bf16.mxu0 %v3030
    %3651 = vmatpush1.bf16.msra.mxu0 %v3029
    %3652 = vmatprep.subr.bf16.mxu0 %v3034
    %3653 = vmatpush1.bf16.msra.mxu0 %v3033
    %3654 = vmatprep.subr.bf16.mxu0 %v3038
    %3655 = vmatpush1.bf16.msra.mxu0 %v3037
    %3656 = vmatprep.subr.bf16.mxu0 %v3042
    %3657 = vmatpush1.bf16.msra.mxu0 %v3041
    %3658 = vmatprep.subr.bf16.mxu0 %v3046
    %3659 = vmatpush1.bf16.msra.mxu0 %v3045
    %3660 = vmatprep.subr.bf16.mxu0 %v3050
    %3661 = vmatpush1.bf16.msra.mxu0 %v3049
    %3662 = vmatprep.subr.bf16.mxu0 %v3054
    %3663 = vmatpush1.bf16.msra.mxu0 %v3053
    %3664 = vmatprep.subr.bf16.mxu0 %v3058
    %3665 = vmatpush1.bf16.msra.mxu0 %v3057
    %3666 = vmatprep.subr.bf16.mxu0 %v3062
    %3667 = vmatpush1.bf16.msra.mxu0 %v3061
    %3668 = vmatprep.subr.bf16.mxu0 %v3066
    %3669 = vmatpush1.bf16.msra.mxu0 %v3065
    %3670 = vmatprep.subr.bf16.mxu0 %v3070
    %3671 = vmatpush1.bf16.msra.mxu0 %v3069
    %3672 = vmatprep.subr.bf16.mxu0 %v3074
    %3673 = vmatpush1.bf16.msra.mxu0 %v3073
    %3674 = vmatprep.subr.bf16.mxu0 %v3078
    %3675 = vmatpush1.bf16.msra.mxu0 %v3077
    %3676 = vmatprep.mubr.bf16.mxu0 %v1953
    %3677 = vmatmul.mubr.bf16.gmra.mrb[0].mxu0 %v1952
    %v3678 = vpop.f32.mrb[0].mxu0
    %v3679 = vadd.f32 %v3628, %v3678
    %v3680 = vpop.f32.mrb[0].mxu0
    %v3681 = vadd.f32 %v3630, %v3680
    %v3682 = vpop.f32.mrb[0].mxu0
    %v3683 = vadd.f32 %v3632, %v3682
    %v3684 = vpop.f32.mrb[0].mxu0
    %v3685 = vadd.f32 %v3634, %v3684
    %3686 = vmatprep.mubr.bf16.mxu0 %v1963
    %3687 = vmatmul.mubr.bf16.gmra.mrb[0].mxu0 %v1962
    %v3688 = vpop.f32.mrb[0].mxu0
    %v3689 = vadd.f32 %v3638, %v3688
    %v3690 = vpop.f32.mrb[0].mxu0
    %v3691 = vadd.f32 %v3640, %v3690
    %v3692 = vpop.f32.mrb[0].mxu0
    %v3693 = vpop.f32.mrb[0].mxu0
    %3694 = vdwg.mxu0
    %3695 = vmatprep.subr.bf16.mxu0 %v3082
    %3696 = vmatpush1.bf16.msra.mxu0 %v3081
    %3697 = vmatprep.subr.bf16.mxu0 %v3086
    %3698 = vmatpush1.bf16.msra.mxu0 %v3085
    %3699 = vmatprep.subr.bf16.mxu0 %v3090
    %3700 = vmatpush1.bf16.msra.mxu0 %v3089
    %3701 = vmatprep.subr.bf16.mxu0 %v3094
    %3702 = vmatpush1.bf16.msra.mxu0 %v3093
    %3703 = vmatprep.subr.bf16.mxu0 %v3098
    %3704 = vmatpush1.bf16.msra.mxu0 %v3097
    %3705 = vmatprep.subr.bf16.mxu0 %v3102
    %3706 = vmatpush1.bf16.msra.mxu0 %v3101
    %3707 = vmatprep.subr.bf16.mxu0 %v3106
    %3708 = vmatpush1.bf16.msra.mxu0 %v3105
    %3709 = vmatprep.subr.bf16.mxu0 %v3110
    %3710 = vmatpush1.bf16.msra.mxu0 %v3109
    %3711 = vmatprep.subr.bf16.mxu0 %v3114
    %3712 = vmatpush1.bf16.msra.mxu0 %v3113
    %3713 = vmatprep.subr.bf16.mxu0 %v3118
    %3714 = vmatpush1.bf16.msra.mxu0 %v3117
    %3715 = vmatprep.subr.bf16.mxu0 %v3122
    %3716 = vmatpush1.bf16.msra.mxu0 %v3121
    %3717 = vmatprep.subr.bf16.mxu0 %v3126
    %3718 = vmatpush1.bf16.msra.mxu0 %v3125
    %3719 = vmatprep.subr.bf16.mxu0 %v3130
    %3720 = vmatpush1.bf16.msra.mxu0 %v3129
    %3721 = vmatprep.subr.bf16.mxu0 %v3134
    %3722 = vmatpush1.bf16.msra.mxu0 %v3133
    %3723 = vmatprep.subr.bf16.mxu0 %v3138
    %3724 = vmatpush1.bf16.msra.mxu0 %v3137
    %3725 = vmatprep.subr.bf16.mxu0 %v3142
    %3726 = vmatpush1.bf16.msra.mxu0 %v3141
    %3727 = vmatprep.mubr.bf16.mxu0 %v1955
    %3728 = vmatmul.mubr.bf16.gmra.mrb[0].mxu0 %v1954
    %v3729 = vpop.f32.mrb[0].mxu0
    %v3730 = vadd.f32 %v3679, %v3729
    %v3731 = vpop.f32.mrb[0].mxu0
    %v3732 = vadd.f32 %v3681, %v3731
    %v3733 = vpop.f32.mrb[0].mxu0
    %v3734 = vadd.f32 %v3683, %v3733
    %v3735 = vpop.f32.mrb[0].mxu0
    %v3736 = vadd.f32 %v3685, %v3735
    %3737 = vmatprep.mubr.bf16.mxu0 %v1965
    %3738 = vmatmul.mubr.bf16.gmra.mrb[0].mxu0 %v1964
    %v3739 = vpop.f32.mrb[0].mxu0
    %v3740 = vadd.f32 %v3689, %v3739
    %v3741 = vpop.f32.mrb[0].mxu0
    %v3742 = vadd.f32 %v3691, %v3741
    %v3743 = vpop.f32.mrb[0].mxu0
    %v3744 = vpop.f32.mrb[0].mxu0
    %3745 = vdwg.mxu0
    %3746 = vmatprep.subr.bf16.mxu0 %v3146
    %3747 = vmatpush1.bf16.msra.mxu0 %v3145
    %3748 = vmatprep.subr.bf16.mxu0 %v3150
    %3749 = vmatpush1.bf16.msra.mxu0 %v3149
    %3750 = vmatprep.subr.bf16.mxu0 %v3154
    %3751 = vmatpush1.bf16.msra.mxu0 %v3153
    %3752 = vmatprep.subr.bf16.mxu0 %v3158
    %3753 = vmatpush1.bf16.msra.mxu0 %v3157
    %3754 = vmatprep.subr.bf16.mxu0 %v3162
    %3755 = vmatpush1.bf16.msra.mxu0 %v3161
    %3756 = vmatprep.subr.bf16.mxu0 %v3166
    %3757 = vmatpush1.bf16.msra.mxu0 %v3165
    %3758 = vmatprep.subr.bf16.mxu0 %v3170
    %3759 = vmatpush1.bf16.msra.mxu0 %v3169
    %3760 = vmatprep.subr.bf16.mxu0 %v3174
    %3761 = vmatpush1.bf16.msra.mxu0 %v3173
    %3762 = vmatprep.subr.bf16.mxu0 %v3178
    %3763 = vmatpush1.bf16.msra.mxu0 %v3177
    %3764 = vmatprep.subr.bf16.mxu0 %v3182
    %3765 = vmatpush1.bf16.msra.mxu0 %v3181
    %3766 = vmatprep.subr.bf16.mxu0 %v3186
    %3767 = vmatpush1.bf16.msra.mxu0 %v3185
    %3768 = vmatprep.subr.bf16.mxu0 %v3190
    %3769 = vmatpush1.bf16.msra.mxu0 %v3189
    %3770 = vmatprep.subr.bf16.mxu0 %v3194
    %3771 = vmatpush1.bf16.msra.mxu0 %v3193
    %3772 = vmatprep.subr.bf16.mxu0 %v3198
    %3773 = vmatpush1.bf16.msra.mxu0 %v3197
    %3774 = vmatprep.subr.bf16.mxu0 %v3202
    %3775 = vmatpush1.bf16.msra.mxu0 %v3201
    %3776 = vmatprep.subr.bf16.mxu0 %v3206
    %3777 = vmatpush1.bf16.msra.mxu0 %v3205
    %3778 = vmatprep.mubr.bf16.mxu0 %v1957
    %3779 = vmatmul.mubr.bf16.gmra.mrb[0].mxu0 %v1956
    %v3780 = vpop.f32.mrb[0].mxu0
    %v3781 = vadd.f32 %v3730, %v3780
    %v3782 = vpop.f32.mrb[0].mxu0
    %v3783 = vadd.f32 %v3732, %v3782
    %v3784 = vpop.f32.mrb[0].mxu0
    %v3785 = vadd.f32 %v3734, %v3784
    %v3786 = vpop.f32.mrb[0].mxu0
    %v3787 = vadd.f32 %v3736, %v3786
    %3788 = vmatprep.mubr.bf16.mxu0 %v1967
    %3789 = vmatmul.mubr.bf16.gmra.mrb[0].mxu0 %v1966
    %v3790 = vpop.f32.mrb[0].mxu0
    %v3791 = vadd.f32 %v3740, %v3790
    %v3792 = vpop.f32.mrb[0].mxu0
    %v3793 = vadd.f32 %v3742, %v3792
    %v3794 = vpop.f32.mrb[0].mxu0
    %v3795 = vpop.f32.mrb[0].mxu0
    %3796 = vdwg.mxu0
    %3797 = vmatprep.subr.bf16.mxu0 %v3210
    %3798 = vmatpush1.bf16.msra.mxu0 %v3209
    %3799 = vmatprep.subr.bf16.mxu0 %v3214
    %3800 = vmatpush1.bf16.msra.mxu0 %v3213
    %3801 = vmatprep.subr.bf16.mxu0 %v3218
    %3802 = vmatpush1.bf16.msra.mxu0 %v3217
    %3803 = vmatprep.subr.bf16.mxu0 %v3222
    %3804 = vmatpush1.bf16.msra.mxu0 %v3221
    %3805 = vmatprep.subr.bf16.mxu0 %v3226
    %3806 = vmatpush1.bf16.msra.mxu0 %v3225
    %3807 = vmatprep.subr.bf16.mxu0 %v3230
    %3808 = vmatpush1.bf16.msra.mxu0 %v3229
    %3809 = vmatprep.subr.bf16.mxu0 %v3234
    %3810 = vmatpush1.bf16.msra.mxu0 %v3233
    %3811 = vmatprep.subr.bf16.mxu0 %v3238
    %3812 = vmatpush1.bf16.msra.mxu0 %v3237
    %3813 = vmatprep.subr.bf16.mxu0 %v3242
    %3814 = vmatpush1.bf16.msra.mxu0 %v3241
    %3815 = vmatprep.subr.bf16.mxu0 %v3246
    %3816 = vmatpush1.bf16.msra.mxu0 %v3245
    %3817 = vmatprep.subr.bf16.mxu0 %v3250
    %3818 = vmatpush1.bf16.msra.mxu0 %v3249
    %3819 = vmatprep.subr.bf16.mxu0 %v3254
    %3820 = vmatpush1.bf16.msra.mxu0 %v3253
    %3821 = vmatprep.subr.bf16.mxu0 %v3258
    %3822 = vmatpush1.bf16.msra.mxu0 %v3257
    %3823 = vmatprep.subr.bf16.mxu0 %v3262
    %3824 = vmatpush1.bf16.msra.mxu0 %v3261
    %3825 = vmatprep.subr.bf16.mxu0 %v3266
    %3826 = vmatpush1.bf16.msra.mxu0 %v3265
    %3827 = vmatprep.subr.bf16.mxu0 %v3270
    %3828 = vmatpush1.bf16.msra.mxu0 %v3269
    %3829 = vmatprep.mubr.bf16.mxu0 %v1959
    %3830 = vmatmul.mubr.bf16.gmra.mrb[0].mxu0 %v1958
    %v3831 = vpop.f32.mrb[0].mxu0
    %v3832 = vadd.f32 %v3781, %v3831
    %v3833 = vpop.f32.mrb[0].mxu0
    %v3834 = vadd.f32 %v3783, %v3833
    %v3835 = vpop.f32.mrb[0].mxu0
    %v3836 = vadd.f32 %v3785, %v3835
    %v3837 = vpop.f32.mrb[0].mxu0
    %v3838 = vadd.f32 %v3787, %v3837
    %3839 = vmatprep.mubr.bf16.mxu0 %v1969
    %3840 = vmatmul.mubr.bf16.gmra.mrb[0].mxu0 %v1968
    %v3841 = vpop.f32.mrb[0].mxu0
    %v3842 = vadd.f32 %v3791, %v3841
    %v3843 = vpop.f32.mrb[0].mxu0
    %v3844 = vadd.f32 %v3793, %v3843
    %v3845 = vpop.f32.mrb[0].mxu0
    %v3846 = vpop.f32.mrb[0].mxu0
    %3847 = vdwg.mxu0
    %3848 = vmatprep.subr.bf16.mxu0 %v2956
    %3849 = vmatpush1.bf16.msra.mxu0 %v2955
    %3850 = vmatprep.subr.bf16.mxu0 %v2960
    %3851 = vmatpush1.bf16.msra.mxu0 %v2959
    %3852 = vmatprep.subr.bf16.mxu0 %v2964
    %3853 = vmatpush1.bf16.msra.mxu0 %v2963
    %3854 = vmatprep.subr.bf16.mxu0 %v2968
    %3855 = vmatpush1.bf16.msra.mxu0 %v2967
    %3856 = vmatprep.subr.bf16.mxu0 %v2972
    %3857 = vmatpush1.bf16.msra.mxu0 %v2971
    %3858 = vmatprep.subr.bf16.mxu0 %v2976
    %3859 = vmatpush1.bf16.msra.mxu0 %v2975
    %3860 = vmatprep.subr.bf16.mxu0 %v2980
    %3861 = vmatpush1.bf16.msra.mxu0 %v2979
    %3862 = vmatprep.subr.bf16.mxu0 %v2984
    %3863 = vmatpush1.bf16.msra.mxu0 %v2983
    %3864 = vmatprep.subr.bf16.mxu0 %v2988
    %3865 = vmatpush1.bf16.msra.mxu0 %v2987
    %3866 = vmatprep.subr.bf16.mxu0 %v2992
    %3867 = vmatpush1.bf16.msra.mxu0 %v2991
    %3868 = vmatprep.subr.bf16.mxu0 %v2996
    %3869 = vmatpush1.bf16.msra.mxu0 %v2995
    %3870 = vmatprep.subr.bf16.mxu0 %v3000
    %3871 = vmatpush1.bf16.msra.mxu0 %v2999
    %3872 = vmatprep.subr.bf16.mxu0 %v3004
    %3873 = vmatpush1.bf16.msra.mxu0 %v3003
    %3874 = vmatprep.subr.bf16.mxu0 %v3008
    %3875 = vmatpush1.bf16.msra.mxu0 %v3007
    %3876 = vmatprep.subr.bf16.mxu0 %v3012
    %3877 = vmatpush1.bf16.msra.mxu0 %v3011
    %3878 = vmatprep.subr.bf16.mxu0 %v3016
    %3879 = vmatpush1.bf16.msra.mxu0 %v3015
    %3880 = vmatprep.mubr.bf16.mxu0 %v1951
    %3881 = vmatmul.mubr.bf16.gmra.mrb[0].mxu0 %v1950
    %v3882 = vpop.f32.mrb[0].mxu0
    %v3883 = vadd.f32 %v1984, %v3882
    %v3884 = vpop.f32.mrb[0].mxu0
    %v3885 = vadd.f32 %v1988, %v3884
    %v3886 = vpop.f32.mrb[0].mxu0
    %v3887 = vadd.f32 %v1984, %v3886
    %v3888 = vpop.f32.mrb[0].mxu0
    %v3889 = vadd.f32 %v1988, %v3888
    %3890 = vmatprep.mubr.bf16.mxu0 %v1961
    %3891 = vmatmul.mubr.bf16.gmra.mrb[0].mxu0 %v1960
    %v3892 = vpop.f32.mrb[0].mxu0
    %v3893 = vadd.f32 %v1984, %v3892
    %v3894 = vpop.f32.mrb[0].mxu0
    %v3895 = vadd.f32 %v1988, %v3894
    %v3896 = vpop.f32.mrb[0].mxu0
    %v3897 = vpop.f32.mrb[0].mxu0
    %3898 = vdwg.mxu0
    %3899 = vmatprep.subr.bf16.mxu0 %v3020
    %3900 = vmatpush1.bf16.msra.mxu0 %v3019
    %3901 = vmatprep.subr.bf16.mxu0 %v3024
    %3902 = vmatpush1.bf16.msra.mxu0 %v3023
    %3903 = vmatprep.subr.bf16.mxu0 %v3028
    %3904 = vmatpush1.bf16.msra.mxu0 %v3027
    %3905 = vmatprep.subr.bf16.mxu0 %v3032
    %3906 = vmatpush1.bf16.msra.mxu0 %v3031
    %3907 = vmatprep.subr.bf16.mxu0 %v3036
    %3908 = vmatpush1.bf16.msra.mxu0 %v3035
    %3909 = vmatprep.subr.bf16.mxu0 %v3040
    %3910 = vmatpush1.bf16.msra.mxu0 %v3039
    %3911 = vmatprep.subr.bf16.mxu0 %v3044
    %3912 = vmatpush1.bf16.msra.mxu0 %v3043
    %3913 = vmatprep.subr.bf16.mxu0 %v3048
    %3914 = vmatpush1.bf16.msra.mxu0 %v3047
    %3915 = vmatprep.subr.bf16.mxu0 %v3052
    %3916 = vmatpush1.bf16.msra.mxu0 %v3051
    %3917 = vmatprep.subr.bf16.mxu0 %v3056
    %3918 = vmatpush1.bf16.msra.mxu0 %v3055
    %3919 = vmatprep.subr.bf16.mxu0 %v3060
    %3920 = vmatpush1.bf16.msra.mxu0 %v3059
    %3921 = vmatprep.subr.bf16.mxu0 %v3064
    %3922 = vmatpush1.bf16.msra.mxu0 %v3063
    %3923 = vmatprep.subr.bf16.mxu0 %v3068
    %3924 = vmatpush1.bf16.msra.mxu0 %v3067
    %3925 = vmatprep.subr.bf16.mxu0 %v3072
    %3926 = vmatpush1.bf16.msra.mxu0 %v3071
    %3927 = vmatprep.subr.bf16.mxu0 %v3076
    %3928 = vmatpush1.bf16.msra.mxu0 %v3075
    %3929 = vmatprep.subr.bf16.mxu0 %v3080
    %3930 = vmatpush1.bf16.msra.mxu0 %v3079
    %3931 = vmatprep.mubr.bf16.mxu0 %v1953
    %3932 = vmatmul.mubr.bf16.gmra.mrb[0].mxu0 %v1952
    %v3933 = vpop.f32.mrb[0].mxu0
    %v3934 = vadd.f32 %v3883, %v3933
    %v3935 = vpop.f32.mrb[0].mxu0
    %v3936 = vadd.f32 %v3885, %v3935
    %v3937 = vpop.f32.mrb[0].mxu0
    %v3938 = vadd.f32 %v3887, %v3937
    %v3939 = vpop.f32.mrb[0].mxu0
    %v3940 = vadd.f32 %v3889, %v3939
    %3941 = vmatprep.mubr.bf16.mxu0 %v1963
    %3942 = vmatmul.mubr.bf16.gmra.mrb[0].mxu0 %v1962
    %v3943 = vpop.f32.mrb[0].mxu0
    %v3944 = vadd.f32 %v3893, %v3943
    %v3945 = vpop.f32.mrb[0].mxu0
    %v3946 = vadd.f32 %v3895, %v3945
    %v3947 = vpop.f32.mrb[0].mxu0
    %v3948 = vpop.f32.mrb[0].mxu0
    %3949 = vdwg.mxu0
    %3950 = vmatprep.subr.bf16.mxu0 %v3084
    %3951 = vmatpush1.bf16.msra.mxu0 %v3083
    %3952 = vmatprep.subr.bf16.mxu0 %v3088
    %3953 = vmatpush1.bf16.msra.mxu0 %v3087
    %3954 = vmatprep.subr.bf16.mxu0 %v3092
    %3955 = vmatpush1.bf16.msra.mxu0 %v3091
    %3956 = vmatprep.subr.bf16.mxu0 %v3096
    %3957 = vmatpush1.bf16.msra.mxu0 %v3095
    %3958 = vmatprep.subr.bf16.mxu0 %v3100
    %3959 = vmatpush1.bf16.msra.mxu0 %v3099
    %3960 = vmatprep.subr.bf16.mxu0 %v3104
    %3961 = vmatpush1.bf16.msra.mxu0 %v3103
    %3962 = vmatprep.subr.bf16.mxu0 %v3108
    %3963 = vmatpush1.bf16.msra.mxu0 %v3107
    %3964 = vmatprep.subr.bf16.mxu0 %v3112
    %3965 = vmatpush1.bf16.msra.mxu0 %v3111
    %3966 = vmatprep.subr.bf16.mxu0 %v3116
    %3967 = vmatpush1.bf16.msra.mxu0 %v3115
    %3968 = vmatprep.subr.bf16.mxu0 %v3120
    %3969 = vmatpush1.bf16.msra.mxu0 %v3119
    %3970 = vmatprep.subr.bf16.mxu0 %v3124
    %3971 = vmatpush1.bf16.msra.mxu0 %v3123
    %3972 = vmatprep.subr.bf16.mxu0 %v3128
    %3973 = vmatpush1.bf16.msra.mxu0 %v3127
    %3974 = vmatprep.subr.bf16.mxu0 %v3132
    %3975 = vmatpush1.bf16.msra.mxu0 %v3131
    %3976 = vmatprep.subr.bf16.mxu0 %v3136
    %3977 = vmatpush1.bf16.msra.mxu0 %v3135
    %3978 = vmatprep.subr.bf16.mxu0 %v3140
    %3979 = vmatpush1.bf16.msra.mxu0 %v3139
    %3980 = vmatprep.subr.bf16.mxu0 %v3144
    %3981 = vmatpush1.bf16.msra.mxu0 %v3143
    %3982 = vmatprep.mubr.bf16.mxu0 %v1955
    %3983 = vmatmul.mubr.bf16.gmra.mrb[0].mxu0 %v1954
    %v3984 = vpop.f32.mrb[0].mxu0
    %v3985 = vadd.f32 %v3934, %v3984
    %v3986 = vpop.f32.mrb[0].mxu0
    %v3987 = vadd.f32 %v3936, %v3986
    %v3988 = vpop.f32.mrb[0].mxu0
    %v3989 = vadd.f32 %v3938, %v3988
    %v3990 = vpop.f32.mrb[0].mxu0
    %v3991 = vadd.f32 %v3940, %v3990
    %3992 = vmatprep.mubr.bf16.mxu0 %v1965
    %3993 = vmatmul.mubr.bf16.gmra.mrb[0].mxu0 %v1964
    %v3994 = vpop.f32.mrb[0].mxu0
    %v3995 = vadd.f32 %v3944, %v3994
    %v3996 = vpop.f32.mrb[0].mxu0
    %v3997 = vadd.f32 %v3946, %v3996
    %v3998 = vpop.f32.mrb[0].mxu0
    %v3999 = vpop.f32.mrb[0].mxu0
    %4000 = vdwg.mxu0
    %4001 = vmatprep.subr.bf16.mxu0 %v3148
    %4002 = vmatpush1.bf16.msra.mxu0 %v3147
    %4003 = vmatprep.subr.bf16.mxu0 %v3152
    %4004 = vmatpush1.bf16.msra.mxu0 %v3151
    %4005 = vmatprep.subr.bf16.mxu0 %v3156
    %4006 = vmatpush1.bf16.msra.mxu0 %v3155
    %4007 = vmatprep.subr.bf16.mxu0 %v3160
    %4008 = vmatpush1.bf16.msra.mxu0 %v3159
    %4009 = vmatprep.subr.bf16.mxu0 %v3164
    %4010 = vmatpush1.bf16.msra.mxu0 %v3163
    %4011 = vmatprep.subr.bf16.mxu0 %v3168
    %4012 = vmatpush1.bf16.msra.mxu0 %v3167
    %4013 = vmatprep.subr.bf16.mxu0 %v3172
    %4014 = vmatpush1.bf16.msra.mxu0 %v3171
    %4015 = vmatprep.subr.bf16.mxu0 %v3176
    %4016 = vmatpush1.bf16.msra.mxu0 %v3175
    %4017 = vmatprep.subr.bf16.mxu0 %v3180
    %4018 = vmatpush1.bf16.msra.mxu0 %v3179
    %4019 = vmatprep.subr.bf16.mxu0 %v3184
    %4020 = vmatpush1.bf16.msra.mxu0 %v3183
    %4021 = vmatprep.subr.bf16.mxu0 %v3188
    %4022 = vmatpush1.bf16.msra.mxu0 %v3187
    %4023 = vmatprep.subr.bf16.mxu0 %v3192
    %4024 = vmatpush1.bf16.msra.mxu0 %v3191
    %4025 = vmatprep.subr.bf16.mxu0 %v3196
    %4026 = vmatpush1.bf16.msra.mxu0 %v3195
    %4027 = vmatprep.subr.bf16.mxu0 %v3200
    %4028 = vmatpush1.bf16.msra.mxu0 %v3199
    %4029 = vmatprep.subr.bf16.mxu0 %v3204
    %4030 = vmatpush1.bf16.msra.mxu0 %v3203
    %4031 = vmatprep.subr.bf16.mxu0 %v3208
    %4032 = vmatpush1.bf16.msra.mxu0 %v3207
    %4033 = vmatprep.mubr.bf16.mxu0 %v1957
    %4034 = vmatmul.mubr.bf16.gmra.mrb[0].mxu0 %v1956
    %v4035 = vpop.f32.mrb[0].mxu0
    %v4036 = vadd.f32 %v3985, %v4035
    %v4037 = vpop.f32.mrb[0].mxu0
    %v4038 = vadd.f32 %v3987, %v4037
    %v4039 = vpop.f32.mrb[0].mxu0
    %v4040 = vadd.f32 %v3989, %v4039
    %v4041 = vpop.f32.mrb[0].mxu0
    %v4042 = vadd.f32 %v3991, %v4041
    %4043 = vmatprep.mubr.bf16.mxu0 %v1967
    %4044 = vmatmul.mubr.bf16.gmra.mrb[0].mxu0 %v1966
    %v4045 = vpop.f32.mrb[0].mxu0
    %v4046 = vadd.f32 %v3995, %v4045
    %v4047 = vpop.f32.mrb[0].mxu0
    %v4048 = vadd.f32 %v3997, %v4047
    %v4049 = vpop.f32.mrb[0].mxu0
    %v4050 = vpop.f32.mrb[0].mxu0
    %4051 = vdwg.mxu0
    %4052 = vmatprep.subr.bf16.mxu0 %v3212
    %4053 = vmatpush1.bf16.msra.mxu0 %v3211
    %4054 = vmatprep.subr.bf16.mxu0 %v3216
    %4055 = vmatpush1.bf16.msra.mxu0 %v3215
    %4056 = vmatprep.subr.bf16.mxu0 %v3220
    %4057 = vmatpush1.bf16.msra.mxu0 %v3219
    %4058 = vmatprep.subr.bf16.mxu0 %v3224
    %4059 = vmatpush1.bf16.msra.mxu0 %v3223
    %4060 = vmatprep.subr.bf16.mxu0 %v3228
    %4061 = vmatpush1.bf16.msra.mxu0 %v3227
    %4062 = vmatprep.subr.bf16.mxu0 %v3232
    %4063 = vmatpush1.bf16.msra.mxu0 %v3231
    %4064 = vmatprep.subr.bf16.mxu0 %v3236
    %4065 = vmatpush1.bf16.msra.mxu0 %v3235
    %4066 = vmatprep.subr.bf16.mxu0 %v3240
    %4067 = vmatpush1.bf16.msra.mxu0 %v3239
    %4068 = vmatprep.subr.bf16.mxu0 %v3244
    %4069 = vmatpush1.bf16.msra.mxu0 %v3243
    %4070 = vmatprep.subr.bf16.mxu0 %v3248
    %4071 = vmatpush1.bf16.msra.mxu0 %v3247
    %4072 = vmatprep.subr.bf16.mxu0 %v3252
    %4073 = vmatpush1.bf16.msra.mxu0 %v3251
    %4074 = vmatprep.subr.bf16.mxu0 %v3256
    %4075 = vmatpush1.bf16.msra.mxu0 %v3255
    %4076 = vmatprep.subr.bf16.mxu0 %v3260
    %4077 = vmatpush1.bf16.msra.mxu0 %v3259
    %4078 = vmatprep.subr.bf16.mxu0 %v3264
    %4079 = vmatpush1.bf16.msra.mxu0 %v3263
    %4080 = vmatprep.subr.bf16.mxu0 %v3268
    %4081 = vmatpush1.bf16.msra.mxu0 %v3267
    %4082 = vmatprep.subr.bf16.mxu0 %v3272
    %4083 = vmatpush1.bf16.msra.mxu0 %v3271
    %4084 = vmatprep.mubr.bf16.mxu0 %v1959
    %4085 = vmatmul.mubr.bf16.gmra.mrb[0].mxu0 %v1958
    %v4086 = vpop.f32.mrb[0].mxu0
    %v4087 = vadd.f32 %v4036, %v4086
    %v4088 = vpop.f32.mrb[0].mxu0
    %v4089 = vadd.f32 %v4038, %v4088
    %v4090 = vpop.f32.mrb[0].mxu0
    %v4091 = vadd.f32 %v4040, %v4090
    %v4092 = vpop.f32.mrb[0].mxu0
    %v4093 = vadd.f32 %v4042, %v4092
    %4094 = vmatprep.mubr.bf16.mxu0 %v1969
    %4095 = vmatmul.mubr.bf16.gmra.mrb[0].mxu0 %v1968
    %v4096 = vpop.f32.mrb[0].mxu0
    %v4097 = vadd.f32 %v4046, %v4096
    %v4098 = vpop.f32.mrb[0].mxu0
    %v4099 = vadd.f32 %v4048, %v4098
    %v4100 = vpop.f32.mrb[0].mxu0
    %v4101 = vpop.f32.mrb[0].mxu0
    %4102 = vdwg.mxu0
    %v4103 = vmax.f32 %v3832, 0.0
    %v4104 = vmax.f32 %v3834, 0.0
    %v4105 = vmax.f32 %v4087, 0.0
    %v4106 = vmax.f32 %v4089, 0.0
    %v4107 = vmax.f32 %v3836, 0.0
    %v4108 = vmax.f32 %v3838, 0.0
    %v4109 = vmax.f32 %v4091, 0.0
    %v4110 = vmax.f32 %v4093, 0.0
    %v4111 = vmax.f32 %v3842, 0.0
    %v4112 = vmax.f32 %v3844, 0.0
    %v4113 = vmax.f32 %v4097, 0.0
    %v4114 = vmax.f32 %v4099, 0.0
    %4115 = vst [vmem:[#allocation2] sm:$0xff] %v4103
    %4116 = vst [vmem:[#allocation2 + $0x8] sm:$0xff] %v4104
    %4117 = vst [vmem:[#allocation2 + $0x10] sm:$0xff] %v4105
    %4118 = vst [vmem:[#allocation2 + $0x18] sm:$0xff] %v4106
    %4119 = vst [vmem:[#allocation2 + $0x20] sm:$0xff] %v4107
    %4120 = vst [vmem:[#allocation2 + $0x28] sm:$0xff] %v4108
    %4121 = vst [vmem:[#allocation2 + $0x30] sm:$0xff] %v4109
    %4122 = vst [vmem:[#allocation2 + $0x38] sm:$0xff] %v4110
    %4123 = vst [vmem:[#allocation2 + $0x40] sm:$0xff] %v4111
    %4124 = vst [vmem:[#allocation2 + $0x48] sm:$0xff] %v4112
    %4125 = vst [vmem:[#allocation2 + $0x50] sm:$0xff] %v4113
    %4126 = vst [vmem:[#allocation2 + $0x58] sm:$0xff] %v4114
    %v4127 = vld [vmem:[#allocation2] sm:$0xf0]
    %v4128 = vld [vmem:[#allocation2 + $0x8] sm:$0xf0]
    %v4129 = vld [vmem:[#allocation2 + $0x10] sm:$0xf0]
    %v4130 = vld [vmem:[#allocation2 + $0x18] sm:$0xf0]
    %v4131 = vld [vmem:[#allocation2 + $0x20] sm:$0xff]
    %v4132 = vld [vmem:[#allocation2 + $0x28] sm:$0xff]
    %v4133 = vld [vmem:[#allocation2 + $0x30] sm:$0xff]
    %v4134 = vld [vmem:[#allocation2 + $0x38] sm:$0xff]
    %v4135 = vld [vmem:[#allocation2 + $0x40] sm:$0xff]
    %v4136 = vld [vmem:[#allocation2 + $0x48] sm:$0xff]
    %v4137 = vld [vmem:[#allocation2 + $0x50] sm:$0xff]
    %v4138 = vld [vmem:[#allocation2 + $0x58] sm:$0xff]
    %v4139 = vld [vmem:[#allocation2 + $0x60] sm:$0xf]
    %v4140 = vld [vmem:[#allocation2 + $0x68] sm:$0xf]
    %v4141 = vld [vmem:[#allocation2 + $0x70] sm:$0xf]
    %v4142 = vld [vmem:[#allocation2 + $0x78] sm:$0xf]
    %v4159 = vrot.slane %v4127, 4
    %v4160 = vrot.slane %v4131, 4
    %v4161 = vsel %vm1507, %v4159, %v4160
    %v4162 = vrot.slane %v4128, 4
    %v4163 = vrot.slane %v4132, 4
    %v4164 = vsel %vm1507, %v4162, %v4163
    %v4165 = vrot.slane %v4129, 4
    %v4166 = vrot.slane %v4133, 4
    %v4167 = vsel %vm1507, %v4165, %v4166
    %v4168 = vrot.slane %v4130, 4
    %v4169 = vrot.slane %v4134, 4
    %v4170 = vsel %vm1507, %v4168, %v4169
    %v4171 = vrot.slane %v4135, 4
    %v4172 = vsel %vm1507, %v4160, %v4171
    %v4173 = vrot.slane %v4136, 4
    %v4174 = vsel %vm1507, %v4163, %v4173
    %v4175 = vrot.slane %v4137, 4
    %v4176 = vsel %vm1507, %v4166, %v4175
    %v4177 = vrot.slane %v4138, 4
    %v4178 = vsel %vm1507, %v4169, %v4177
    %v4179 = vrot.slane %v4139, 4
    %v4180 = vsel %vm1507, %v4171, %v4179
    %v4181 = vrot.slane %v4140, 4
    %v4182 = vsel %vm1507, %v4173, %v4181
    %v4183 = vrot.slane %v4141, 4
    %v4184 = vsel %vm1507, %v4175, %v4183
    %v4185 = vrot.slane %v4142, 4
    %v4186 = vsel %vm1507, %v4177, %v4185
    %v4199 = vmax.f32 %v4103, %v4161
    %v4200 = vmax.f32 %v4104, %v4164
    %v4201 = vmax.f32 %v4105, %v4167
    %v4202 = vmax.f32 %v4106, %v4170
    %v4203 = vmax.f32 %v4107, %v4172
    %v4204 = vmax.f32 %v4108, %v4174
    %v4205 = vmax.f32 %v4109, %v4176
    %v4206 = vmax.f32 %v4110, %v4178
    %v4207 = vmax.f32 %v4111, %v4180
    %v4208 = vmax.f32 %v4112, %v4182
    %v4209 = vmax.f32 %v4113, %v4184
    %v4210 = vmax.f32 %v4114, %v4186
    %v4211 = vmax.f32 %v4199, %v4201
    %v4212 = vmax.f32 %v4200, %v4202
    %v4213 = vmax.f32 %v4203, %v4205
    %v4214 = vmax.f32 %v4204, %v4206
    %v4215 = vmax.f32 %v4207, %v4209
    %v4216 = vmax.f32 %v4208, %v4210
    %4217 = vst [vmem:[#allocation2] sm:$0xff] %v4211
    %4218 = vst [vmem:[#allocation2 + $0x8] sm:$0xff] %v4212
    %4219 = vst [vmem:[#allocation2 + $0x20] sm:$0xff] %v4213
    %4220 = vst [vmem:[#allocation2 + $0x28] sm:$0xff] %v4214
    %4221 = vst [vmem:[#allocation2 + $0x40] sm:$0xff] %v4215
    %4222 = vst [vmem:[#allocation2 + $0x48] sm:$0xff] %v4216
    %v4223 = vld [vmem:[#allocation2] sm:$0x3]
    %v4224 = vld [vmem:[#allocation2 + $0x8] sm:$0x3]
    %4225 = vst [vmem:[#allocation4] sm:$0x3] %v4223
    %4226 = vst [vmem:[#allocation4 + $0x8] sm:$0x3] %v4224
    %v4227 = vld [vmem:[#allocation2 + $0x20] sm:$0x3]
    %v4228 = vld [vmem:[#allocation2 + $0x28] sm:$0x3]
    %4229 = vst [vmem:[#allocation4 + $0x10] sm:$0x3] %v4227
    %4230 = vst [vmem:[#allocation4 + $0x18] sm:$0x3] %v4228
    %v4231 = vld [vmem:[#allocation2 + $0x40] sm:$0x3]
    %v4232 = vld [vmem:[#allocation2 + $0x48] sm:$0x3]
    %4233 = vst [vmem:[#allocation4 + $0x20] sm:$0x3] %v4231
    %4234 = vst [vmem:[#allocation4 + $0x28] sm:$0x3] %v4232
    %v4235 = vld [vmem:[#allocation4] sm:$0x3]
    %v4236 = vld [vmem:[#allocation4 + $0x8] sm:$0x3]
    %v4237 = vld [vmem:[#allocation4 + $0x10] sm:$0x3]
    %v4238 = vld [vmem:[#allocation4 + $0x18] sm:$0x3]
    %v4239 = vld [vmem:[#allocation4 + $0x20] sm:$0x3]
    %v4240 = vld [vmem:[#allocation4 + $0x28] sm:$0x3]
    %v4241 = vld [vmem:[%s2] sm:$0xf]
    %v4242 = vld [vmem:[%s2 + $0x4] sm:$0xf]
    %v4243 = vld [vmem:[%s2 + $0x8] sm:$0xf]
    %v4244 = vld [vmem:[%s2 + $0xc] sm:$0xf]
    %v4245 = vld [vmem:[%s2 + $0x10] sm:$0xf]
    %v4246 = vld [vmem:[%s2 + $0x14] sm:$0xf]
    %v4247 = vld [vmem:[%s2 + $0x18] sm:$0xf]
    %v4248 = vld [vmem:[%s2 + $0x1c] sm:$0xf]
    %v4249 = vld [vmem:[%s2 + $0x20] sm:$0xf]
    %v4250 = vld [vmem:[%s2 + $0x24] sm:$0xf]
    %v4251 = vld [vmem:[%s2 + $0x28] sm:$0xf]
    %v4252 = vld [vmem:[%s2 + $0x2c] sm:$0xf]
    %v4253 = vld [vmem:[%s2 + $0x30] sm:$0xf]
    %v4254 = vld [vmem:[%s2 + $0x34] sm:$0xf]
    %v4255 = vld [vmem:[%s2 + $0x38] sm:$0xf]
    %v4256 = vld [vmem:[%s2 + $0x3c] sm:$0xf]
    %v4257 = vld [vmem:[%s2 + $0x40] sm:$0xf]
    %v4258 = vld [vmem:[%s2 + $0x44] sm:$0xf]
    %v4259 = vld [vmem:[%s2 + $0x48] sm:$0xf]
    %v4260 = vld [vmem:[%s2 + $0x4c] sm:$0xf]
    %v4261 = vld [vmem:[%s2 + $0x50] sm:$0xf]
    %v4262 = vld [vmem:[%s2 + $0x54] sm:$0xf]
    %v4263 = vld [vmem:[%s2 + $0x58] sm:$0xf]
    %v4264 = vld [vmem:[%s2 + $0x5c] sm:$0xf]
    %v4265 = vld [vmem:[%s2 + $0x60] sm:$0xf]
    %v4266 = vld [vmem:[%s2 + $0x64] sm:$0xf]
    %v4267 = vld [vmem:[%s2 + $0x68] sm:$0xf]
    %v4268 = vld [vmem:[%s2 + $0x6c] sm:$0xf]
    %v4269 = vld [vmem:[%s2 + $0x70] sm:$0xf]
    %v4270 = vld [vmem:[%s2 + $0x74] sm:$0xf]
    %v4271 = vld [vmem:[%s2 + $0x78] sm:$0xf]
    %v4272 = vld [vmem:[%s2 + $0x7c] sm:$0xf]
    %v4273 = vld [vmem:[%s2 + $0x80] sm:$0xf]
    %v4274 = vld [vmem:[%s2 + $0x84] sm:$0xf]
    %v4275 = vld [vmem:[%s2 + $0x88] sm:$0xf]
    %v4276 = vld [vmem:[%s2 + $0x8c] sm:$0xf]
    %v4277 = vld [vmem:[%s2 + $0x90] sm:$0xf]
    %v4278 = vld [vmem:[%s2 + $0x94] sm:$0xf]
    %v4279 = vld [vmem:[%s2 + $0x98] sm:$0xf]
    %v4280 = vld [vmem:[%s2 + $0x9c] sm:$0xf]
    %v4281 = vld [vmem:[%s2 + $0xa0] sm:$0xf]
    %v4282 = vld [vmem:[%s2 + $0xa4] sm:$0xf]
    %v4283 = vld [vmem:[%s2 + $0xa8] sm:$0xf]
    %v4284 = vld [vmem:[%s2 + $0xac] sm:$0xf]
    %v4285 = vld [vmem:[%s2 + $0xb0] sm:$0xf]
    %v4286 = vld [vmem:[%s2 + $0xb4] sm:$0xf]
    %v4287 = vld [vmem:[%s2 + $0xb8] sm:$0xf]
    %v4288 = vld [vmem:[%s2 + $0xbc] sm:$0xf]
    %v4289 = vld [vmem:[%s2 + $0xc0] sm:$0xf]
    %v4290 = vld [vmem:[%s2 + $0xc4] sm:$0xf]
    %v4291 = vld [vmem:[%s2 + $0xc8] sm:$0xf]
    %v4292 = vld [vmem:[%s2 + $0xcc] sm:$0xf]
    %v4293 = vld [vmem:[%s2 + $0xd0] sm:$0xf]
    %v4294 = vld [vmem:[%s2 + $0xd4] sm:$0xf]
    %v4295 = vld [vmem:[%s2 + $0xd8] sm:$0xf]
    %v4296 = vld [vmem:[%s2 + $0xdc] sm:$0xf]
    %v4297 = vld [vmem:[%s2 + $0xe0] sm:$0xf]
    %v4298 = vld [vmem:[%s2 + $0xe4] sm:$0xf]
    %v4299 = vld [vmem:[%s2 + $0xe8] sm:$0xf]
    %v4300 = vld [vmem:[%s2 + $0xec] sm:$0xf]
    %v4301 = vld [vmem:[%s2 + $0xf0] sm:$0xf]
    %v4302 = vld [vmem:[%s2 + $0xf4] sm:$0xf]
    %v4303 = vld [vmem:[%s2 + $0xf8] sm:$0xf]
    %v4304 = vld [vmem:[%s2 + $0xfc] sm:$0xf]
    %v4305 = vld [vmem:[%s2 + $0x100] sm:$0xf]
    %v4306 = vld [vmem:[%s2 + $0x104] sm:$0xf]
    %v4307 = vld [vmem:[%s2 + $0x108] sm:$0xf]
    %v4308 = vld [vmem:[%s2 + $0x10c] sm:$0xf]
    %v4309 = vld [vmem:[%s2 + $0x110] sm:$0xf]
    %v4310 = vld [vmem:[%s2 + $0x114] sm:$0xf]
    %v4311 = vld [vmem:[%s2 + $0x118] sm:$0xf]
    %v4312 = vld [vmem:[%s2 + $0x11c] sm:$0xf]
    %v4313 = vld [vmem:[%s2 + $0x120] sm:$0xf]
    %v4314 = vld [vmem:[%s2 + $0x124] sm:$0xf]
    %v4315 = vld [vmem:[%s2 + $0x128] sm:$0xf]
    %v4316 = vld [vmem:[%s2 + $0x12c] sm:$0xf]
    %v4317 = vld [vmem:[%s2 + $0x130] sm:$0xf]
    %v4318 = vld [vmem:[%s2 + $0x134] sm:$0xf]
    %v4319 = vld [vmem:[%s2 + $0x138] sm:$0xf]
    %v4320 = vld [vmem:[%s2 + $0x13c] sm:$0xf]
    %v4321 = vld [vmem:[%s2 + $0x140] sm:$0xf]
    %v4322 = vld [vmem:[%s2 + $0x144] sm:$0xf]
    %v4323 = vld [vmem:[%s2 + $0x148] sm:$0xf]
    %v4324 = vld [vmem:[%s2 + $0x14c] sm:$0xf]
    %v4325 = vld [vmem:[%s2 + $0x150] sm:$0xf]
    %v4326 = vld [vmem:[%s2 + $0x154] sm:$0xf]
    %v4327 = vld [vmem:[%s2 + $0x158] sm:$0xf]
    %v4328 = vld [vmem:[%s2 + $0x15c] sm:$0xf]
    %v4329 = vld [vmem:[%s2 + $0x160] sm:$0xf]
    %v4330 = vld [vmem:[%s2 + $0x164] sm:$0xf]
    %v4331 = vld [vmem:[%s2 + $0x168] sm:$0xf]
    %v4332 = vld [vmem:[%s2 + $0x16c] sm:$0xf]
    %v4333 = vld [vmem:[%s2 + $0x170] sm:$0xf]
    %v4334 = vld [vmem:[%s2 + $0x174] sm:$0xf]
    %v4335 = vld [vmem:[%s2 + $0x178] sm:$0xf]
    %v4336 = vld [vmem:[%s2 + $0x17c] sm:$0xf]
    %v4337 = vpack.c.bf16 %v4235, %v4235
    %v4338 = vpack.c.bf16 %v4236, %v4236
    %v4339 = vpack.c.bf16 %v4237, %v4237
    %v4340 = vpack.c.bf16 %v4238, %v4238
    %v4341 = vpack.c.bf16 %v4239, %v4239
    %v4342 = vpack.c.bf16 %v4240, %v4240
    %v4343 = vld [vmem:[%s3 + $0x2] sm:$0x1]
    %v4344 = vlaneseq
    %v4345 = vshrl.u32 %v4344, 7
    %v4346 = vsub.s32 0, %v4345
    %v4347 = vrot.slane %v4343, %v4346
    %v4444 = vunpack.c.l.b16 %v4241
    %v4445 = vunpack.c.l.b16 %v4242
    %v4446 = vunpack.c.l.b16 %v4243
    %v4447 = vunpack.c.l.b16 %v4244
    %v4448 = vunpack.c.l.b16 %v4245
    %v4449 = vunpack.c.l.b16 %v4246
    %v4450 = vunpack.c.l.b16 %v4247
    %v4451 = vunpack.c.l.b16 %v4248
    %v4452 = vunpack.c.l.b16 %v4249
    %v4453 = vunpack.c.l.b16 %v4250
    %v4454 = vunpack.c.l.b16 %v4251
    %v4455 = vunpack.c.l.b16 %v4252
    %v4456 = vunpack.c.l.b16 %v4253
    %v4457 = vunpack.c.l.b16 %v4254
    %v4458 = vunpack.c.l.b16 %v4255
    %v4459 = vunpack.c.l.b16 %v4256
    %v4460 = vunpack.c.l.b16 %v4257
    %v4461 = vunpack.c.l.b16 %v4258
    %v4462 = vunpack.c.l.b16 %v4259
    %v4463 = vunpack.c.l.b16 %v4260
    %v4464 = vunpack.c.l.b16 %v4261
    %v4465 = vunpack.c.l.b16 %v4262
    %v4466 = vunpack.c.l.b16 %v4263
    %v4467 = vunpack.c.l.b16 %v4264
    %v4468 = vunpack.c.l.b16 %v4265
    %v4469 = vunpack.c.l.b16 %v4266
    %v4470 = vunpack.c.l.b16 %v4267
    %v4471 = vunpack.c.l.b16 %v4268
    %v4472 = vunpack.c.l.b16 %v4269
    %v4473 = vunpack.c.l.b16 %v4270
    %v4474 = vunpack.c.l.b16 %v4271
    %v4475 = vunpack.c.l.b16 %v4272
    %v4476 = vunpack.c.l.b16 %v4273
    %v4477 = vunpack.c.l.b16 %v4274
    %v4478 = vunpack.c.l.b16 %v4275
    %v4479 = vunpack.c.l.b16 %v4276
    %v4480 = vunpack.c.l.b16 %v4277
    %v4481 = vunpack.c.l.b16 %v4278
    %v4482 = vunpack.c.l.b16 %v4279
    %v4483 = vunpack.c.l.b16 %v4280
    %v4484 = vunpack.c.l.b16 %v4281
    %v4485 = vunpack.c.l.b16 %v4282
    %v4486 = vunpack.c.l.b16 %v4283
    %v4487 = vunpack.c.l.b16 %v4284
    %v4488 = vunpack.c.l.b16 %v4285
    %v4489 = vunpack.c.l.b16 %v4286
    %v4490 = vunpack.c.l.b16 %v4287
    %v4491 = vunpack.c.l.b16 %v4288
    %v4492 = vunpack.c.l.b16 %v4289
    %v4493 = vunpack.c.l.b16 %v4290
    %v4494 = vunpack.c.l.b16 %v4291
    %v4495 = vunpack.c.l.b16 %v4292
    %v4496 = vunpack.c.l.b16 %v4293
    %v4497 = vunpack.c.l.b16 %v4294
    %v4498 = vunpack.c.l.b16 %v4295
    %v4499 = vunpack.c.l.b16 %v4296
    %v4500 = vunpack.c.l.b16 %v4297
    %v4501 = vunpack.c.l.b16 %v4298
    %v4502 = vunpack.c.l.b16 %v4299
    %v4503 = vunpack.c.l.b16 %v4300
    %v4504 = vunpack.c.l.b16 %v4301
    %v4505 = vunpack.c.l.b16 %v4302
    %v4506 = vunpack.c.l.b16 %v4303
    %v4507 = vunpack.c.l.b16 %v4304
    %v4508 = vunpack.c.l.b16 %v4305
    %v4509 = vunpack.c.l.b16 %v4306
    %v4510 = vunpack.c.l.b16 %v4307
    %v4511 = vunpack.c.l.b16 %v4308
    %v4512 = vunpack.c.l.b16 %v4309
    %v4513 = vunpack.c.l.b16 %v4310
    %v4514 = vunpack.c.l.b16 %v4311
    %v4515 = vunpack.c.l.b16 %v4312
    %v4516 = vunpack.c.l.b16 %v4313
    %v4517 = vunpack.c.l.b16 %v4314
    %v4518 = vunpack.c.l.b16 %v4315
    %v4519 = vunpack.c.l.b16 %v4316
    %v4520 = vunpack.c.l.b16 %v4317
    %v4521 = vunpack.c.l.b16 %v4318
    %v4522 = vunpack.c.l.b16 %v4319
    %v4523 = vunpack.c.l.b16 %v4320
    %v4524 = vunpack.c.l.b16 %v4321
    %v4525 = vunpack.c.l.b16 %v4322
    %v4526 = vunpack.c.l.b16 %v4323
    %v4527 = vunpack.c.l.b16 %v4324
    %v4528 = vunpack.c.l.b16 %v4325
    %v4529 = vunpack.c.l.b16 %v4326
    %v4530 = vunpack.c.l.b16 %v4327
    %v4531 = vunpack.c.l.b16 %v4328
    %v4532 = vunpack.c.l.b16 %v4329
    %v4533 = vunpack.c.l.b16 %v4330
    %v4534 = vunpack.c.l.b16 %v4331
    %v4535 = vunpack.c.l.b16 %v4332
    %v4536 = vunpack.c.l.b16 %v4333
    %v4537 = vunpack.c.l.b16 %v4334
    %v4538 = vunpack.c.l.b16 %v4335
    %v4539 = vunpack.c.l.b16 %v4336
    %v4540 = vpack.c.b16 %v4445, %v4444
    %v4541 = vpack.c.b16 %v4447, %v4446
    %v4542 = vpack.c.b16 %v4449, %v4448
    %v4543 = vpack.c.b16 %v4451, %v4450
    %v4544 = vpack.c.b16 %v4453, %v4452
    %v4545 = vpack.c.b16 %v4455, %v4454
    %v4546 = vpack.c.b16 %v4457, %v4456
    %v4547 = vpack.c.b16 %v4459, %v4458
    %v4548 = vpack.c.b16 %v4461, %v4460
    %v4549 = vpack.c.b16 %v4463, %v4462
    %v4550 = vpack.c.b16 %v4465, %v4464
    %v4551 = vpack.c.b16 %v4467, %v4466
    %v4552 = vpack.c.b16 %v4469, %v4468
    %v4553 = vpack.c.b16 %v4471, %v4470
    %v4554 = vpack.c.b16 %v4473, %v4472
    %v4555 = vpack.c.b16 %v4475, %v4474
    %v4556 = vpack.c.b16 %v4477, %v4476
    %v4557 = vpack.c.b16 %v4479, %v4478
    %v4558 = vpack.c.b16 %v4481, %v4480
    %v4559 = vpack.c.b16 %v4483, %v4482
    %v4560 = vpack.c.b16 %v4485, %v4484
    %v4561 = vpack.c.b16 %v4487, %v4486
    %v4562 = vpack.c.b16 %v4489, %v4488
    %v4563 = vpack.c.b16 %v4491, %v4490
    %v4564 = vpack.c.b16 %v4493, %v4492
    %v4565 = vpack.c.b16 %v4495, %v4494
    %v4566 = vpack.c.b16 %v4497, %v4496
    %v4567 = vpack.c.b16 %v4499, %v4498
    %v4568 = vpack.c.b16 %v4501, %v4500
    %v4569 = vpack.c.b16 %v4503, %v4502
    %v4570 = vpack.c.b16 %v4505, %v4504
    %v4571 = vpack.c.b16 %v4507, %v4506
    %v4572 = vpack.c.b16 %v4509, %v4508
    %v4573 = vpack.c.b16 %v4511, %v4510
    %v4574 = vpack.c.b16 %v4513, %v4512
    %v4575 = vpack.c.b16 %v4515, %v4514
    %v4576 = vpack.c.b16 %v4517, %v4516
    %v4577 = vpack.c.b16 %v4519, %v4518
    %v4578 = vpack.c.b16 %v4521, %v4520
    %v4579 = vpack.c.b16 %v4523, %v4522
    %v4580 = vpack.c.b16 %v4525, %v4524
    %v4581 = vpack.c.b16 %v4527, %v4526
    %v4582 = vpack.c.b16 %v4529, %v4528
    %v4583 = vpack.c.b16 %v4531, %v4530
    %v4584 = vpack.c.b16 %v4533, %v4532
    %v4585 = vpack.c.b16 %v4535, %v4534
    %v4586 = vpack.c.b16 %v4537, %v4536
    %v4587 = vpack.c.b16 %v4539, %v4538
    %4636 = vmatprep.subr.bf16.mxu0 0
    %4637 = vmatpush1.bf16.msra.mxu0 %v4540
    %4638 = vmatprep.subr.bf16.mxu0 0
    %4639 = vmatpush1.bf16.msra.mxu0 %v4541
    %4640 = vmatprep.subr.bf16.mxu0 0
    %4641 = vmatpush1.bf16.msra.mxu0 %v4542
    %4642 = vmatprep.subr.bf16.mxu0 0
    %4643 = vmatpush1.bf16.msra.mxu0 %v4543
    %4644 = vmatprep.subr.bf16.mxu0 0
    %4645 = vmatpush1.bf16.msra.mxu0 %v4544
    %4646 = vmatprep.subr.bf16.mxu0 0
    %4647 = vmatpush1.bf16.msra.mxu0 %v4545
    %4648 = vmatprep.subr.bf16.mxu0 0
    %4649 = vmatpush1.bf16.msra.mxu0 %v4546
    %4650 = vmatprep.subr.bf16.mxu0 0
    %4651 = vmatpush1.bf16.msra.mxu0 %v4547
    %4652 = vmatprep.subr.bf16.mxu0 0
    %4653 = vmatpush1.bf16.msra.mxu0 %v4548
    %4654 = vmatprep.subr.bf16.mxu0 0
    %4655 = vmatpush1.bf16.msra.mxu0 %v4549
    %4656 = vmatprep.subr.bf16.mxu0 0
    %4657 = vmatpush1.bf16.msra.mxu0 %v4550
    %4658 = vmatprep.subr.bf16.mxu0 0
    %4659 = vmatpush1.bf16.msra.mxu0 %v4551
    %4660 = vmatprep.subr.bf16.mxu0 0
    %4661 = vmatpush1.bf16.msra.mxu0 %v4552
    %4662 = vmatprep.subr.bf16.mxu0 0
    %4663 = vmatpush1.bf16.msra.mxu0 %v4553
    %4664 = vmatprep.subr.bf16.mxu0 0
    %4665 = vmatpush1.bf16.msra.mxu0 %v4554
    %4666 = vmatprep.subr.bf16.mxu0 0
    %4667 = vmatpush1.bf16.msra.mxu0 %v4555
    %4668 = vmatprep.mubr.bf16.mxu0 %v4338
    %4669 = vmatmul.mubr.bf16.gmra.mrb[0].mxu0 %v4337
    %v4670 = vpop.f32.mrb[0].mxu0
    %v4671 = vadd.f32 %v4347, %v4670
    %v4672 = vpop.f32.mrb[0].mxu0
    %v4673 = vpop.f32.mrb[0].mxu0
    %v4674 = vpop.f32.mrb[0].mxu0
    %4675 = vdwg.mxu0
    %4676 = vmatprep.subr.bf16.mxu0 0
    %4677 = vmatpush1.bf16.msra.mxu0 %v4556
    %4678 = vmatprep.subr.bf16.mxu0 0
    %4679 = vmatpush1.bf16.msra.mxu0 %v4557
    %4680 = vmatprep.subr.bf16.mxu0 0
    %4681 = vmatpush1.bf16.msra.mxu0 %v4558
    %4682 = vmatprep.subr.bf16.mxu0 0
    %4683 = vmatpush1.bf16.msra.mxu0 %v4559
    %4684 = vmatprep.subr.bf16.mxu0 0
    %4685 = vmatpush1.bf16.msra.mxu0 %v4560
    %4686 = vmatprep.subr.bf16.mxu0 0
    %4687 = vmatpush1.bf16.msra.mxu0 %v4561
    %4688 = vmatprep.subr.bf16.mxu0 0
    %4689 = vmatpush1.bf16.msra.mxu0 %v4562
    %4690 = vmatprep.subr.bf16.mxu0 0
    %4691 = vmatpush1.bf16.msra.mxu0 %v4563
    %4692 = vmatprep.subr.bf16.mxu0 0
    %4693 = vmatpush1.bf16.msra.mxu0 %v4564
    %4694 = vmatprep.subr.bf16.mxu0 0
    %4695 = vmatpush1.bf16.msra.mxu0 %v4565
    %4696 = vmatprep.subr.bf16.mxu0 0
    %4697 = vmatpush1.bf16.msra.mxu0 %v4566
    %4698 = vmatprep.subr.bf16.mxu0 0
    %4699 = vmatpush1.bf16.msra.mxu0 %v4567
    %4700 = vmatprep.subr.bf16.mxu0 0
    %4701 = vmatpush1.bf16.msra.mxu0 %v4568
    %4702 = vmatprep.subr.bf16.mxu0 0
    %4703 = vmatpush1.bf16.msra.mxu0 %v4569
    %4704 = vmatprep.subr.bf16.mxu0 0
    %4705 = vmatpush1.bf16.msra.mxu0 %v4570
    %4706 = vmatprep.subr.bf16.mxu0 0
    %4707 = vmatpush1.bf16.msra.mxu0 %v4571
    %4708 = vmatprep.mubr.bf16.mxu0 %v4340
    %4709 = vmatmul.mubr.bf16.gmra.mrb[0].mxu0 %v4339
    %v4710 = vpop.f32.mrb[0].mxu0
    %v4711 = vadd.f32 %v4671, %v4710
    %v4712 = vpop.f32.mrb[0].mxu0
    %v4713 = vpop.f32.mrb[0].mxu0
    %v4714 = vpop.f32.mrb[0].mxu0
    %4715 = vdwg.mxu0
    %4716 = vmatprep.subr.bf16.mxu0 0
    %4717 = vmatpush1.bf16.msra.mxu0 %v4572
    %4718 = vmatprep.subr.bf16.mxu0 0
    %4719 = vmatpush1.bf16.msra.mxu0 %v4573
    %4720 = vmatprep.subr.bf16.mxu0 0
    %4721 = vmatpush1.bf16.msra.mxu0 %v4574
    %4722 = vmatprep.subr.bf16.mxu0 0
    %4723 = vmatpush1.bf16.msra.mxu0 %v4575
    %4724 = vmatprep.subr.bf16.mxu0 0
    %4725 = vmatpush1.bf16.msra.mxu0 %v4576
    %4726 = vmatprep.subr.bf16.mxu0 0
    %4727 = vmatpush1.bf16.msra.mxu0 %v4577
    %4728 = vmatprep.subr.bf16.mxu0 0
    %4729 = vmatpush1.bf16.msra.mxu0 %v4578
    %4730 = vmatprep.subr.bf16.mxu0 0
    %4731 = vmatpush1.bf16.msra.mxu0 %v4579
    %4732 = vmatprep.subr.bf16.mxu0 0
    %4733 = vmatpush1.bf16.msra.mxu0 %v4580
    %4734 = vmatprep.subr.bf16.mxu0 0
    %4735 = vmatpush1.bf16.msra.mxu0 %v4581
    %4736 = vmatprep.subr.bf16.mxu0 0
    %4737 = vmatpush1.bf16.msra.mxu0 %v4582
    %4738 = vmatprep.subr.bf16.mxu0 0
    %4739 = vmatpush1.bf16.msra.mxu0 %v4583
    %4740 = vmatprep.subr.bf16.mxu0 0
    %4741 = vmatpush1.bf16.msra.mxu0 %v4584
    %4742 = vmatprep.subr.bf16.mxu0 0
    %4743 = vmatpush1.bf16.msra.mxu0 %v4585
    %4744 = vmatprep.subr.bf16.mxu0 0
    %4745 = vmatpush1.bf16.msra.mxu0 %v4586
    %4746 = vmatprep.subr.bf16.mxu0 0
    %4747 = vmatpush1.bf16.msra.mxu0 %v4587
    %4748 = vmatprep.mubr.bf16.mxu0 %v4342
    %4749 = vmatmul.mubr.bf16.gmra.mrb[0].mxu0 %v4341
    %v4750 = vpop.f32.mrb[0].mxu0
    %v4751 = vadd.f32 %v4711, %v4750
    %v4752 = vpop.f32.mrb[0].mxu0
    %v4753 = vpop.f32.mrb[0].mxu0
    %v4754 = vpop.f32.mrb[0].mxu0
    %4755 = vdwg.mxu0
    %v4756 = vmax.f32 %v4751, 0.0
    %v4757 = vld [vmem:[%s2 + $0x180] sm:$0xf]
    %v4758 = vld [vmem:[%s2 + $0x184] sm:$0xf]
    %v4759 = vld [vmem:[%s2 + $0x188] sm:$0xf]
    %v4760 = vld [vmem:[%s2 + $0x18c] sm:$0xf]
    %v4761 = vld [vmem:[%s2 + $0x190] sm:$0xf]
    %v4762 = vld [vmem:[%s2 + $0x194] sm:$0xf]
    %v4763 = vld [vmem:[%s2 + $0x198] sm:$0xf]
    %v4764 = vld [vmem:[%s2 + $0x19c] sm:$0xf]
    %v4765 = vld [vmem:[%s2 + $0x1a0] sm:$0xf]
    %v4766 = vld [vmem:[%s2 + $0x1a4] sm:$0xf]
    %v4767 = vld [vmem:[%s2 + $0x1a8] sm:$0xf]
    %v4768 = vld [vmem:[%s2 + $0x1ac] sm:$0xf]
    %v4769 = vld [vmem:[%s2 + $0x1b0] sm:$0xf]
    %v4770 = vld [vmem:[%s2 + $0x1b4] sm:$0xf]
    %v4771 = vld [vmem:[%s2 + $0x1b8] sm:$0xf]
    %v4772 = vld [vmem:[%s2 + $0x1bc] sm:$0xf]
    %v4773 = vpack.c.bf16 %v4756, %v4756
    %v4774 = vld [vmem:[%s3 + $0x3] sm:$0x1]
    %v4775 = vlaneseq
    %v4776 = vshrl.u32 %v4775, 7
    %v4777 = vsub.s32 0, %v4776
    %v4778 = vrot.slane %v4774, %v4777
    %v4795 = vunpack.c.l.b16 %v4757
    %v4796 = vunpack.c.l.b16 %v4758
    %v4797 = vunpack.c.l.b16 %v4759
    %v4798 = vunpack.c.l.b16 %v4760
    %v4799 = vunpack.c.l.b16 %v4761
    %v4800 = vunpack.c.l.b16 %v4762
    %v4801 = vunpack.c.l.b16 %v4763
    %v4802 = vunpack.c.l.b16 %v4764
    %v4803 = vunpack.c.l.b16 %v4765
    %v4804 = vunpack.c.l.b16 %v4766
    %v4805 = vunpack.c.l.b16 %v4767
    %v4806 = vunpack.c.l.b16 %v4768
    %v4807 = vunpack.c.l.b16 %v4769
    %v4808 = vunpack.c.l.b16 %v4770
    %v4809 = vunpack.c.l.b16 %v4771
    %v4810 = vunpack.c.l.b16 %v4772
    %v4811 = vpack.c.b16 %v4796, %v4795
    %v4812 = vpack.c.b16 %v4798, %v4797
    %v4813 = vpack.c.b16 %v4800, %v4799
    %v4814 = vpack.c.b16 %v4802, %v4801
    %v4815 = vpack.c.b16 %v4804, %v4803
    %v4816 = vpack.c.b16 %v4806, %v4805
    %v4817 = vpack.c.b16 %v4808, %v4807
    %v4818 = vpack.c.b16 %v4810, %v4809
    %4827 = vmatprep.subr.bf16.mxu0 0
    %4828 = vmatpush1.bf16.msra.mxu0 %v4811
    %4829 = vmatprep.subr.bf16.mxu0 0
    %4830 = vmatpush1.bf16.msra.mxu0 %v4812
    %4831 = vmatprep.subr.bf16.mxu0 0
    %4832 = vmatpush1.bf16.msra.mxu0 %v4813
    %4833 = vmatprep.subr.bf16.mxu0 0
    %4834 = vmatpush1.bf16.msra.mxu0 %v4814
    %4835 = vmatprep.subr.bf16.mxu0 0
    %4836 = vmatpush1.bf16.msra.mxu0 %v4815
    %4837 = vmatprep.subr.bf16.mxu0 0
    %4838 = vmatpush1.bf16.msra.mxu0 %v4816
    %4839 = vmatprep.subr.bf16.mxu0 0
    %4840 = vmatpush1.bf16.msra.mxu0 %v4817
    %4841 = vmatprep.subr.bf16.mxu0 0
    %4842 = vmatpush1.bf16.msra.mxu0 %v4818
    %4843 = vmatprep.subr.bf16.mxu0 0
    %4844 = vmatpush1.bf16.msra.mxu0 0
    %4845 = vmatprep.subr.bf16.mxu0 0
    %4846 = vmatpush1.bf16.msra.mxu0 0
    %4847 = vmatprep.subr.bf16.mxu0 0
    %4848 = vmatpush1.bf16.msra.mxu0 0
    %4849 = vmatprep.subr.bf16.mxu0 0
    %4850 = vmatpush1.bf16.msra.mxu0 0
    %4851 = vmatprep.subr.bf16.mxu0 0
    %4852 = vmatpush1.bf16.msra.mxu0 0
    %4853 = vmatprep.subr.bf16.mxu0 0
    %4854 = vmatpush1.bf16.msra.mxu0 0
    %4855 = vmatprep.subr.bf16.mxu0 0
    %4856 = vmatpush1.bf16.msra.mxu0 0
    %4857 = vmatprep.subr.bf16.mxu0 0
    %4858 = vmatpush1.bf16.msra.mxu0 0
    %4859 = vmatprep.mubr.bf16.mxu0 0
    %4860 = vmatmul.mubr.bf16.gmra.mrb[0].mxu0 %v4773
    %v4861 = vpop.f32.mrb[0].mxu0
    %v4862 = vadd.f32 %v4778, %v4861
    %v4863 = vpop.f32.mrb[0].mxu0
    %v4864 = vpop.f32.mrb[0].mxu0
    %v4865 = vpop.f32.mrb[0].mxu0
    %4866 = vdwg.mxu0
    %4867 = vst [vmem:[#allocation5] sm:$0x3] %v4862
    // Predicated region
    $region18: #{forward.1} parent=1 // pred_check
      _
    $region19: #{forward.1} parent=1 // pred_check_branch
      %4869 = sbr.rel (0) target = $region21
    $region20: #{forward.1} parent=1 // pred_region
      %s4871 = ssub.s32 32, 32
      %4872 = vsyncadd [#allocation6], %s4871
      %s4874 = sshll.u32 [#allocation5], 4
      %s4875 = int_to_ptr.vmem [resolvable:$true] %s4874
      %4877 = dma.vmem_to_hbm [thread:$0]  %s4875, 32, %s4, [#allocation6]
    $region21: #{forward.1} parent=1 // pred_fallthru
      _
    // Predicated region
    $region22: #{forward.1} parent=1 // pred_check
      _
    $region23: #{forward.1} parent=1 // pred_check_branch
      %4879 = sbr.rel (0) target = $region25
    $region24: #{forward.1} parent=1 // pred_region
      %4880 = dma.done [#allocation6], 32
    $region25: #{forward.1} parent=1 // pred_fallthru
      _
    %4881 = vsyncpa [#allocation6], 1

</llo_original>
